<compile_context>
chip_gen: v7x
topology: tpu7x:2x2x1
jax: 0.10.0
libtpu: 0.0.40
codegen_flags: <defaults>
</compile_context>

<pallas_src>
import functools

import jax
import jax.numpy as jnp
from jax.experimental import pallas as pl
from jax.experimental.pallas import tpu as pltpu


# ---------------------------------------------------------------------------
# Fused LSTM + Linear kernel (single grid step, recurrence via fori_loop).
# ---------------------------------------------------------------------------
def lstm_fused_kernel(x_ref, w_ih_ref, w_hh_ref, b_ref, w_lin_ref, b_lin_ref,
                      out_ref, xg_scr, hsel_scr):
    """x_ref: (T, B, D) time-major.  out_ref: (S, B, O) time-major."""
    T, B, D = x_ref.shape
    H = w_hh_ref.shape[0]
    S = out_ref.shape[0]
    G = 4 * H

    # ---- Hoisted input projection for ALL timesteps (+ bias, applied once) --
    # (T, B, D) -> (T*B, D) is layout-free when B is a multiple of 8.
    x2d = x_ref[...].reshape(T * B, D)
    xg = jnp.dot(x2d, w_ih_ref[...],
                 preferred_element_type=jnp.float32) + b_ref[...]
    xg_scr[...] = xg.reshape(T, B, G)

    w_hh = w_hh_ref[...]                       # loop-invariant load

    def step(h, c, gx):
        gates = gx + jnp.dot(h, w_hh, preferred_element_type=jnp.float32)
        i = jax.nn.sigmoid(gates[:, 0 * H:1 * H])
        f = jax.nn.sigmoid(gates[:, 1 * H:2 * H])
        g = jnp.tanh(gates[:, 2 * H:3 * H])
        o = jax.nn.sigmoid(gates[:, 3 * H:4 * H])
        c_new = f * c + i * g
        h_new = o * jnp.tanh(c_new)
        return h_new, c_new

    h0 = jnp.zeros((B, H), jnp.float32)
    c0 = jnp.zeros((B, H), jnp.float32)

    # Phase 1: warm-up timesteps whose hidden states are never consumed.
    def warm_body(t, carry):
        h, c = carry
        return step(h, c, xg_scr[t])

    h, c = jax.lax.fori_loop(0, T - S - 1, warm_body, (h0, c0), unroll=True)

    # Phase 2: the S timesteps feeding the Linear.  Timestep T-1 is skipped:
    # the PyTorch slice x[:, -(S+1):-1, :] never uses it.
    def tail_body(s, carry):
        h, c = carry
        h, c = step(h, c, xg_scr[T - S - 1 + s])
        hsel_scr[s] = h
        return h, c

    jax.lax.fori_loop(0, S, tail_body, (h, c), unroll=True)

    # ---- Fused output Linear on the S kept hidden states --------------------
    hsel = hsel_scr[...].reshape(S * B, H)
    y = jnp.dot(hsel, w_lin_ref[...],
                preferred_element_type=jnp.float32) + b_lin_ref[...]
    out_ref[...] = y.reshape(S, B, out_ref.shape[2]).astype(out_ref.dtype)


def lstm_model_pallas(x_tm, w_ih_t, w_hh_t, b_lstm, w_lin_t, b_lin,
                      output_size):
    """x_tm: (T, B, D) time-major.  Returns (S, B, O) time-major."""
    T, B, D = x_tm.shape
    H = w_hh_t.shape[0]
    O = w_lin_t.shape[1]
    S = output_size
    return pl.pallas_call(
        lstm_fused_kernel,
        out_shape=jax.ShapeDtypeStruct((S, B, O), jnp.float32),
        grid_spec=pltpu.PrefetchScalarGridSpec(
            num_scalar_prefetch=0,
            grid=(1,),                                   # single resident block
            in_specs=[
                pl.BlockSpec((T, B, D), lambda i: (0, 0, 0)),
                pl.BlockSpec((D, 4 * H), lambda i: (0, 0)),
                pl.BlockSpec((H, 4 * H), lambda i: (0, 0)),
                pl.BlockSpec((1, 4 * H), lambda i: (0, 0)),
                pl.BlockSpec((H, O), lambda i: (0, 0)),
                pl.BlockSpec((1, O), lambda i: (0, 0)),
            ],
            out_specs=pl.BlockSpec((S, B, O), lambda i: (0, 0, 0)),
            scratch_shapes=[
                pltpu.VMEM((T, B, 4 * H), jnp.float32),  # hoisted x@W_ih + b
                pltpu.VMEM((S, B, H), jnp.float32),      # kept hidden states
            ],
        ),
        compiler_params=pltpu.CompilerParams(
            dimension_semantics=("arbitrary",)),
    )(x_tm, w_ih_t, w_hh_t, b_lstm, w_lin_t, b_lin)


# ---------------------------------------------------------------------------
# Full model wrapper (batch-first interface, like the PyTorch module).
# ---------------------------------------------------------------------------
@functools.partial(jax.jit, static_argnames=("output_size",))
def lstm_model_forward(x, params, output_size):
    """x: (B, T, input_dim), batch_first.  Returns (B, output_size, output_dim)."""
    B, T, _ = x.shape
    if T <= output_size:
        raise ValueError("need T > output_size for the x[:, -(S+1):-1, :] slice")
    # Single tiny time-major copy of x; all other layout work is in-kernel.
    x_tm = jnp.transpose(x, (1, 0, 2))                   # (T, B, D)
    out_sbo = lstm_model_pallas(x_tm, params["w_ih_t"], params["w_hh_t"],
                                params["b_lstm"], params["w_lin_t"],
                                params["b_lin"], output_size)
    return jnp.transpose(out_sbo, (1, 0, 2))             # (B, S, output_dim)


# ---------------------------------------------------------------------------
# Deterministic parameter init (PyTorch-style uniform(-1/sqrt(H), 1/sqrt(H))).
# ---------------------------------------------------------------------------
def init_params(key, input_dim, hidden_dim, output_dim):
    k = 1.0 / jnp.sqrt(hidden_dim)
    keys = jax.random.split(key, 6)
    w_ih = jax.random.uniform(keys[0], (4 * hidden_dim, input_dim),
                              minval=-k, maxval=k, dtype=jnp.float32)
    w_hh = jax.random.uniform(keys[1], (4 * hidden_dim, hidden_dim),
                              minval=-k, maxval=k, dtype=jnp.float32)
    b_ih = jax.random.uniform(keys[2], (4 * hidden_dim,),
                              minval=-k, maxval=k, dtype=jnp.float32)
    b_hh = jax.random.uniform(keys[3], (4 * hidden_dim,),
                              minval=-k, maxval=k, dtype=jnp.float32)
    w_lin = jax.random.uniform(keys[4], (output_dim, hidden_dim),
                               minval=-k, maxval=k, dtype=jnp.float32)
    b_lin = jax.random.uniform(keys[5], (output_dim,),
                               minval=-k, maxval=k, dtype=jnp.float32)
    return {
        "w_ih_t": w_ih.T,                               # (D, 4H)
        "w_hh_t": w_hh.T,                               # (H, 4H)
        "b_lstm": (b_ih + b_hh).reshape(1, -1),         # (1, 4H)
        "w_lin_t": w_lin.T,                             # (H, O)
        "b_lin": b_lin.reshape(1, -1),                  # (1, O)
    }


# Pure-JAX reference (same math, lax.scan) for correctness sanity check.
def ref_forward(x, params, output_size):
    B, T, _ = x.shape
    H = params["w_hh_t"].shape[0]

    def step(carry, x_t):
        h, c = carry
        gates = x_t @ params["w_ih_t"] + h @ params["w_hh_t"] + params["b_lstm"]
        i = jax.nn.sigmoid(gates[:, :H])
        f = jax.nn.sigmoid(gates[:, H:2 * H])
        g = jnp.tanh(gates[:, 2 * H:3 * H])
        o = jax.nn.sigmoid(gates[:, 3 * H:])
        c = f * c + i * g
        h = o * jnp.tanh(c)
        return (h, c), h

    h0 = jnp.zeros((B, H), jnp.float32)
    c0 = jnp.zeros((B, H), jnp.float32)
    _, hs = jax.lax.scan(step, (h0, c0), jnp.transpose(x, (1, 0, 2)))
    hs = jnp.transpose(hs, (1, 0, 2))                    # (B, T, H)
    sl = hs[:, T - output_size - 1: T - 1, :]
    return sl @ params["w_lin_t"] + params["b_lin"]


if __name__ == "__main__":
    # Small shapes consistent with the module's forward.  B=8 / H=128 keep
    # everything sublane/lane aligned (exact (8,128) vregs per gate).
    B, T = 8, 12
    input_dim, hidden_dim, output_dim, output_size = 8, 128, 4, 3

    key = jax.random.PRNGKey(0)
    kx, kp = jax.random.split(key)
    x = jax.random.normal(kx, (B, T, input_dim), dtype=jnp.float32)
    params = init_params(kp, input_dim, hidden_dim, output_dim)

    out = lstm_model_forward(x, params, output_size)
    out = jax.block_until_ready(out)

    ref = ref_forward(x, params, output_size)
    assert out.shape == (B, output_size, output_dim), out.shape
    assert jnp.allclose(out, ref, atol=1e-2, rtol=1e-2), float(
        jnp.max(jnp.abs(out - ref)))

    print("KERNEL_OK")
</pallas_src>

<mosaic_0001>
module attributes {stable_mosaic.version = 11 : i64} {
  func.func @lstm_fused_kernel(%arg0: i32, %arg1: memref<12x8x8xf32, #tpu.memory_space<vmem>>, %arg2: memref<8x512xf32, #tpu.memory_space<vmem>>, %arg3: memref<128x512xf32, #tpu.memory_space<vmem>>, %arg4: memref<1x512xf32, #tpu.memory_space<vmem>>, %arg5: memref<128x4xf32, #tpu.memory_space<vmem>>, %arg6: memref<1x4xf32, #tpu.memory_space<vmem>>, %arg7: memref<3x8x4xf32, #tpu.memory_space<vmem>>, %arg8: memref<12x8x512xf32, #tpu.memory_space<vmem>>, %arg9: memref<3x8x128xf32, #tpu.memory_space<vmem>>) attributes {dimension_semantics = [#tpu.dimension_semantics<arbitrary>], iteration_bounds = array<i64: 1>, scalar_prefetch = 0 : i64, scratch_operands = 2 : i64, tpu.core_type = #tpu.core_type<tc>, window_params = [{pipeline_mode = #tpu.pipeline_mode<synchronous>, transform_indices = @transform_0, window_bounds = array<i64: 12, 8, 8>}, {pipeline_mode = #tpu.pipeline_mode<synchronous>, transform_indices = @transform_1, window_bounds = array<i64: 8, 512>}, {pipeline_mode = #tpu.pipeline_mode<synchronous>, transform_indices = @transform_2, window_bounds = array<i64: 128, 512>}, {pipeline_mode = #tpu.pipeline_mode<synchronous>, transform_indices = @transform_3, window_bounds = array<i64: 1, 512>}, {pipeline_mode = #tpu.pipeline_mode<synchronous>, transform_indices = @transform_4, window_bounds = array<i64: 128, 4>}, {pipeline_mode = #tpu.pipeline_mode<synchronous>, transform_indices = @transform_5, window_bounds = array<i64: 1, 4>}, {pipeline_mode = #tpu.pipeline_mode<synchronous>, transform_indices = @transform_6, window_bounds = array<i64: 3, 8, 4>}]} {
    %c0 = arith.constant 0 : index
    %c0_0 = arith.constant 0 : index
    %c0_1 = arith.constant 0 : index
    %0 = vector.load %arg1[%c0, %c0_0, %c0_1] : memref<12x8x8xf32, #tpu.memory_space<vmem>>, vector<12x8x8xf32>
    %1 = vector.shape_cast %0 : vector<12x8x8xf32> to vector<96x8xf32>
    %c0_2 = arith.constant 0 : index
    %c0_3 = arith.constant 0 : index
    %2 = vector.load %arg2[%c0_2, %c0_3] : memref<8x512xf32, #tpu.memory_space<vmem>>, vector<8x512xf32>
    %cst = arith.constant dense<0.000000e+00> : vector<96x512xf32>
    %3 = tpu.matmul %1, %2, %cst {dimension_numbers = #tpu.dot_dimension_numbers<[1], [0], [0], [1], [0, 0, 1, 1], [], []>} : vector<96x8xf32>, vector<8x512xf32>, vector<96x512xf32> -> vector<96x512xf32>
    %c0_4 = arith.constant 0 : index
    %c0_5 = arith.constant 0 : index
    %4 = vector.load %arg4[%c0_4, %c0_5] : memref<1x512xf32, #tpu.memory_space<vmem>>, vector<1x512xf32>
    %5 = vector.broadcast %4 : vector<1x512xf32> to vector<96x512xf32>
    %6 = arith.addf %3, %5 : vector<96x512xf32>
    %7 = vector.shape_cast %6 : vector<96x512xf32> to vector<12x8x512xf32>
    %c0_6 = arith.constant 0 : index
    %c0_7 = arith.constant 0 : index
    %c0_8 = arith.constant 0 : index
    %8 = vector.load %arg8[%c0_6, %c0_7, %c0_8] : memref<12x8x512xf32, #tpu.memory_space<vmem>>, vector<12x8x512xf32>
    tpu.vector_store %arg8[%c0_6, %c0_7, %c0_8], %7 {strides = array<i32>} : memref<12x8x512xf32, #tpu.memory_space<vmem>>, vector<12x8x512xf32>,
    %c0_9 = arith.constant 0 : index
    %c0_10 = arith.constant 0 : index
    %9 = vector.load %arg3[%c0_9, %c0_10] : memref<128x512xf32, #tpu.memory_space<vmem>>, vector<128x512xf32>
    %cst_11 = arith.constant 0.000000e+00 : f32
    %10 = vector.broadcast %cst_11 : f32 to vector<8x128xf32>
    %cst_12 = arith.constant 0.000000e+00 : f32
    %11 = vector.broadcast %cst_12 : f32 to vector<8x128xf32>
    %c0_i32 = arith.constant 0 : i32
    %12 = arith.index_cast %c0_i32 : i32 to index
    %c0_13 = arith.constant 0 : index
    %c0_14 = arith.constant 0 : index
    %13 = vector.load %arg8[%12, %c0_13, %c0_14] : memref<12x8x512xf32, #tpu.memory_space<vmem>>, vector<1x8x512xf32>
    %14 = vector.shape_cast %13 : vector<1x8x512xf32> to vector<8x512xf32>
    %cst_15 = arith.constant dense<0.000000e+00> : vector<8x512xf32>
    %15 = tpu.matmul %10, %9, %cst_15 {dimension_numbers = #tpu.dot_dimension_numbers<[1], [0], [0], [1], [0, 0, 1, 1], [], []>} : vector<8x128xf32>, vector<128x512xf32>, vector<8x512xf32> -> vector<8x512xf32>
    %16 = arith.addf %14, %15 : vector<8x512xf32>
    %17 = vector.extract_strided_slice %16 {offsets = [0, 0], sizes = [8, 128], strides = [1, 1]} : vector<8x512xf32> to vector<8x128xf32>
    %18 = arith.negf %17 : vector<8x128xf32>
    %19 = math.exp %18 : vector<8x128xf32>
    %cst_16 = arith.constant 1.000000e+00 : f32
    %20 = vector.broadcast %cst_16 : f32 to vector<8x128xf32>
    %21 = arith.addf %20, %19 : vector<8x128xf32>
    %22 = arith.divf %20, %21 : vector<8x128xf32>
    %23 = vector.extract_strided_slice %16 {offsets = [0, 128], sizes = [8, 128], strides = [1, 1]} : vector<8x512xf32> to vector<8x128xf32>
    %24 = arith.negf %23 : vector<8x128xf32>
    %25 = math.exp %24 : vector<8x128xf32>
    %cst_17 = arith.constant 1.000000e+00 : f32
    %26 = vector.broadcast %cst_17 : f32 to vector<8x128xf32>
    %27 = arith.addf %26, %25 : vector<8x128xf32>
    %28 = arith.divf %26, %27 : vector<8x128xf32>
    %29 = vector.extract_strided_slice %16 {offsets = [0, 256], sizes = [8, 128], strides = [1, 1]} : vector<8x512xf32> to vector<8x128xf32>
    %30 = math.tanh %29 : vector<8x128xf32>
    %31 = vector.extract_strided_slice %16 {offsets = [0, 384], sizes = [8, 128], strides = [1, 1]} : vector<8x512xf32> to vector<8x128xf32>
    %32 = arith.negf %31 : vector<8x128xf32>
    %33 = math.exp %32 : vector<8x128xf32>
    %cst_18 = arith.constant 1.000000e+00 : f32
    %34 = vector.broadcast %cst_18 : f32 to vector<8x128xf32>
    %35 = arith.addf %34, %33 : vector<8x128xf32>
    %36 = arith.divf %34, %35 : vector<8x128xf32>
    %37 = arith.mulf %28, %11 : vector<8x128xf32>
    %38 = arith.mulf %22, %30 : vector<8x128xf32>
    %39 = arith.addf %37, %38 : vector<8x128xf32>
    %40 = math.tanh %39 : vector<8x128xf32>
    %41 = arith.mulf %36, %40 : vector<8x128xf32>
    %c1_i32 = arith.constant 1 : i32
    %42 = arith.index_cast %c1_i32 : i32 to index
    %c0_19 = arith.constant 0 : index
    %c0_20 = arith.constant 0 : index
    %43 = vector.load %arg8[%42, %c0_19, %c0_20] : memref<12x8x512xf32, #tpu.memory_space<vmem>>, vector<1x8x512xf32>
    %44 = vector.shape_cast %43 : vector<1x8x512xf32> to vector<8x512xf32>
    %cst_21 = arith.constant dense<0.000000e+00> : vector<8x512xf32>
    %45 = tpu.matmul %41, %9, %cst_21 {dimension_numbers = #tpu.dot_dimension_numbers<[1], [0], [0], [1], [0, 0, 1, 1], [], []>} : vector<8x128xf32>, vector<128x512xf32>, vector<8x512xf32> -> vector<8x512xf32>
    %46 = arith.addf %44, %45 : vector<8x512xf32>
    %47 = vector.extract_strided_slice %46 {offsets = [0, 0], sizes = [8, 128], strides = [1, 1]} : vector<8x512xf32> to vector<8x128xf32>
    %48 = arith.negf %47 : vector<8x128xf32>
    %49 = math.exp %48 : vector<8x128xf32>
    %cst_22 = arith.constant 1.000000e+00 : f32
    %50 = vector.broadcast %cst_22 : f32 to vector<8x128xf32>
    %51 = arith.addf %50, %49 : vector<8x128xf32>
    %52 = arith.divf %50, %51 : vector<8x128xf32>
    %53 = vector.extract_strided_slice %46 {offsets = [0, 128], sizes = [8, 128], strides = [1, 1]} : vector<8x512xf32> to vector<8x128xf32>
    %54 = arith.negf %53 : vector<8x128xf32>
    %55 = math.exp %54 : vector<8x128xf32>
    %cst_23 = arith.constant 1.000000e+00 : f32
    %56 = vector.broadcast %cst_23 : f32 to vector<8x128xf32>
    %57 = arith.addf %56, %55 : vector<8x128xf32>
    %58 = arith.divf %56, %57 : vector<8x128xf32>
    %59 = vector.extract_strided_slice %46 {offsets = [0, 256], sizes = [8, 128], strides = [1, 1]} : vector<8x512xf32> to vector<8x128xf32>
    %60 = math.tanh %59 : vector<8x128xf32>
    %61 = vector.extract_strided_slice %46 {offsets = [0, 384], sizes = [8, 128], strides = [1, 1]} : vector<8x512xf32> to vector<8x128xf32>
    %62 = arith.negf %61 : vector<8x128xf32>
    %63 = math.exp %62 : vector<8x128xf32>
    %cst_24 = arith.constant 1.000000e+00 : f32
    %64 = vector.broadcast %cst_24 : f32 to vector<8x128xf32>
    %65 = arith.addf %64, %63 : vector<8x128xf32>
    %66 = arith.divf %64, %65 : vector<8x128xf32>
    %67 = arith.mulf %58, %39 : vector<8x128xf32>
    %68 = arith.mulf %52, %60 : vector<8x128xf32>
    %69 = arith.addf %67, %68 : vector<8x128xf32>
    %70 = math.tanh %69 : vector<8x128xf32>
    %71 = arith.mulf %66, %70 : vector<8x128xf32>
    %c2_i32 = arith.constant 2 : i32
    %72 = arith.index_cast %c2_i32 : i32 to index
    %c0_25 = arith.constant 0 : index
    %c0_26 = arith.constant 0 : index
    %73 = vector.load %arg8[%72, %c0_25, %c0_26] : memref<12x8x512xf32, #tpu.memory_space<vmem>>, vector<1x8x512xf32>
    %74 = vector.shape_cast %73 : vector<1x8x512xf32> to vector<8x512xf32>
    %cst_27 = arith.constant dense<0.000000e+00> : vector<8x512xf32>
    %75 = tpu.matmul %71, %9, %cst_27 {dimension_numbers = #tpu.dot_dimension_numbers<[1], [0], [0], [1], [0, 0, 1, 1], [], []>} : vector<8x128xf32>, vector<128x512xf32>, vector<8x512xf32> -> vector<8x512xf32>
    %76 = arith.addf %74, %75 : vector<8x512xf32>
    %77 = vector.extract_strided_slice %76 {offsets = [0, 0], sizes = [8, 128], strides = [1, 1]} : vector<8x512xf32> to vector<8x128xf32>
    %78 = arith.negf %77 : vector<8x128xf32>
    %79 = math.exp %78 : vector<8x128xf32>
    %cst_28 = arith.constant 1.000000e+00 : f32
    %80 = vector.broadcast %cst_28 : f32 to vector<8x128xf32>
    %81 = arith.addf %80, %79 : vector<8x128xf32>
    %82 = arith.divf %80, %81 : vector<8x128xf32>
    %83 = vector.extract_strided_slice %76 {offsets = [0, 128], sizes = [8, 128], strides = [1, 1]} : vector<8x512xf32> to vector<8x128xf32>
    %84 = arith.negf %83 : vector<8x128xf32>
    %85 = math.exp %84 : vector<8x128xf32>
    %cst_29 = arith.constant 1.000000e+00 : f32
    %86 = vector.broadcast %cst_29 : f32 to vector<8x128xf32>
    %87 = arith.addf %86, %85 : vector<8x128xf32>
    %88 = arith.divf %86, %87 : vector<8x128xf32>
    %89 = vector.extract_strided_slice %76 {offsets = [0, 256], sizes = [8, 128], strides = [1, 1]} : vector<8x512xf32> to vector<8x128xf32>
    %90 = math.tanh %89 : vector<8x128xf32>
    %91 = vector.extract_strided_slice %76 {offsets = [0, 384], sizes = [8, 128], strides = [1, 1]} : vector<8x512xf32> to vector<8x128xf32>
    %92 = arith.negf %91 : vector<8x128xf32>
    %93 = math.exp %92 : vector<8x128xf32>
    %cst_30 = arith.constant 1.000000e+00 : f32
    %94 = vector.broadcast %cst_30 : f32 to vector<8x128xf32>
    %95 = arith.addf %94, %93 : vector<8x128xf32>
    %96 = arith.divf %94, %95 : vector<8x128xf32>
    %97 = arith.mulf %88, %69 : vector<8x128xf32>
    %98 = arith.mulf %82, %90 : vector<8x128xf32>
    %99 = arith.addf %97, %98 : vector<8x128xf32>
    %100 = math.tanh %99 : vector<8x128xf32>
    %101 = arith.mulf %96, %100 : vector<8x128xf32>
    %c3_i32 = arith.constant 3 : i32
    %102 = arith.index_cast %c3_i32 : i32 to index
    %c0_31 = arith.constant 0 : index
    %c0_32 = arith.constant 0 : index
    %103 = vector.load %arg8[%102, %c0_31, %c0_32] : memref<12x8x512xf32, #tpu.memory_space<vmem>>, vector<1x8x512xf32>
    %104 = vector.shape_cast %103 : vector<1x8x512xf32> to vector<8x512xf32>
    %cst_33 = arith.constant dense<0.000000e+00> : vector<8x512xf32>
    %105 = tpu.matmul %101, %9, %cst_33 {dimension_numbers = #tpu.dot_dimension_numbers<[1], [0], [0], [1], [0, 0, 1, 1], [], []>} : vector<8x128xf32>, vector<128x512xf32>, vector<8x512xf32> -> vector<8x512xf32>
    %106 = arith.addf %104, %105 : vector<8x512xf32>
    %107 = vector.extract_strided_slice %106 {offsets = [0, 0], sizes = [8, 128], strides = [1, 1]} : vector<8x512xf32> to vector<8x128xf32>
    %108 = arith.negf %107 : vector<8x128xf32>
    %109 = math.exp %108 : vector<8x128xf32>
    %cst_34 = arith.constant 1.000000e+00 : f32
    %110 = vector.broadcast %cst_34 : f32 to vector<8x128xf32>
    %111 = arith.addf %110, %109 : vector<8x128xf32>
    %112 = arith.divf %110, %111 : vector<8x128xf32>
    %113 = vector.extract_strided_slice %106 {offsets = [0, 128], sizes = [8, 128], strides = [1, 1]} : vector<8x512xf32> to vector<8x128xf32>
    %114 = arith.negf %113 : vector<8x128xf32>
    %115 = math.exp %114 : vector<8x128xf32>
    %cst_35 = arith.constant 1.000000e+00 : f32
    %116 = vector.broadcast %cst_35 : f32 to vector<8x128xf32>
    %117 = arith.addf %116, %115 : vector<8x128xf32>
    %118 = arith.divf %116, %117 : vector<8x128xf32>
    %119 = vector.extract_strided_slice %106 {offsets = [0, 256], sizes = [8, 128], strides = [1, 1]} : vector<8x512xf32> to vector<8x128xf32>
    %120 = math.tanh %119 : vector<8x128xf32>
    %121 = vector.extract_strided_slice %106 {offsets = [0, 384], sizes = [8, 128], strides = [1, 1]} : vector<8x512xf32> to vector<8x128xf32>
    %122 = arith.negf %121 : vector<8x128xf32>
    %123 = math.exp %122 : vector<8x128xf32>
    %cst_36 = arith.constant 1.000000e+00 : f32
    %124 = vector.broadcast %cst_36 : f32 to vector<8x128xf32>
    %125 = arith.addf %124, %123 : vector<8x128xf32>
    %126 = arith.divf %124, %125 : vector<8x128xf32>
    %127 = arith.mulf %118, %99 : vector<8x128xf32>
    %128 = arith.mulf %112, %120 : vector<8x128xf32>
    %129 = arith.addf %127, %128 : vector<8x128xf32>
    %130 = math.tanh %129 : vector<8x128xf32>
    %131 = arith.mulf %126, %130 : vector<8x128xf32>
    %c4_i32 = arith.constant 4 : i32
    %132 = arith.index_cast %c4_i32 : i32 to index
    %c0_37 = arith.constant 0 : index
    %c0_38 = arith.constant 0 : index
    %133 = vector.load %arg8[%132, %c0_37, %c0_38] : memref<12x8x512xf32, #tpu.memory_space<vmem>>, vector<1x8x512xf32>
    %134 = vector.shape_cast %133 : vector<1x8x512xf32> to vector<8x512xf32>
    %cst_39 = arith.constant dense<0.000000e+00> : vector<8x512xf32>
    %135 = tpu.matmul %131, %9, %cst_39 {dimension_numbers = #tpu.dot_dimension_numbers<[1], [0], [0], [1], [0, 0, 1, 1], [], []>} : vector<8x128xf32>, vector<128x512xf32>, vector<8x512xf32> -> vector<8x512xf32>
    %136 = arith.addf %134, %135 : vector<8x512xf32>
    %137 = vector.extract_strided_slice %136 {offsets = [0, 0], sizes = [8, 128], strides = [1, 1]} : vector<8x512xf32> to vector<8x128xf32>
    %138 = arith.negf %137 : vector<8x128xf32>
    %139 = math.exp %138 : vector<8x128xf32>
    %cst_40 = arith.constant 1.000000e+00 : f32
    %140 = vector.broadcast %cst_40 : f32 to vector<8x128xf32>
    %141 = arith.addf %140, %139 : vector<8x128xf32>
    %142 = arith.divf %140, %141 : vector<8x128xf32>
    %143 = vector.extract_strided_slice %136 {offsets = [0, 128], sizes = [8, 128], strides = [1, 1]} : vector<8x512xf32> to vector<8x128xf32>
    %144 = arith.negf %143 : vector<8x128xf32>
    %145 = math.exp %144 : vector<8x128xf32>
    %cst_41 = arith.constant 1.000000e+00 : f32
    %146 = vector.broadcast %cst_41 : f32 to vector<8x128xf32>
    %147 = arith.addf %146, %145 : vector<8x128xf32>
    %148 = arith.divf %146, %147 : vector<8x128xf32>
    %149 = vector.extract_strided_slice %136 {offsets = [0, 256], sizes = [8, 128], strides = [1, 1]} : vector<8x512xf32> to vector<8x128xf32>
    %150 = math.tanh %149 : vector<8x128xf32>
    %151 = vector.extract_strided_slice %136 {offsets = [0, 384], sizes = [8, 128], strides = [1, 1]} : vector<8x512xf32> to vector<8x128xf32>
    %152 = arith.negf %151 : vector<8x128xf32>
    %153 = math.exp %152 : vector<8x128xf32>
    %cst_42 = arith.constant 1.000000e+00 : f32
    %154 = vector.broadcast %cst_42 : f32 to vector<8x128xf32>
    %155 = arith.addf %154, %153 : vector<8x128xf32>
    %156 = arith.divf %154, %155 : vector<8x128xf32>
    %157 = arith.mulf %148, %129 : vector<8x128xf32>
    %158 = arith.mulf %142, %150 : vector<8x128xf32>
    %159 = arith.addf %157, %158 : vector<8x128xf32>
    %160 = math.tanh %159 : vector<8x128xf32>
    %161 = arith.mulf %156, %160 : vector<8x128xf32>
    %c5_i32 = arith.constant 5 : i32
    %162 = arith.index_cast %c5_i32 : i32 to index
    %c0_43 = arith.constant 0 : index
    %c0_44 = arith.constant 0 : index
    %163 = vector.load %arg8[%162, %c0_43, %c0_44] : memref<12x8x512xf32, #tpu.memory_space<vmem>>, vector<1x8x512xf32>
    %164 = vector.shape_cast %163 : vector<1x8x512xf32> to vector<8x512xf32>
    %cst_45 = arith.constant dense<0.000000e+00> : vector<8x512xf32>
    %165 = tpu.matmul %161, %9, %cst_45 {dimension_numbers = #tpu.dot_dimension_numbers<[1], [0], [0], [1], [0, 0, 1, 1], [], []>} : vector<8x128xf32>, vector<128x512xf32>, vector<8x512xf32> -> vector<8x512xf32>
    %166 = arith.addf %164, %165 : vector<8x512xf32>
    %167 = vector.extract_strided_slice %166 {offsets = [0, 0], sizes = [8, 128], strides = [1, 1]} : vector<8x512xf32> to vector<8x128xf32>
    %168 = arith.negf %167 : vector<8x128xf32>
    %169 = math.exp %168 : vector<8x128xf32>
    %cst_46 = arith.constant 1.000000e+00 : f32
    %170 = vector.broadcast %cst_46 : f32 to vector<8x128xf32>
    %171 = arith.addf %170, %169 : vector<8x128xf32>
    %172 = arith.divf %170, %171 : vector<8x128xf32>
    %173 = vector.extract_strided_slice %166 {offsets = [0, 128], sizes = [8, 128], strides = [1, 1]} : vector<8x512xf32> to vector<8x128xf32>
    %174 = arith.negf %173 : vector<8x128xf32>
    %175 = math.exp %174 : vector<8x128xf32>
    %cst_47 = arith.constant 1.000000e+00 : f32
    %176 = vector.broadcast %cst_47 : f32 to vector<8x128xf32>
    %177 = arith.addf %176, %175 : vector<8x128xf32>
    %178 = arith.divf %176, %177 : vector<8x128xf32>
    %179 = vector.extract_strided_slice %166 {offsets = [0, 256], sizes = [8, 128], strides = [1, 1]} : vector<8x512xf32> to vector<8x128xf32>
    %180 = math.tanh %179 : vector<8x128xf32>
    %181 = vector.extract_strided_slice %166 {offsets = [0, 384], sizes = [8, 128], strides = [1, 1]} : vector<8x512xf32> to vector<8x128xf32>
    %182 = arith.negf %181 : vector<8x128xf32>
    %183 = math.exp %182 : vector<8x128xf32>
    %cst_48 = arith.constant 1.000000e+00 : f32
    %184 = vector.broadcast %cst_48 : f32 to vector<8x128xf32>
    %185 = arith.addf %184, %183 : vector<8x128xf32>
    %186 = arith.divf %184, %185 : vector<8x128xf32>
    %187 = arith.mulf %178, %159 : vector<8x128xf32>
    %188 = arith.mulf %172, %180 : vector<8x128xf32>
    %189 = arith.addf %187, %188 : vector<8x128xf32>
    %190 = math.tanh %189 : vector<8x128xf32>
    %191 = arith.mulf %186, %190 : vector<8x128xf32>
    %c6_i32 = arith.constant 6 : i32
    %192 = arith.index_cast %c6_i32 : i32 to index
    %c0_49 = arith.constant 0 : index
    %c0_50 = arith.constant 0 : index
    %193 = vector.load %arg8[%192, %c0_49, %c0_50] : memref<12x8x512xf32, #tpu.memory_space<vmem>>, vector<1x8x512xf32>
    %194 = vector.shape_cast %193 : vector<1x8x512xf32> to vector<8x512xf32>
    %cst_51 = arith.constant dense<0.000000e+00> : vector<8x512xf32>
    %195 = tpu.matmul %191, %9, %cst_51 {dimension_numbers = #tpu.dot_dimension_numbers<[1], [0], [0], [1], [0, 0, 1, 1], [], []>} : vector<8x128xf32>, vector<128x512xf32>, vector<8x512xf32> -> vector<8x512xf32>
    %196 = arith.addf %194, %195 : vector<8x512xf32>
    %197 = vector.extract_strided_slice %196 {offsets = [0, 0], sizes = [8, 128], strides = [1, 1]} : vector<8x512xf32> to vector<8x128xf32>
    %198 = arith.negf %197 : vector<8x128xf32>
    %199 = math.exp %198 : vector<8x128xf32>
    %cst_52 = arith.constant 1.000000e+00 : f32
    %200 = vector.broadcast %cst_52 : f32 to vector<8x128xf32>
    %201 = arith.addf %200, %199 : vector<8x128xf32>
    %202 = arith.divf %200, %201 : vector<8x128xf32>
    %203 = vector.extract_strided_slice %196 {offsets = [0, 128], sizes = [8, 128], strides = [1, 1]} : vector<8x512xf32> to vector<8x128xf32>
    %204 = arith.negf %203 : vector<8x128xf32>
    %205 = math.exp %204 : vector<8x128xf32>
    %cst_53 = arith.constant 1.000000e+00 : f32
    %206 = vector.broadcast %cst_53 : f32 to vector<8x128xf32>
    %207 = arith.addf %206, %205 : vector<8x128xf32>
    %208 = arith.divf %206, %207 : vector<8x128xf32>
    %209 = vector.extract_strided_slice %196 {offsets = [0, 256], sizes = [8, 128], strides = [1, 1]} : vector<8x512xf32> to vector<8x128xf32>
    %210 = math.tanh %209 : vector<8x128xf32>
    %211 = vector.extract_strided_slice %196 {offsets = [0, 384], sizes = [8, 128], strides = [1, 1]} : vector<8x512xf32> to vector<8x128xf32>
    %212 = arith.negf %211 : vector<8x128xf32>
    %213 = math.exp %212 : vector<8x128xf32>
    %cst_54 = arith.constant 1.000000e+00 : f32
    %214 = vector.broadcast %cst_54 : f32 to vector<8x128xf32>
    %215 = arith.addf %214, %213 : vector<8x128xf32>
    %216 = arith.divf %214, %215 : vector<8x128xf32>
    %217 = arith.mulf %208, %189 : vector<8x128xf32>
    %218 = arith.mulf %202, %210 : vector<8x128xf32>
    %219 = arith.addf %217, %218 : vector<8x128xf32>
    %220 = math.tanh %219 : vector<8x128xf32>
    %221 = arith.mulf %216, %220 : vector<8x128xf32>
    %c7_i32 = arith.constant 7 : i32
    %222 = arith.index_cast %c7_i32 : i32 to index
    %c0_55 = arith.constant 0 : index
    %c0_56 = arith.constant 0 : index
    %223 = vector.load %arg8[%222, %c0_55, %c0_56] : memref<12x8x512xf32, #tpu.memory_space<vmem>>, vector<1x8x512xf32>
    %224 = vector.shape_cast %223 : vector<1x8x512xf32> to vector<8x512xf32>
    %cst_57 = arith.constant dense<0.000000e+00> : vector<8x512xf32>
    %225 = tpu.matmul %221, %9, %cst_57 {dimension_numbers = #tpu.dot_dimension_numbers<[1], [0], [0], [1], [0, 0, 1, 1], [], []>} : vector<8x128xf32>, vector<128x512xf32>, vector<8x512xf32> -> vector<8x512xf32>
    %226 = arith.addf %224, %225 : vector<8x512xf32>
    %227 = vector.extract_strided_slice %226 {offsets = [0, 0], sizes = [8, 128], strides = [1, 1]} : vector<8x512xf32> to vector<8x128xf32>
    %228 = arith.negf %227 : vector<8x128xf32>
    %229 = math.exp %228 : vector<8x128xf32>
    %cst_58 = arith.constant 1.000000e+00 : f32
    %230 = vector.broadcast %cst_58 : f32 to vector<8x128xf32>
    %231 = arith.addf %230, %229 : vector<8x128xf32>
    %232 = arith.divf %230, %231 : vector<8x128xf32>
    %233 = vector.extract_strided_slice %226 {offsets = [0, 128], sizes = [8, 128], strides = [1, 1]} : vector<8x512xf32> to vector<8x128xf32>
    %234 = arith.negf %233 : vector<8x128xf32>
    %235 = math.exp %234 : vector<8x128xf32>
    %cst_59 = arith.constant 1.000000e+00 : f32
    %236 = vector.broadcast %cst_59 : f32 to vector<8x128xf32>
    %237 = arith.addf %236, %235 : vector<8x128xf32>
    %238 = arith.divf %236, %237 : vector<8x128xf32>
    %239 = vector.extract_strided_slice %226 {offsets = [0, 256], sizes = [8, 128], strides = [1, 1]} : vector<8x512xf32> to vector<8x128xf32>
    %240 = math.tanh %239 : vector<8x128xf32>
    %241 = vector.extract_strided_slice %226 {offsets = [0, 384], sizes = [8, 128], strides = [1, 1]} : vector<8x512xf32> to vector<8x128xf32>
    %242 = arith.negf %241 : vector<8x128xf32>
    %243 = math.exp %242 : vector<8x128xf32>
    %cst_60 = arith.constant 1.000000e+00 : f32
    %244 = vector.broadcast %cst_60 : f32 to vector<8x128xf32>
    %245 = arith.addf %244, %243 : vector<8x128xf32>
    %246 = arith.divf %244, %245 : vector<8x128xf32>
    %247 = arith.mulf %238, %219 : vector<8x128xf32>
    %248 = arith.mulf %232, %240 : vector<8x128xf32>
    %249 = arith.addf %247, %248 : vector<8x128xf32>
    %250 = math.tanh %249 : vector<8x128xf32>
    %251 = arith.mulf %246, %250 : vector<8x128xf32>
    %c8_i32 = arith.constant 8 : i32
    %c0_i32_61 = arith.constant 0 : i32
    %c8_i32_62 = arith.constant 8 : i32
    %252 = arith.addi %c8_i32_62, %c0_i32_61 : i32
    %253 = arith.index_cast %252 : i32 to index
    %c0_63 = arith.constant 0 : index
    %c0_64 = arith.constant 0 : index
    %254 = vector.load %arg8[%253, %c0_63, %c0_64] : memref<12x8x512xf32, #tpu.memory_space<vmem>>, vector<1x8x512xf32>
    %255 = vector.shape_cast %254 : vector<1x8x512xf32> to vector<8x512xf32>
    %cst_65 = arith.constant dense<0.000000e+00> : vector<8x512xf32>
    %256 = tpu.matmul %251, %9, %cst_65 {dimension_numbers = #tpu.dot_dimension_numbers<[1], [0], [0], [1], [0, 0, 1, 1], [], []>} : vector<8x128xf32>, vector<128x512xf32>, vector<8x512xf32> -> vector<8x512xf32>
    %257 = arith.addf %255, %256 : vector<8x512xf32>
    %258 = vector.extract_strided_slice %257 {offsets = [0, 0], sizes = [8, 128], strides = [1, 1]} : vector<8x512xf32> to vector<8x128xf32>
    %259 = arith.negf %258 : vector<8x128xf32>
    %260 = math.exp %259 : vector<8x128xf32>
    %cst_66 = arith.constant 1.000000e+00 : f32
    %261 = vector.broadcast %cst_66 : f32 to vector<8x128xf32>
    %262 = arith.addf %261, %260 : vector<8x128xf32>
    %263 = arith.divf %261, %262 : vector<8x128xf32>
    %264 = vector.extract_strided_slice %257 {offsets = [0, 128], sizes = [8, 128], strides = [1, 1]} : vector<8x512xf32> to vector<8x128xf32>
    %265 = arith.negf %264 : vector<8x128xf32>
    %266 = math.exp %265 : vector<8x128xf32>
    %cst_67 = arith.constant 1.000000e+00 : f32
    %267 = vector.broadcast %cst_67 : f32 to vector<8x128xf32>
    %268 = arith.addf %267, %266 : vector<8x128xf32>
    %269 = arith.divf %267, %268 : vector<8x128xf32>
    %270 = vector.extract_strided_slice %257 {offsets = [0, 256], sizes = [8, 128], strides = [1, 1]} : vector<8x512xf32> to vector<8x128xf32>
    %271 = math.tanh %270 : vector<8x128xf32>
    %272 = vector.extract_strided_slice %257 {offsets = [0, 384], sizes = [8, 128], strides = [1, 1]} : vector<8x512xf32> to vector<8x128xf32>
    %273 = arith.negf %272 : vector<8x128xf32>
    %274 = math.exp %273 : vector<8x128xf32>
    %cst_68 = arith.constant 1.000000e+00 : f32
    %275 = vector.broadcast %cst_68 : f32 to vector<8x128xf32>
    %276 = arith.addf %275, %274 : vector<8x128xf32>
    %277 = arith.divf %275, %276 : vector<8x128xf32>
    %278 = arith.mulf %269, %249 : vector<8x128xf32>
    %279 = arith.mulf %263, %271 : vector<8x128xf32>
    %280 = arith.addf %278, %279 : vector<8x128xf32>
    %281 = math.tanh %280 : vector<8x128xf32>
    %282 = arith.mulf %277, %281 : vector<8x128xf32>
    %283 = arith.index_cast %c0_i32_61 : i32 to index
    %c0_69 = arith.constant 0 : index
    %c0_70 = arith.constant 0 : index
    %284 = vector.load %arg9[%283, %c0_69, %c0_70] : memref<3x8x128xf32, #tpu.memory_space<vmem>>, vector<1x8x128xf32>
    %285 = vector.shape_cast %284 : vector<1x8x128xf32> to vector<8x128xf32>
    %286 = vector.shape_cast %282 : vector<8x128xf32> to vector<1x8x128xf32>
    tpu.vector_store %arg9[%283, %c0_69, %c0_70], %286 {strides = array<i32>} : memref<3x8x128xf32, #tpu.memory_space<vmem>>, vector<1x8x128xf32>,
    %c1_i32_71 = arith.constant 1 : i32
    %c8_i32_72 = arith.constant 8 : i32
    %287 = arith.addi %c8_i32_72, %c1_i32_71 : i32
    %288 = arith.index_cast %287 : i32 to index
    %c0_73 = arith.constant 0 : index
    %c0_74 = arith.constant 0 : index
    %289 = vector.load %arg8[%288, %c0_73, %c0_74] : memref<12x8x512xf32, #tpu.memory_space<vmem>>, vector<1x8x512xf32>
    %290 = vector.shape_cast %289 : vector<1x8x512xf32> to vector<8x512xf32>
    %cst_75 = arith.constant dense<0.000000e+00> : vector<8x512xf32>
    %291 = tpu.matmul %282, %9, %cst_75 {dimension_numbers = #tpu.dot_dimension_numbers<[1], [0], [0], [1], [0, 0, 1, 1], [], []>} : vector<8x128xf32>, vector<128x512xf32>, vector<8x512xf32> -> vector<8x512xf32>
    %292 = arith.addf %290, %291 : vector<8x512xf32>
    %293 = vector.extract_strided_slice %292 {offsets = [0, 0], sizes = [8, 128], strides = [1, 1]} : vector<8x512xf32> to vector<8x128xf32>
    %294 = arith.negf %293 : vector<8x128xf32>
    %295 = math.exp %294 : vector<8x128xf32>
    %cst_76 = arith.constant 1.000000e+00 : f32
    %296 = vector.broadcast %cst_76 : f32 to vector<8x128xf32>
    %297 = arith.addf %296, %295 : vector<8x128xf32>
    %298 = arith.divf %296, %297 : vector<8x128xf32>
    %299 = vector.extract_strided_slice %292 {offsets = [0, 128], sizes = [8, 128], strides = [1, 1]} : vector<8x512xf32> to vector<8x128xf32>
    %300 = arith.negf %299 : vector<8x128xf32>
    %301 = math.exp %300 : vector<8x128xf32>
    %cst_77 = arith.constant 1.000000e+00 : f32
    %302 = vector.broadcast %cst_77 : f32 to vector<8x128xf32>
    %303 = arith.addf %302, %301 : vector<8x128xf32>
    %304 = arith.divf %302, %303 : vector<8x128xf32>
    %305 = vector.extract_strided_slice %292 {offsets = [0, 256], sizes = [8, 128], strides = [1, 1]} : vector<8x512xf32> to vector<8x128xf32>
    %306 = math.tanh %305 : vector<8x128xf32>
    %307 = vector.extract_strided_slice %292 {offsets = [0, 384], sizes = [8, 128], strides = [1, 1]} : vector<8x512xf32> to vector<8x128xf32>
    %308 = arith.negf %307 : vector<8x128xf32>
    %309 = math.exp %308 : vector<8x128xf32>
    %cst_78 = arith.constant 1.000000e+00 : f32
    %310 = vector.broadcast %cst_78 : f32 to vector<8x128xf32>
    %311 = arith.addf %310, %309 : vector<8x128xf32>
    %312 = arith.divf %310, %311 : vector<8x128xf32>
    %313 = arith.mulf %304, %280 : vector<8x128xf32>
    %314 = arith.mulf %298, %306 : vector<8x128xf32>
    %315 = arith.addf %313, %314 : vector<8x128xf32>
    %316 = math.tanh %315 : vector<8x128xf32>
    %317 = arith.mulf %312, %316 : vector<8x128xf32>
    %318 = arith.index_cast %c1_i32_71 : i32 to index
    %c0_79 = arith.constant 0 : index
    %c0_80 = arith.constant 0 : index
    %319 = vector.load %arg9[%318, %c0_79, %c0_80] : memref<3x8x128xf32, #tpu.memory_space<vmem>>, vector<1x8x128xf32>
    %320 = vector.shape_cast %319 : vector<1x8x128xf32> to vector<8x128xf32>
    %321 = vector.shape_cast %317 : vector<8x128xf32> to vector<1x8x128xf32>
    tpu.vector_store %arg9[%318, %c0_79, %c0_80], %321 {strides = array<i32>} : memref<3x8x128xf32, #tpu.memory_space<vmem>>, vector<1x8x128xf32>,
    %c2_i32_81 = arith.constant 2 : i32
    %c8_i32_82 = arith.constant 8 : i32
    %322 = arith.addi %c8_i32_82, %c2_i32_81 : i32
    %323 = arith.index_cast %322 : i32 to index
    %c0_83 = arith.constant 0 : index
    %c0_84 = arith.constant 0 : index
    %324 = vector.load %arg8[%323, %c0_83, %c0_84] : memref<12x8x512xf32, #tpu.memory_space<vmem>>, vector<1x8x512xf32>
    %325 = vector.shape_cast %324 : vector<1x8x512xf32> to vector<8x512xf32>
    %cst_85 = arith.constant dense<0.000000e+00> : vector<8x512xf32>
    %326 = tpu.matmul %317, %9, %cst_85 {dimension_numbers = #tpu.dot_dimension_numbers<[1], [0], [0], [1], [0, 0, 1, 1], [], []>} : vector<8x128xf32>, vector<128x512xf32>, vector<8x512xf32> -> vector<8x512xf32>
    %327 = arith.addf %325, %326 : vector<8x512xf32>
    %328 = vector.extract_strided_slice %327 {offsets = [0, 0], sizes = [8, 128], strides = [1, 1]} : vector<8x512xf32> to vector<8x128xf32>
    %329 = arith.negf %328 : vector<8x128xf32>
    %330 = math.exp %329 : vector<8x128xf32>
    %cst_86 = arith.constant 1.000000e+00 : f32
    %331 = vector.broadcast %cst_86 : f32 to vector<8x128xf32>
    %332 = arith.addf %331, %330 : vector<8x128xf32>
    %333 = arith.divf %331, %332 : vector<8x128xf32>
    %334 = vector.extract_strided_slice %327 {offsets = [0, 128], sizes = [8, 128], strides = [1, 1]} : vector<8x512xf32> to vector<8x128xf32>
    %335 = arith.negf %334 : vector<8x128xf32>
    %336 = math.exp %335 : vector<8x128xf32>
    %cst_87 = arith.constant 1.000000e+00 : f32
    %337 = vector.broadcast %cst_87 : f32 to vector<8x128xf32>
    %338 = arith.addf %337, %336 : vector<8x128xf32>
    %339 = arith.divf %337, %338 : vector<8x128xf32>
    %340 = vector.extract_strided_slice %327 {offsets = [0, 256], sizes = [8, 128], strides = [1, 1]} : vector<8x512xf32> to vector<8x128xf32>
    %341 = math.tanh %340 : vector<8x128xf32>
    %342 = vector.extract_strided_slice %327 {offsets = [0, 384], sizes = [8, 128], strides = [1, 1]} : vector<8x512xf32> to vector<8x128xf32>
    %343 = arith.negf %342 : vector<8x128xf32>
    %344 = math.exp %343 : vector<8x128xf32>
    %cst_88 = arith.constant 1.000000e+00 : f32
    %345 = vector.broadcast %cst_88 : f32 to vector<8x128xf32>
    %346 = arith.addf %345, %344 : vector<8x128xf32>
    %347 = arith.divf %345, %346 : vector<8x128xf32>
    %348 = arith.mulf %339, %315 : vector<8x128xf32>
    %349 = arith.mulf %333, %341 : vector<8x128xf32>
    %350 = arith.addf %348, %349 : vector<8x128xf32>
    %351 = math.tanh %350 : vector<8x128xf32>
    %352 = arith.mulf %347, %351 : vector<8x128xf32>
    %353 = arith.index_cast %c2_i32_81 : i32 to index
    %c0_89 = arith.constant 0 : index
    %c0_90 = arith.constant 0 : index
    %354 = vector.load %arg9[%353, %c0_89, %c0_90] : memref<3x8x128xf32, #tpu.memory_space<vmem>>, vector<1x8x128xf32>
    %355 = vector.shape_cast %354 : vector<1x8x128xf32> to vector<8x128xf32>
    %356 = vector.shape_cast %352 : vector<8x128xf32> to vector<1x8x128xf32>
    tpu.vector_store %arg9[%353, %c0_89, %c0_90], %356 {strides = array<i32>} : memref<3x8x128xf32, #tpu.memory_space<vmem>>, vector<1x8x128xf32>,
    %c3_i32_91 = arith.constant 3 : i32
    %c0_92 = arith.constant 0 : index
    %c0_93 = arith.constant 0 : index
    %c0_94 = arith.constant 0 : index
    %357 = vector.load %arg9[%c0_92, %c0_93, %c0_94] : memref<3x8x128xf32, #tpu.memory_space<vmem>>, vector<3x8x128xf32>
    %358 = vector.shape_cast %357 : vector<3x8x128xf32> to vector<24x128xf32>
    %c0_95 = arith.constant 0 : index
    %c0_96 = arith.constant 0 : index
    %359 = vector.load %arg5[%c0_95, %c0_96] : memref<128x4xf32, #tpu.memory_space<vmem>>, vector<128x4xf32>
    %cst_97 = arith.constant dense<0.000000e+00> : vector<24x4xf32>
    %360 = tpu.matmul %358, %359, %cst_97 {dimension_numbers = #tpu.dot_dimension_numbers<[1], [0], [0], [1], [0, 0, 1, 1], [], []>} : vector<24x128xf32>, vector<128x4xf32>, vector<24x4xf32> -> vector<24x4xf32>
    %c0_98 = arith.constant 0 : index
    %c0_99 = arith.constant 0 : index
    %361 = vector.load %arg6[%c0_98, %c0_99] : memref<1x4xf32, #tpu.memory_space<vmem>>, vector<1x4xf32>
    %362 = vector.broadcast %361 : vector<1x4xf32> to vector<24x4xf32>
    %363 = arith.addf %360, %362 : vector<24x4xf32>
    %364 = vector.shape_cast %363 : vector<24x4xf32> to vector<3x8x4xf32>
    %c0_100 = arith.constant 0 : index
    %c0_101 = arith.constant 0 : index
    %c0_102 = arith.constant 0 : index
    %365 = vector.load %arg7[%c0_100, %c0_101, %c0_102] : memref<3x8x4xf32, #tpu.memory_space<vmem>>, vector<3x8x4xf32>
    tpu.vector_store %arg7[%c0_100, %c0_101, %c0_102], %364 {strides = array<i32>} : memref<3x8x4xf32, #tpu.memory_space<vmem>>, vector<3x8x4xf32>,
    return
  }
  func.func @transform_0(%arg0: i32) -> (i32, i32, i32) {
    %c0_i32 = arith.constant 0 : i32
    %c0_i32_0 = arith.constant 0 : i32
    %c0_i32_1 = arith.constant 0 : i32
    %c0_i32_2 = arith.constant 0 : i32
    return %c0_i32, %c0_i32_0, %c0_i32_1 : i32, i32, i32
  }
  func.func @transform_1(%arg0: i32) -> (i32, i32) {
    %c0_i32 = arith.constant 0 : i32
    %c0_i32_0 = arith.constant 0 : i32
    %c0_i32_1 = arith.constant 0 : i32
    return %c0_i32, %c0_i32_0 : i32, i32
  }
  func.func @transform_2(%arg0: i32) -> (i32, i32) {
    %c0_i32 = arith.constant 0 : i32
    %c0_i32_0 = arith.constant 0 : i32
    %c0_i32_1 = arith.constant 0 : i32
    return %c0_i32, %c0_i32_0 : i32, i32
  }
  func.func @transform_3(%arg0: i32) -> (i32, i32) {
    %c0_i32 = arith.constant 0 : i32
    %c0_i32_0 = arith.constant 0 : i32
    %c0_i32_1 = arith.constant 0 : i32
    return %c0_i32, %c0_i32_0 : i32, i32
  }
  func.func @transform_4(%arg0: i32) -> (i32, i32) {
    %c0_i32 = arith.constant 0 : i32
    %c0_i32_0 = arith.constant 0 : i32
    %c0_i32_1 = arith.constant 0 : i32
    return %c0_i32, %c0_i32_0 : i32, i32
  }
  func.func @transform_5(%arg0: i32) -> (i32, i32) {
    %c0_i32 = arith.constant 0 : i32
    %c0_i32_0 = arith.constant 0 : i32
    %c0_i32_1 = arith.constant 0 : i32
    return %c0_i32, %c0_i32_0 : i32, i32
  }
  func.func @transform_6(%arg0: i32) -> (i32, i32, i32) {
    %c0_i32 = arith.constant 0 : i32
    %c0_i32_0 = arith.constant 0 : i32
    %c0_i32_1 = arith.constant 0 : i32
    %c0_i32_2 = arith.constant 0 : i32
    return %c0_i32, %c0_i32_0, %c0_i32_1 : i32, i32, i32
  }
}

</mosaic_0001>

<llo_original>
// kernel: lstm_model_forward.1
$region0: #{lstm_model_forward.1}
  #allocation0 [shape = 'u32[]', space=smem, size = 0x4, offset = 0x4, fixed_abs, tag = 'smem constant byte address 0x4 - core index']
  #allocation1 [shape = 'u32[144,128]{1,0:T(1,128)}', space=vmem, size = 0x12000, scoped, tag = 'internal scratch']
  #allocation2 [shape = 'f32[12,8,512]{2,1,0:T(8,128)}', space=vmem, size = 0x30000, scoped, tag = 'scratch operand']
  #allocation3 [shape = 'f32[3,8,128]{2,1,0:T(8,128)}', space=vmem, size = 0x3000, scoped, tag = 'scratch operand']
  %s0 = inlined_call_operand.vmem [shape: f32[12,8,8], index: 0, kind: input, shape index: {}]
  %s1 = inlined_call_operand.vmem [shape: f32[8,512], index: 1, kind: input, shape index: {}]
  %s2 = inlined_call_operand.hbm [shape: f32[128,512], index: 2, kind: input, shape index: {}]
  %s3 = inlined_call_operand.vmem [shape: f32[1,512], index: 3, kind: input, shape index: {}]
  %s4 = inlined_call_operand.vmem [shape: f32[128,4], index: 4, kind: input, shape index: {}]
  %s5 = inlined_call_operand.vmem [shape: f32[1,4], index: 5, kind: input, shape index: {}]
  %s6 = inlined_call_operand.vmem [shape: f32[3,8,4], index: 6, kind: output, shape index: {}]
  %s7 = sld [smem:[#allocation0]]
  $region38: #{lstm_model_forward.1} parent=0
    _
  %s9 = ssub.s32 1, %s7
  %s10 = scalar_select 0, %s9, %s7
  $region1: #{lstm_model_forward.1} parent=0
    #allocation4 [shape = 'u8[262144]{0}', space=vmem, size = 0x40000, scoped, tag = 'input window, operand 2, single buffered']
    #allocation5 [shape = 's32[1]{0}', space=sflag, size = 0x4, scoped, tag = 'scoped memory for lstm_model_forward.1']
    %11 = vsyncpa [#allocation5], 0
    // Predicated region
    $region2: #{lstm_model_forward.1} parent=1 // pred_check
      _
    $region3: #{lstm_model_forward.1} parent=1 // pred_check_branch
      %13 = sbr.rel (0) target = $region5
    $region4: #{lstm_model_forward.1} parent=1 // pred_region
      _
    $region5: #{lstm_model_forward.1} parent=1 // pred_fallthru
      _
    // Predicated region
    $region6: #{lstm_model_forward.1} parent=1 // pred_check
      _
    $region7: #{lstm_model_forward.1} parent=1 // pred_check_branch
      %15 = sbr.rel (0) target = $region9
    $region8: #{lstm_model_forward.1} parent=1 // pred_region
      _
    $region9: #{lstm_model_forward.1} parent=1 // pred_fallthru
      _
    // Predicated region
    $region10: #{lstm_model_forward.1} parent=1 // pred_check
      _
    $region11: #{lstm_model_forward.1} parent=1 // pred_check_branch
      %17 = sbr.rel (0) target = $region13
    $region12: #{lstm_model_forward.1} parent=1 // pred_region
      %s19 = ssub.s32 8192, 8192
      %20 = vsyncadd [#allocation5], %s19
      %s21 = sshll.u32 [#allocation4], 4
      %s22 = int_to_ptr.vmem [resolvable:$true] %s21
      %27 = dma.hbm_to_vmem [thread:$0]  %s2, 8192, %s22, [#allocation5], 512, 512, 32
    $region13: #{lstm_model_forward.1} parent=1 // pred_fallthru
      _
    // Predicated region
    $region14: #{lstm_model_forward.1} parent=1 // pred_check
      _
    $region15: #{lstm_model_forward.1} parent=1 // pred_check_branch
      %29 = sbr.rel (0) target = $region17
    $region16: #{lstm_model_forward.1} parent=1 // pred_region
      _
    $region17: #{lstm_model_forward.1} parent=1 // pred_fallthru
      _
    // Predicated region
    $region18: #{lstm_model_forward.1} parent=1 // pred_check
      _
    $region19: #{lstm_model_forward.1} parent=1 // pred_check_branch
      %31 = sbr.rel (0) target = $region21
    $region20: #{lstm_model_forward.1} parent=1 // pred_region
      _
    $region21: #{lstm_model_forward.1} parent=1 // pred_fallthru
      _
    // Predicated region
    $region22: #{lstm_model_forward.1} parent=1 // pred_check
      _
    $region23: #{lstm_model_forward.1} parent=1 // pred_check_branch
      %33 = sbr.rel (0) target = $region25
    $region24: #{lstm_model_forward.1} parent=1 // pred_region
      _
    $region25: #{lstm_model_forward.1} parent=1 // pred_fallthru
      _
    // Predicated region
    $region26: #{lstm_model_forward.1} parent=1 // pred_check
      _
    $region27: #{lstm_model_forward.1} parent=1 // pred_check_branch
      %35 = sbr.rel (0) target = $region29
    $region28: #{lstm_model_forward.1} parent=1 // pred_region
      %36 = dma.done [#allocation5], 8192
    $region29: #{lstm_model_forward.1} parent=1 // pred_fallthru
      _
    %v37 = vld [vmem:[%s0] sm:$0xff]
    %v38 = vld [vmem:[%s0 + $0x8] sm:$0xff]
    %v39 = vld [vmem:[%s0 + $0x10] sm:$0xff]
    %v40 = vld [vmem:[%s0 + $0x18] sm:$0xff]
    %v41 = vld [vmem:[%s0 + $0x20] sm:$0xff]
    %v42 = vld [vmem:[%s0 + $0x28] sm:$0xff]
    %v43 = vld [vmem:[%s0 + $0x30] sm:$0xff]
    %v44 = vld [vmem:[%s0 + $0x38] sm:$0xff]
    %v45 = vld [vmem:[%s0 + $0x40] sm:$0xff]
    %v46 = vld [vmem:[%s0 + $0x48] sm:$0xff]
    %v47 = vld [vmem:[%s0 + $0x50] sm:$0xff]
    %v48 = vld [vmem:[%s0 + $0x58] sm:$0xff]
    %v49 = vld [vmem:[%s1] sm:$0xff]
    %v50 = vld [vmem:[%s1 + $0x8] sm:$0xff]
    %v51 = vld [vmem:[%s1 + $0x10] sm:$0xff]
    %v52 = vld [vmem:[%s1 + $0x18] sm:$0xff]
    %v53 = vld [vmem:[%s3] sm:$0xf]
    %v55 = vlaneseq
    %v56 = vshrl.u32 %v55, 7
    %v57 = vsub.s32 0, %v56
    %v58 = vrot.slane %v53, %v57
    %v59 = vlaneseq
    %v60 = vshrl.u32 %v59, 7
    %v61 = vsub.s32 1, %v60
    %v62 = vrot.slane %v53, %v61
    %v63 = vlaneseq
    %v64 = vshrl.u32 %v63, 7
    %v65 = vsub.s32 2, %v64
    %v66 = vrot.slane %v53, %v65
    %v67 = vlaneseq
    %v68 = vshrl.u32 %v67, 7
    %v69 = vsub.s32 3, %v68
    %v70 = vrot.slane %v53, %v69
    %vm75 = vcmask 64512
    %v77 = vsel %vm75, %v37, 0
    %v80 = vsel %vm75, %v38, 0
    %v83 = vsel %vm75, %v39, 0
    %v86 = vsel %vm75, %v40, 0
    %v89 = vsel %vm75, %v41, 0
    %v92 = vsel %vm75, %v42, 0
    %v95 = vsel %vm75, %v43, 0
    %v98 = vsel %vm75, %v44, 0
    %v101 = vsel %vm75, %v45, 0
    %v104 = vsel %vm75, %v46, 0
    %v107 = vsel %vm75, %v47, 0
    %v110 = vsel %vm75, %v48, 0
    %112 = vmatprep.subr.mxu0 %v50
    %113 = vmatpush1.msra.mxu0 %v49
    %114 = vmatprep.subr.mxu0 0.0
    %115 = vmatpush1.msra.mxu0 0.0
    %116 = vmatprep.subr.mxu0 0.0
    %117 = vmatpush1.msra.mxu0 0.0
    %118 = vmatprep.subr.mxu0 0.0
    %119 = vmatpush1.msra.mxu0 0.0
    %120 = vmatprep.subr.mxu0 0.0
    %121 = vmatpush1.msra.mxu0 0.0
    %122 = vmatprep.subr.mxu0 0.0
    %123 = vmatpush1.msra.mxu0 0.0
    %124 = vmatprep.subr.mxu0 0.0
    %125 = vmatpush1.msra.mxu0 0.0
    %126 = vmatprep.subr.mxu0 0.0
    %127 = vmatpush1.msra.mxu0 0.0
    %128 = vmatprep.subr.mxu0 0.0
    %129 = vmatpush1.msra.mxu0 0.0
    %130 = vmatprep.subr.mxu0 0.0
    %131 = vmatpush1.msra.mxu0 0.0
    %132 = vmatprep.subr.mxu0 0.0
    %133 = vmatpush1.msra.mxu0 0.0
    %134 = vmatprep.subr.mxu0 0.0
    %135 = vmatpush1.msra.mxu0 0.0
    %136 = vmatprep.subr.mxu0 0.0
    %137 = vmatpush1.msra.mxu0 0.0
    %138 = vmatprep.subr.mxu0 0.0
    %139 = vmatpush1.msra.mxu0 0.0
    %140 = vmatprep.subr.mxu0 0.0
    %141 = vmatpush1.msra.mxu0 0.0
    %142 = vmatprep.subr.mxu0 0.0
    %143 = vmatpush1.msra.mxu0 0.0
    %144 = vmatprep.subr.mxu0 0.0
    %145 = vmatpush1.msra.mxu0 0.0
    %146 = vmatprep.subr.mxu0 0.0
    %147 = vmatpush1.msra.mxu0 0.0
    %148 = vmatprep.subr.mxu0 0.0
    %149 = vmatpush1.msra.mxu0 0.0
    %150 = vmatprep.subr.mxu0 0.0
    %151 = vmatpush1.msra.mxu0 0.0
    %152 = vmatprep.subr.mxu0 0.0
    %153 = vmatpush1.msra.mxu0 0.0
    %154 = vmatprep.subr.mxu0 0.0
    %155 = vmatpush1.msra.mxu0 0.0
    %156 = vmatprep.subr.mxu0 0.0
    %157 = vmatpush1.msra.mxu0 0.0
    %158 = vmatprep.subr.mxu0 0.0
    %159 = vmatpush1.msra.mxu0 0.0
    %160 = vmatprep.subr.mxu0 0.0
    %161 = vmatpush1.msra.mxu0 0.0
    %162 = vmatprep.subr.mxu0 0.0
    %163 = vmatpush1.msra.mxu0 0.0
    %164 = vmatprep.subr.mxu0 0.0
    %165 = vmatpush1.msra.mxu0 0.0
    %166 = vmatprep.subr.mxu0 0.0
    %167 = vmatpush1.msra.mxu0 0.0
    %168 = vmatprep.subr.mxu0 0.0
    %169 = vmatpush1.msra.mxu0 0.0
    %170 = vmatprep.subr.mxu0 0.0
    %171 = vmatpush1.msra.mxu0 0.0
    %172 = vmatprep.subr.mxu0 0.0
    %173 = vmatpush1.msra.mxu0 0.0
    %174 = vmatprep.subr.mxu0 0.0
    %175 = vmatpush1.msra.mxu0 0.0
    %176 = vmatprep.mubr.f32.mxu0 0.0
    %177 = vmatmul.mubr.f32.gmra.mrb[0].mxu0 %v77
    %v178 = vpop.f32.mrb[0].mxu0
    %v179 = vadd.f32 %v58, %v178
    %v180 = vpop.f32.mrb[0].mxu0
    %v181 = vadd.f32 %v62, %v180
    %182 = vmatprep.mubr.f32.mxu0 0.0
    %183 = vmatmul.mubr.f32.gmra.mrb[0].mxu0 %v80
    %v184 = vpop.f32.mrb[0].mxu0
    %v185 = vadd.f32 %v58, %v184
    %v186 = vpop.f32.mrb[0].mxu0
    %v187 = vadd.f32 %v62, %v186
    %188 = vmatprep.mubr.f32.mxu0 0.0
    %189 = vmatmul.mubr.f32.gmra.mrb[0].mxu0 %v83
    %v190 = vpop.f32.mrb[0].mxu0
    %v191 = vadd.f32 %v58, %v190
    %v192 = vpop.f32.mrb[0].mxu0
    %v193 = vadd.f32 %v62, %v192
    %194 = vmatprep.mubr.f32.mxu0 0.0
    %195 = vmatmul.mubr.f32.gmra.mrb[0].mxu0 %v86
    %v196 = vpop.f32.mrb[0].mxu0
    %v197 = vadd.f32 %v58, %v196
    %v198 = vpop.f32.mrb[0].mxu0
    %v199 = vadd.f32 %v62, %v198
    %200 = vmatprep.mubr.f32.mxu0 0.0
    %201 = vmatmul.mubr.f32.gmra.mrb[0].mxu0 %v89
    %v202 = vpop.f32.mrb[0].mxu0
    %v203 = vadd.f32 %v58, %v202
    %v204 = vpop.f32.mrb[0].mxu0
    %v205 = vadd.f32 %v62, %v204
    %206 = vmatprep.mubr.f32.mxu0 0.0
    %207 = vmatmul.mubr.f32.gmra.mrb[0].mxu0 %v92
    %v208 = vpop.f32.mrb[0].mxu0
    %v209 = vadd.f32 %v58, %v208
    %v210 = vpop.f32.mrb[0].mxu0
    %v211 = vadd.f32 %v62, %v210
    %212 = vmatprep.mubr.f32.mxu0 0.0
    %213 = vmatmul.mubr.f32.gmra.mrb[0].mxu0 %v95
    %v214 = vpop.f32.mrb[0].mxu0
    %v215 = vadd.f32 %v58, %v214
    %v216 = vpop.f32.mrb[0].mxu0
    %v217 = vadd.f32 %v62, %v216
    %218 = vmatprep.mubr.f32.mxu0 0.0
    %219 = vmatmul.mubr.f32.gmra.mrb[0].mxu0 %v98
    %v220 = vpop.f32.mrb[0].mxu0
    %v221 = vadd.f32 %v58, %v220
    %v222 = vpop.f32.mrb[0].mxu0
    %v223 = vadd.f32 %v62, %v222
    %224 = vmatprep.mubr.f32.mxu0 0.0
    %225 = vmatmul.mubr.f32.gmra.mrb[0].mxu0 %v101
    %v226 = vpop.f32.mrb[0].mxu0
    %v227 = vadd.f32 %v58, %v226
    %v228 = vpop.f32.mrb[0].mxu0
    %v229 = vadd.f32 %v62, %v228
    %230 = vmatprep.mubr.f32.mxu0 0.0
    %231 = vmatmul.mubr.f32.gmra.mrb[0].mxu0 %v104
    %v232 = vpop.f32.mrb[0].mxu0
    %v233 = vadd.f32 %v58, %v232
    %v234 = vpop.f32.mrb[0].mxu0
    %v235 = vadd.f32 %v62, %v234
    %236 = vmatprep.mubr.f32.mxu0 0.0
    %237 = vmatmul.mubr.f32.gmra.mrb[0].mxu0 %v107
    %v238 = vpop.f32.mrb[0].mxu0
    %v239 = vadd.f32 %v58, %v238
    %v240 = vpop.f32.mrb[0].mxu0
    %v241 = vadd.f32 %v62, %v240
    %242 = vmatprep.mubr.f32.mxu0 0.0
    %243 = vmatmul.mubr.f32.gmra.mrb[0].mxu0 %v110
    %v244 = vpop.f32.mrb[0].mxu0
    %v245 = vadd.f32 %v58, %v244
    %v246 = vpop.f32.mrb[0].mxu0
    %v247 = vadd.f32 %v62, %v246
    %248 = vdwg.mxu0
    %249 = vmatprep.subr.mxu0 %v52
    %250 = vmatpush1.msra.mxu0 %v51
    %251 = vmatprep.subr.mxu0 0.0
    %252 = vmatpush1.msra.mxu0 0.0
    %253 = vmatprep.subr.mxu0 0.0
    %254 = vmatpush1.msra.mxu0 0.0
    %255 = vmatprep.subr.mxu0 0.0
    %256 = vmatpush1.msra.mxu0 0.0
    %257 = vmatprep.subr.mxu0 0.0
    %258 = vmatpush1.msra.mxu0 0.0
    %259 = vmatprep.subr.mxu0 0.0
    %260 = vmatpush1.msra.mxu0 0.0
    %261 = vmatprep.subr.mxu0 0.0
    %262 = vmatpush1.msra.mxu0 0.0
    %263 = vmatprep.subr.mxu0 0.0
    %264 = vmatpush1.msra.mxu0 0.0
    %265 = vmatprep.subr.mxu0 0.0
    %266 = vmatpush1.msra.mxu0 0.0
    %267 = vmatprep.subr.mxu0 0.0
    %268 = vmatpush1.msra.mxu0 0.0
    %269 = vmatprep.subr.mxu0 0.0
    %270 = vmatpush1.msra.mxu0 0.0
    %271 = vmatprep.subr.mxu0 0.0
    %272 = vmatpush1.msra.mxu0 0.0
    %273 = vmatprep.subr.mxu0 0.0
    %274 = vmatpush1.msra.mxu0 0.0
    %275 = vmatprep.subr.mxu0 0.0
    %276 = vmatpush1.msra.mxu0 0.0
    %277 = vmatprep.subr.mxu0 0.0
    %278 = vmatpush1.msra.mxu0 0.0
    %279 = vmatprep.subr.mxu0 0.0
    %280 = vmatpush1.msra.mxu0 0.0
    %281 = vmatprep.subr.mxu0 0.0
    %282 = vmatpush1.msra.mxu0 0.0
    %283 = vmatprep.subr.mxu0 0.0
    %284 = vmatpush1.msra.mxu0 0.0
    %285 = vmatprep.subr.mxu0 0.0
    %286 = vmatpush1.msra.mxu0 0.0
    %287 = vmatprep.subr.mxu0 0.0
    %288 = vmatpush1.msra.mxu0 0.0
    %289 = vmatprep.subr.mxu0 0.0
    %290 = vmatpush1.msra.mxu0 0.0
    %291 = vmatprep.subr.mxu0 0.0
    %292 = vmatpush1.msra.mxu0 0.0
    %293 = vmatprep.subr.mxu0 0.0
    %294 = vmatpush1.msra.mxu0 0.0
    %295 = vmatprep.subr.mxu0 0.0
    %296 = vmatpush1.msra.mxu0 0.0
    %297 = vmatprep.subr.mxu0 0.0
    %298 = vmatpush1.msra.mxu0 0.0
    %299 = vmatprep.subr.mxu0 0.0
    %300 = vmatpush1.msra.mxu0 0.0
    %301 = vmatprep.subr.mxu0 0.0
    %302 = vmatpush1.msra.mxu0 0.0
    %303 = vmatprep.subr.mxu0 0.0
    %304 = vmatpush1.msra.mxu0 0.0
    %305 = vmatprep.subr.mxu0 0.0
    %306 = vmatpush1.msra.mxu0 0.0
    %307 = vmatprep.subr.mxu0 0.0
    %308 = vmatpush1.msra.mxu0 0.0
    %309 = vmatprep.subr.mxu0 0.0
    %310 = vmatpush1.msra.mxu0 0.0
    %311 = vmatprep.subr.mxu0 0.0
    %312 = vmatpush1.msra.mxu0 0.0
    %313 = vmatprep.mubr.f32.mxu0 0.0
    %314 = vmatmul.mubr.f32.gmra.mrb[0].mxu0 %v77
    %v315 = vpop.f32.mrb[0].mxu0
    %v316 = vadd.f32 %v66, %v315
    %v317 = vpop.f32.mrb[0].mxu0
    %v318 = vadd.f32 %v70, %v317
    %319 = vmatprep.mubr.f32.mxu0 0.0
    %320 = vmatmul.mubr.f32.gmra.mrb[0].mxu0 %v80
    %v321 = vpop.f32.mrb[0].mxu0
    %v322 = vadd.f32 %v66, %v321
    %v323 = vpop.f32.mrb[0].mxu0
    %v324 = vadd.f32 %v70, %v323
    %325 = vmatprep.mubr.f32.mxu0 0.0
    %326 = vmatmul.mubr.f32.gmra.mrb[0].mxu0 %v83
    %v327 = vpop.f32.mrb[0].mxu0
    %v328 = vadd.f32 %v66, %v327
    %v329 = vpop.f32.mrb[0].mxu0
    %v330 = vadd.f32 %v70, %v329
    %331 = vmatprep.mubr.f32.mxu0 0.0
    %332 = vmatmul.mubr.f32.gmra.mrb[0].mxu0 %v86
    %v333 = vpop.f32.mrb[0].mxu0
    %v334 = vadd.f32 %v66, %v333
    %v335 = vpop.f32.mrb[0].mxu0
    %v336 = vadd.f32 %v70, %v335
    %337 = vmatprep.mubr.f32.mxu0 0.0
    %338 = vmatmul.mubr.f32.gmra.mrb[0].mxu0 %v89
    %v339 = vpop.f32.mrb[0].mxu0
    %v340 = vadd.f32 %v66, %v339
    %v341 = vpop.f32.mrb[0].mxu0
    %v342 = vadd.f32 %v70, %v341
    %343 = vmatprep.mubr.f32.mxu0 0.0
    %344 = vmatmul.mubr.f32.gmra.mrb[0].mxu0 %v92
    %v345 = vpop.f32.mrb[0].mxu0
    %v346 = vadd.f32 %v66, %v345
    %v347 = vpop.f32.mrb[0].mxu0
    %v348 = vadd.f32 %v70, %v347
    %349 = vmatprep.mubr.f32.mxu0 0.0
    %350 = vmatmul.mubr.f32.gmra.mrb[0].mxu0 %v95
    %v351 = vpop.f32.mrb[0].mxu0
    %v352 = vadd.f32 %v66, %v351
    %v353 = vpop.f32.mrb[0].mxu0
    %v354 = vadd.f32 %v70, %v353
    %355 = vmatprep.mubr.f32.mxu0 0.0
    %356 = vmatmul.mubr.f32.gmra.mrb[0].mxu0 %v98
    %v357 = vpop.f32.mrb[0].mxu0
    %v358 = vadd.f32 %v66, %v357
    %v359 = vpop.f32.mrb[0].mxu0
    %v360 = vadd.f32 %v70, %v359
    %361 = vmatprep.mubr.f32.mxu0 0.0
    %362 = vmatmul.mubr.f32.gmra.mrb[0].mxu0 %v101
    %v363 = vpop.f32.mrb[0].mxu0
    %v364 = vadd.f32 %v66, %v363
    %v365 = vpop.f32.mrb[0].mxu0
    %v366 = vadd.f32 %v70, %v365
    %367 = vmatprep.mubr.f32.mxu0 0.0
    %368 = vmatmul.mubr.f32.gmra.mrb[0].mxu0 %v104
    %v369 = vpop.f32.mrb[0].mxu0
    %v370 = vadd.f32 %v66, %v369
    %v371 = vpop.f32.mrb[0].mxu0
    %v372 = vadd.f32 %v70, %v371
    %373 = vmatprep.mubr.f32.mxu0 0.0
    %374 = vmatmul.mubr.f32.gmra.mrb[0].mxu0 %v107
    %v375 = vpop.f32.mrb[0].mxu0
    %v376 = vadd.f32 %v66, %v375
    %v377 = vpop.f32.mrb[0].mxu0
    %v378 = vadd.f32 %v70, %v377
    %379 = vmatprep.mubr.f32.mxu0 0.0
    %380 = vmatmul.mubr.f32.gmra.mrb[0].mxu0 %v110
    %v381 = vpop.f32.mrb[0].mxu0
    %v382 = vadd.f32 %v66, %v381
    %v383 = vpop.f32.mrb[0].mxu0
    %v384 = vadd.f32 %v70, %v383
    %385 = vdwg.mxu0
    %386 = vst [vmem:[#allocation2] sm:$0xff] %v179
    %387 = vst [vmem:[#allocation2 + $0x8] sm:$0xff] %v181
    %388 = vst [vmem:[#allocation2 + $0x10] sm:$0xff] %v316
    %389 = vst [vmem:[#allocation2 + $0x18] sm:$0xff] %v318
    %390 = vst [vmem:[#allocation2 + $0x20] sm:$0xff] %v185
    %391 = vst [vmem:[#allocation2 + $0x28] sm:$0xff] %v187
    %392 = vst [vmem:[#allocation2 + $0x30] sm:$0xff] %v322
    %393 = vst [vmem:[#allocation2 + $0x38] sm:$0xff] %v324
    %394 = vst [vmem:[#allocation2 + $0x40] sm:$0xff] %v191
    %395 = vst [vmem:[#allocation2 + $0x48] sm:$0xff] %v193
    %396 = vst [vmem:[#allocation2 + $0x50] sm:$0xff] %v328
    %397 = vst [vmem:[#allocation2 + $0x58] sm:$0xff] %v330
    %398 = vst [vmem:[#allocation2 + $0x60] sm:$0xff] %v197
    %399 = vst [vmem:[#allocation2 + $0x68] sm:$0xff] %v199
    %400 = vst [vmem:[#allocation2 + $0x70] sm:$0xff] %v334
    %401 = vst [vmem:[#allocation2 + $0x78] sm:$0xff] %v336
    %402 = vst [vmem:[#allocation2 + $0x80] sm:$0xff] %v203
    %403 = vst [vmem:[#allocation2 + $0x88] sm:$0xff] %v205
    %404 = vst [vmem:[#allocation2 + $0x90] sm:$0xff] %v340
    %405 = vst [vmem:[#allocation2 + $0x98] sm:$0xff] %v342
    %406 = vst [vmem:[#allocation2 + $0xa0] sm:$0xff] %v209
    %407 = vst [vmem:[#allocation2 + $0xa8] sm:$0xff] %v211
    %408 = vst [vmem:[#allocation2 + $0xb0] sm:$0xff] %v346
    %409 = vst [vmem:[#allocation2 + $0xb8] sm:$0xff] %v348
    %410 = vst [vmem:[#allocation2 + $0xc0] sm:$0xff] %v215
    %411 = vst [vmem:[#allocation2 + $0xc8] sm:$0xff] %v217
    %412 = vst [vmem:[#allocation2 + $0xd0] sm:$0xff] %v352
    %413 = vst [vmem:[#allocation2 + $0xd8] sm:$0xff] %v354
    %414 = vst [vmem:[#allocation2 + $0xe0] sm:$0xff] %v221
    %415 = vst [vmem:[#allocation2 + $0xe8] sm:$0xff] %v223
    %416 = vst [vmem:[#allocation2 + $0xf0] sm:$0xff] %v358
    %417 = vst [vmem:[#allocation2 + $0xf8] sm:$0xff] %v360
    %418 = vst [vmem:[#allocation2 + $0x100] sm:$0xff] %v227
    %419 = vst [vmem:[#allocation2 + $0x108] sm:$0xff] %v229
    %420 = vst [vmem:[#allocation2 + $0x110] sm:$0xff] %v364
    %421 = vst [vmem:[#allocation2 + $0x118] sm:$0xff] %v366
    %422 = vst [vmem:[#allocation2 + $0x120] sm:$0xff] %v233
    %423 = vst [vmem:[#allocation2 + $0x128] sm:$0xff] %v235
    %424 = vst [vmem:[#allocation2 + $0x130] sm:$0xff] %v370
    %425 = vst [vmem:[#allocation2 + $0x138] sm:$0xff] %v372
    %426 = vst [vmem:[#allocation2 + $0x140] sm:$0xff] %v239
    %427 = vst [vmem:[#allocation2 + $0x148] sm:$0xff] %v241
    %428 = vst [vmem:[#allocation2 + $0x150] sm:$0xff] %v376
    %429 = vst [vmem:[#allocation2 + $0x158] sm:$0xff] %v378
    %430 = vst [vmem:[#allocation2 + $0x160] sm:$0xff] %v245
    %431 = vst [vmem:[#allocation2 + $0x168] sm:$0xff] %v247
    %432 = vst [vmem:[#allocation2 + $0x170] sm:$0xff] %v382
    %433 = vst [vmem:[#allocation2 + $0x178] sm:$0xff] %v384
    %v434 = vld [vmem:[#allocation4] sm:$0xff]
    %v435 = vld [vmem:[#allocation4 + $0x8] sm:$0xff]
    %v436 = vld [vmem:[#allocation4 + $0x10] sm:$0xff]
    %v437 = vld [vmem:[#allocation4 + $0x18] sm:$0xff]
    %v438 = vld [vmem:[#allocation4 + $0x20] sm:$0xff]
    %v439 = vld [vmem:[#allocation4 + $0x28] sm:$0xff]
    %v440 = vld [vmem:[#allocation4 + $0x30] sm:$0xff]
    %v441 = vld [vmem:[#allocation4 + $0x38] sm:$0xff]
    %v442 = vld [vmem:[#allocation4 + $0x40] sm:$0xff]
    %v443 = vld [vmem:[#allocation4 + $0x48] sm:$0xff]
    %v444 = vld [vmem:[#allocation4 + $0x50] sm:$0xff]
    %v445 = vld [vmem:[#allocation4 + $0x58] sm:$0xff]
    %v446 = vld [vmem:[#allocation4 + $0x60] sm:$0xff]
    %v447 = vld [vmem:[#allocation4 + $0x68] sm:$0xff]
    %v448 = vld [vmem:[#allocation4 + $0x70] sm:$0xff]
    %v449 = vld [vmem:[#allocation4 + $0x78] sm:$0xff]
    %v450 = vld [vmem:[#allocation4 + $0x80] sm:$0xff]
    %v451 = vld [vmem:[#allocation4 + $0x88] sm:$0xff]
    %v452 = vld [vmem:[#allocation4 + $0x90] sm:$0xff]
    %v453 = vld [vmem:[#allocation4 + $0x98] sm:$0xff]
    %v454 = vld [vmem:[#allocation4 + $0xa0] sm:$0xff]
    %v455 = vld [vmem:[#allocation4 + $0xa8] sm:$0xff]
    %v456 = vld [vmem:[#allocation4 + $0xb0] sm:$0xff]
    %v457 = vld [vmem:[#allocation4 + $0xb8] sm:$0xff]
    %v458 = vld [vmem:[#allocation4 + $0xc0] sm:$0xff]
    %v459 = vld [vmem:[#allocation4 + $0xc8] sm:$0xff]
    %v460 = vld [vmem:[#allocation4 + $0xd0] sm:$0xff]
    %v461 = vld [vmem:[#allocation4 + $0xd8] sm:$0xff]
    %v462 = vld [vmem:[#allocation4 + $0xe0] sm:$0xff]
    %v463 = vld [vmem:[#allocation4 + $0xe8] sm:$0xff]
    %v464 = vld [vmem:[#allocation4 + $0xf0] sm:$0xff]
    %v465 = vld [vmem:[#allocation4 + $0xf8] sm:$0xff]
    %v466 = vld [vmem:[#allocation4 + $0x100] sm:$0xff]
    %v467 = vld [vmem:[#allocation4 + $0x108] sm:$0xff]
    %v468 = vld [vmem:[#allocation4 + $0x110] sm:$0xff]
    %v469 = vld [vmem:[#allocation4 + $0x118] sm:$0xff]
    %v470 = vld [vmem:[#allocation4 + $0x120] sm:$0xff]
    %v471 = vld [vmem:[#allocation4 + $0x128] sm:$0xff]
    %v472 = vld [vmem:[#allocation4 + $0x130] sm:$0xff]
    %v473 = vld [vmem:[#allocation4 + $0x138] sm:$0xff]
    %v474 = vld [vmem:[#allocation4 + $0x140] sm:$0xff]
    %v475 = vld [vmem:[#allocation4 + $0x148] sm:$0xff]
    %v476 = vld [vmem:[#allocation4 + $0x150] sm:$0xff]
    %v477 = vld [vmem:[#allocation4 + $0x158] sm:$0xff]
    %v478 = vld [vmem:[#allocation4 + $0x160] sm:$0xff]
    %v479 = vld [vmem:[#allocation4 + $0x168] sm:$0xff]
    %v480 = vld [vmem:[#allocation4 + $0x170] sm:$0xff]
    %v481 = vld [vmem:[#allocation4 + $0x178] sm:$0xff]
    %v482 = vld [vmem:[#allocation4 + $0x180] sm:$0xff]
    %v483 = vld [vmem:[#allocation4 + $0x188] sm:$0xff]
    %v484 = vld [vmem:[#allocation4 + $0x190] sm:$0xff]
    %v485 = vld [vmem:[#allocation4 + $0x198] sm:$0xff]
    %v486 = vld [vmem:[#allocation4 + $0x1a0] sm:$0xff]
    %v487 = vld [vmem:[#allocation4 + $0x1a8] sm:$0xff]
    %v488 = vld [vmem:[#allocation4 + $0x1b0] sm:$0xff]
    %v489 = vld [vmem:[#allocation4 + $0x1b8] sm:$0xff]
    %v490 = vld [vmem:[#allocation4 + $0x1c0] sm:$0xff]
    %v491 = vld [vmem:[#allocation4 + $0x1c8] sm:$0xff]
    %v492 = vld [vmem:[#allocation4 + $0x1d0] sm:$0xff]
    %v493 = vld [vmem:[#allocation4 + $0x1d8] sm:$0xff]
    %v494 = vld [vmem:[#allocation4 + $0x1e0] sm:$0xff]
    %v495 = vld [vmem:[#allocation4 + $0x1e8] sm:$0xff]
    %v496 = vld [vmem:[#allocation4 + $0x1f0] sm:$0xff]
    %v497 = vld [vmem:[#allocation4 + $0x1f8] sm:$0xff]
    %v498 = vld [vmem:[#allocation2] sm:$0xff]
    %v499 = vld [vmem:[#allocation2 + $0x8] sm:$0xff]
    %v500 = vld [vmem:[#allocation2 + $0x10] sm:$0xff]
    %v501 = vld [vmem:[#allocation2 + $0x18] sm:$0xff]
    %502 = vmatprep.subr.mxu0 %v435
    %503 = vmatpush1.msra.mxu0 %v434
    %504 = vmatprep.subr.mxu0 %v439
    %505 = vmatpush1.msra.mxu0 %v438
    %506 = vmatprep.subr.mxu0 %v443
    %507 = vmatpush1.msra.mxu0 %v442
    %508 = vmatprep.subr.mxu0 %v447
    %509 = vmatpush1.msra.mxu0 %v446
    %510 = vmatprep.subr.mxu0 %v451
    %511 = vmatpush1.msra.mxu0 %v450
    %512 = vmatprep.subr.mxu0 %v455
    %513 = vmatpush1.msra.mxu0 %v454
    %514 = vmatprep.subr.mxu0 %v459
    %515 = vmatpush1.msra.mxu0 %v458
    %516 = vmatprep.subr.mxu0 %v463
    %517 = vmatpush1.msra.mxu0 %v462
    %518 = vmatprep.subr.mxu0 %v467
    %519 = vmatpush1.msra.mxu0 %v466
    %520 = vmatprep.subr.mxu0 %v471
    %521 = vmatpush1.msra.mxu0 %v470
    %522 = vmatprep.subr.mxu0 %v475
    %523 = vmatpush1.msra.mxu0 %v474
    %524 = vmatprep.subr.mxu0 %v479
    %525 = vmatpush1.msra.mxu0 %v478
    %526 = vmatprep.subr.mxu0 %v483
    %527 = vmatpush1.msra.mxu0 %v482
    %528 = vmatprep.subr.mxu0 %v487
    %529 = vmatpush1.msra.mxu0 %v486
    %530 = vmatprep.subr.mxu0 %v491
    %531 = vmatpush1.msra.mxu0 %v490
    %532 = vmatprep.subr.mxu0 %v495
    %533 = vmatpush1.msra.mxu0 %v494
    %534 = vmatprep.subr.mxu0 0.0
    %535 = vmatpush1.msra.mxu0 0.0
    %536 = vmatprep.subr.mxu0 0.0
    %537 = vmatpush1.msra.mxu0 0.0
    %538 = vmatprep.subr.mxu0 0.0
    %539 = vmatpush1.msra.mxu0 0.0
    %540 = vmatprep.subr.mxu0 0.0
    %541 = vmatpush1.msra.mxu0 0.0
    %542 = vmatprep.subr.mxu0 0.0
    %543 = vmatpush1.msra.mxu0 0.0
    %544 = vmatprep.subr.mxu0 0.0
    %545 = vmatpush1.msra.mxu0 0.0
    %546 = vmatprep.subr.mxu0 0.0
    %547 = vmatpush1.msra.mxu0 0.0
    %548 = vmatprep.subr.mxu0 0.0
    %549 = vmatpush1.msra.mxu0 0.0
    %550 = vmatprep.subr.mxu0 0.0
    %551 = vmatpush1.msra.mxu0 0.0
    %552 = vmatprep.subr.mxu0 0.0
    %553 = vmatpush1.msra.mxu0 0.0
    %554 = vmatprep.subr.mxu0 0.0
    %555 = vmatpush1.msra.mxu0 0.0
    %556 = vmatprep.subr.mxu0 0.0
    %557 = vmatpush1.msra.mxu0 0.0
    %558 = vmatprep.subr.mxu0 0.0
    %559 = vmatpush1.msra.mxu0 0.0
    %560 = vmatprep.subr.mxu0 0.0
    %561 = vmatpush1.msra.mxu0 0.0
    %562 = vmatprep.subr.mxu0 0.0
    %563 = vmatpush1.msra.mxu0 0.0
    %564 = vmatprep.subr.mxu0 0.0
    %565 = vmatpush1.msra.mxu0 0.0
    %566 = vmatprep.mubr.f32.mxu0 0.0
    %567 = vmatmul.mubr.f32.gmra.mrb[0].mxu0 0.0
    %v568 = vpop.f32.mrb[0].mxu0
    %v569 = vadd.f32 0.0, %v568
    %v570 = vpop.f32.mrb[0].mxu0
    %v571 = vadd.f32 0.0, %v570
    %572 = vdwg.mxu0
    %573 = vmatprep.subr.mxu0 %v437
    %574 = vmatpush1.msra.mxu0 %v436
    %575 = vmatprep.subr.mxu0 %v441
    %576 = vmatpush1.msra.mxu0 %v440
    %577 = vmatprep.subr.mxu0 %v445
    %578 = vmatpush1.msra.mxu0 %v444
    %579 = vmatprep.subr.mxu0 %v449
    %580 = vmatpush1.msra.mxu0 %v448
    %581 = vmatprep.subr.mxu0 %v453
    %582 = vmatpush1.msra.mxu0 %v452
    %583 = vmatprep.subr.mxu0 %v457
    %584 = vmatpush1.msra.mxu0 %v456
    %585 = vmatprep.subr.mxu0 %v461
    %586 = vmatpush1.msra.mxu0 %v460
    %587 = vmatprep.subr.mxu0 %v465
    %588 = vmatpush1.msra.mxu0 %v464
    %589 = vmatprep.subr.mxu0 %v469
    %590 = vmatpush1.msra.mxu0 %v468
    %591 = vmatprep.subr.mxu0 %v473
    %592 = vmatpush1.msra.mxu0 %v472
    %593 = vmatprep.subr.mxu0 %v477
    %594 = vmatpush1.msra.mxu0 %v476
    %595 = vmatprep.subr.mxu0 %v481
    %596 = vmatpush1.msra.mxu0 %v480
    %597 = vmatprep.subr.mxu0 %v485
    %598 = vmatpush1.msra.mxu0 %v484
    %599 = vmatprep.subr.mxu0 %v489
    %600 = vmatpush1.msra.mxu0 %v488
    %601 = vmatprep.subr.mxu0 %v493
    %602 = vmatpush1.msra.mxu0 %v492
    %603 = vmatprep.subr.mxu0 %v497
    %604 = vmatpush1.msra.mxu0 %v496
    %605 = vmatprep.subr.mxu0 0.0
    %606 = vmatpush1.msra.mxu0 0.0
    %607 = vmatprep.subr.mxu0 0.0
    %608 = vmatpush1.msra.mxu0 0.0
    %609 = vmatprep.subr.mxu0 0.0
    %610 = vmatpush1.msra.mxu0 0.0
    %611 = vmatprep.subr.mxu0 0.0
    %612 = vmatpush1.msra.mxu0 0.0
    %613 = vmatprep.subr.mxu0 0.0
    %614 = vmatpush1.msra.mxu0 0.0
    %615 = vmatprep.subr.mxu0 0.0
    %616 = vmatpush1.msra.mxu0 0.0
    %617 = vmatprep.subr.mxu0 0.0
    %618 = vmatpush1.msra.mxu0 0.0
    %619 = vmatprep.subr.mxu0 0.0
    %620 = vmatpush1.msra.mxu0 0.0
    %621 = vmatprep.subr.mxu0 0.0
    %622 = vmatpush1.msra.mxu0 0.0
    %623 = vmatprep.subr.mxu0 0.0
    %624 = vmatpush1.msra.mxu0 0.0
    %625 = vmatprep.subr.mxu0 0.0
    %626 = vmatpush1.msra.mxu0 0.0
    %627 = vmatprep.subr.mxu0 0.0
    %628 = vmatpush1.msra.mxu0 0.0
    %629 = vmatprep.subr.mxu0 0.0
    %630 = vmatpush1.msra.mxu0 0.0
    %631 = vmatprep.subr.mxu0 0.0
    %632 = vmatpush1.msra.mxu0 0.0
    %633 = vmatprep.subr.mxu0 0.0
    %634 = vmatpush1.msra.mxu0 0.0
    %635 = vmatprep.subr.mxu0 0.0
    %636 = vmatpush1.msra.mxu0 0.0
    %637 = vmatprep.mubr.f32.mxu0 0.0
    %638 = vmatmul.mubr.f32.gmra.mrb[0].mxu0 0.0
    %v639 = vpop.f32.mrb[0].mxu0
    %v640 = vadd.f32 0.0, %v639
    %v641 = vpop.f32.mrb[0].mxu0
    %v642 = vadd.f32 0.0, %v641
    %643 = vdwg.mxu0
    %v644 = vadd.f32 %v498, %v569
    %v645 = vadd.f32 %v499, %v571
    %v646 = vadd.f32 %v500, %v640
    %v647 = vadd.f32 %v501, %v642
    %v648 = vxor.u32 %v644, 2147483648
    %v649 = vmul.f32 %v648, 1.442695
    %v650 = vpow.pop %v649
    %v651 = vadd.f32 %v650, 1.0
    %v652 = vrcp.pop %v651
    %v653 = vmul.f32 1.0, %v652
    %v654 = vxor.u32 %v645, 2147483648
    %v655 = vmul.f32 %v654, 1.442695
    %v656 = vpow.pop %v655
    %v657 = vadd.f32 %v656, 1.0
    %v658 = vrcp.pop %v657
    %v659 = vmul.f32 1.0, %v658
    %v660 = vtanh.pop %v646
    %v661 = vxor.u32 %v647, 2147483648
    %v662 = vmul.f32 %v661, 1.442695
    %v663 = vpow.pop %v662
    %v664 = vadd.f32 %v663, 1.0
    %v665 = vrcp.pop %v664
    %v666 = vmul.f32 1.0, %v665
    %v667 = vmul.f32 %v659, 0.0
    %v668 = vmul.f32 %v653, %v660
    %v669 = vadd.f32 %v667, %v668
    %v670 = vtanh.pop %v669
    %v671 = vmul.f32 %v666, %v670
    %s672 = scalar_lea.vmem [#allocation2], 32
    %v673 = vld [vmem:[%s672] sm:$0xff]
    %v674 = vld [vmem:[%s672 + $0x8] sm:$0xff]
    %v675 = vld [vmem:[%s672 + $0x10] sm:$0xff]
    %v676 = vld [vmem:[%s672 + $0x18] sm:$0xff]
    %677 = vmatprep.subr.mxu0 %v435
    %678 = vmatpush1.msra.mxu0 %v434
    %679 = vmatprep.subr.mxu0 %v439
    %680 = vmatpush1.msra.mxu0 %v438
    %681 = vmatprep.subr.mxu0 %v443
    %682 = vmatpush1.msra.mxu0 %v442
    %683 = vmatprep.subr.mxu0 %v447
    %684 = vmatpush1.msra.mxu0 %v446
    %685 = vmatprep.subr.mxu0 %v451
    %686 = vmatpush1.msra.mxu0 %v450
    %687 = vmatprep.subr.mxu0 %v455
    %688 = vmatpush1.msra.mxu0 %v454
    %689 = vmatprep.subr.mxu0 %v459
    %690 = vmatpush1.msra.mxu0 %v458
    %691 = vmatprep.subr.mxu0 %v463
    %692 = vmatpush1.msra.mxu0 %v462
    %693 = vmatprep.subr.mxu0 %v467
    %694 = vmatpush1.msra.mxu0 %v466
    %695 = vmatprep.subr.mxu0 %v471
    %696 = vmatpush1.msra.mxu0 %v470
    %697 = vmatprep.subr.mxu0 %v475
    %698 = vmatpush1.msra.mxu0 %v474
    %699 = vmatprep.subr.mxu0 %v479
    %700 = vmatpush1.msra.mxu0 %v478
    %701 = vmatprep.subr.mxu0 %v483
    %702 = vmatpush1.msra.mxu0 %v482
    %703 = vmatprep.subr.mxu0 %v487
    %704 = vmatpush1.msra.mxu0 %v486
    %705 = vmatprep.subr.mxu0 %v491
    %706 = vmatpush1.msra.mxu0 %v490
    %707 = vmatprep.subr.mxu0 %v495
    %708 = vmatpush1.msra.mxu0 %v494
    %709 = vmatprep.subr.mxu0 0.0
    %710 = vmatpush1.msra.mxu0 0.0
    %711 = vmatprep.subr.mxu0 0.0
    %712 = vmatpush1.msra.mxu0 0.0
    %713 = vmatprep.subr.mxu0 0.0
    %714 = vmatpush1.msra.mxu0 0.0
    %715 = vmatprep.subr.mxu0 0.0
    %716 = vmatpush1.msra.mxu0 0.0
    %717 = vmatprep.subr.mxu0 0.0
    %718 = vmatpush1.msra.mxu0 0.0
    %719 = vmatprep.subr.mxu0 0.0
    %720 = vmatpush1.msra.mxu0 0.0
    %721 = vmatprep.subr.mxu0 0.0
    %722 = vmatpush1.msra.mxu0 0.0
    %723 = vmatprep.subr.mxu0 0.0
    %724 = vmatpush1.msra.mxu0 0.0
    %725 = vmatprep.subr.mxu0 0.0
    %726 = vmatpush1.msra.mxu0 0.0
    %727 = vmatprep.subr.mxu0 0.0
    %728 = vmatpush1.msra.mxu0 0.0
    %729 = vmatprep.subr.mxu0 0.0
    %730 = vmatpush1.msra.mxu0 0.0
    %731 = vmatprep.subr.mxu0 0.0
    %732 = vmatpush1.msra.mxu0 0.0
    %733 = vmatprep.subr.mxu0 0.0
    %734 = vmatpush1.msra.mxu0 0.0
    %735 = vmatprep.subr.mxu0 0.0
    %736 = vmatpush1.msra.mxu0 0.0
    %737 = vmatprep.subr.mxu0 0.0
    %738 = vmatpush1.msra.mxu0 0.0
    %739 = vmatprep.subr.mxu0 0.0
    %740 = vmatpush1.msra.mxu0 0.0
    %741 = vmatprep.mubr.f32.mxu0 0.0
    %742 = vmatmul.mubr.f32.gmra.mrb[0].mxu0 %v671
    %v743 = vpop.f32.mrb[0].mxu0
    %v744 = vadd.f32 0.0, %v743
    %v745 = vpop.f32.mrb[0].mxu0
    %v746 = vadd.f32 0.0, %v745
    %747 = vdwg.mxu0
    %748 = vmatprep.subr.mxu0 %v437
    %749 = vmatpush1.msra.mxu0 %v436
    %750 = vmatprep.subr.mxu0 %v441
    %751 = vmatpush1.msra.mxu0 %v440
    %752 = vmatprep.subr.mxu0 %v445
    %753 = vmatpush1.msra.mxu0 %v444
    %754 = vmatprep.subr.mxu0 %v449
    %755 = vmatpush1.msra.mxu0 %v448
    %756 = vmatprep.subr.mxu0 %v453
    %757 = vmatpush1.msra.mxu0 %v452
    %758 = vmatprep.subr.mxu0 %v457
    %759 = vmatpush1.msra.mxu0 %v456
    %760 = vmatprep.subr.mxu0 %v461
    %761 = vmatpush1.msra.mxu0 %v460
    %762 = vmatprep.subr.mxu0 %v465
    %763 = vmatpush1.msra.mxu0 %v464
    %764 = vmatprep.subr.mxu0 %v469
    %765 = vmatpush1.msra.mxu0 %v468
    %766 = vmatprep.subr.mxu0 %v473
    %767 = vmatpush1.msra.mxu0 %v472
    %768 = vmatprep.subr.mxu0 %v477
    %769 = vmatpush1.msra.mxu0 %v476
    %770 = vmatprep.subr.mxu0 %v481
    %771 = vmatpush1.msra.mxu0 %v480
    %772 = vmatprep.subr.mxu0 %v485
    %773 = vmatpush1.msra.mxu0 %v484
    %774 = vmatprep.subr.mxu0 %v489
    %775 = vmatpush1.msra.mxu0 %v488
    %776 = vmatprep.subr.mxu0 %v493
    %777 = vmatpush1.msra.mxu0 %v492
    %778 = vmatprep.subr.mxu0 %v497
    %779 = vmatpush1.msra.mxu0 %v496
    %780 = vmatprep.subr.mxu0 0.0
    %781 = vmatpush1.msra.mxu0 0.0
    %782 = vmatprep.subr.mxu0 0.0
    %783 = vmatpush1.msra.mxu0 0.0
    %784 = vmatprep.subr.mxu0 0.0
    %785 = vmatpush1.msra.mxu0 0.0
    %786 = vmatprep.subr.mxu0 0.0
    %787 = vmatpush1.msra.mxu0 0.0
    %788 = vmatprep.subr.mxu0 0.0
    %789 = vmatpush1.msra.mxu0 0.0
    %790 = vmatprep.subr.mxu0 0.0
    %791 = vmatpush1.msra.mxu0 0.0
    %792 = vmatprep.subr.mxu0 0.0
    %793 = vmatpush1.msra.mxu0 0.0
    %794 = vmatprep.subr.mxu0 0.0
    %795 = vmatpush1.msra.mxu0 0.0
    %796 = vmatprep.subr.mxu0 0.0
    %797 = vmatpush1.msra.mxu0 0.0
    %798 = vmatprep.subr.mxu0 0.0
    %799 = vmatpush1.msra.mxu0 0.0
    %800 = vmatprep.subr.mxu0 0.0
    %801 = vmatpush1.msra.mxu0 0.0
    %802 = vmatprep.subr.mxu0 0.0
    %803 = vmatpush1.msra.mxu0 0.0
    %804 = vmatprep.subr.mxu0 0.0
    %805 = vmatpush1.msra.mxu0 0.0
    %806 = vmatprep.subr.mxu0 0.0
    %807 = vmatpush1.msra.mxu0 0.0
    %808 = vmatprep.subr.mxu0 0.0
    %809 = vmatpush1.msra.mxu0 0.0
    %810 = vmatprep.subr.mxu0 0.0
    %811 = vmatpush1.msra.mxu0 0.0
    %812 = vmatprep.mubr.f32.mxu0 0.0
    %813 = vmatmul.mubr.f32.gmra.mrb[0].mxu0 %v671
    %v814 = vpop.f32.mrb[0].mxu0
    %v815 = vadd.f32 0.0, %v814
    %v816 = vpop.f32.mrb[0].mxu0
    %v817 = vadd.f32 0.0, %v816
    %818 = vdwg.mxu0
    %v819 = vadd.f32 %v673, %v744
    %v820 = vadd.f32 %v674, %v746
    %v821 = vadd.f32 %v675, %v815
    %v822 = vadd.f32 %v676, %v817
    %v823 = vxor.u32 %v819, 2147483648
    %v824 = vmul.f32 %v823, 1.442695
    %v825 = vpow.pop %v824
    %v826 = vadd.f32 %v825, 1.0
    %v827 = vrcp.pop %v826
    %v828 = vmul.f32 1.0, %v827
    %v829 = vxor.u32 %v820, 2147483648
    %v830 = vmul.f32 %v829, 1.442695
    %v831 = vpow.pop %v830
    %v832 = vadd.f32 %v831, 1.0
    %v833 = vrcp.pop %v832
    %v834 = vmul.f32 1.0, %v833
    %v835 = vtanh.pop %v821
    %v836 = vxor.u32 %v822, 2147483648
    %v837 = vmul.f32 %v836, 1.442695
    %v838 = vpow.pop %v837
    %v839 = vadd.f32 %v838, 1.0
    %v840 = vrcp.pop %v839
    %v841 = vmul.f32 1.0, %v840
    %v842 = vmul.f32 %v834, %v669
    %v843 = vmul.f32 %v828, %v835
    %v844 = vadd.f32 %v842, %v843
    %v845 = vtanh.pop %v844
    %v846 = vmul.f32 %v841, %v845
    %s847 = scalar_lea.vmem [#allocation2], 64
    %v848 = vld [vmem:[%s847] sm:$0xff]
    %v849 = vld [vmem:[%s847 + $0x8] sm:$0xff]
    %v850 = vld [vmem:[%s847 + $0x10] sm:$0xff]
    %v851 = vld [vmem:[%s847 + $0x18] sm:$0xff]
    %852 = vmatprep.subr.mxu0 %v435
    %853 = vmatpush1.msra.mxu0 %v434
    %854 = vmatprep.subr.mxu0 %v439
    %855 = vmatpush1.msra.mxu0 %v438
    %856 = vmatprep.subr.mxu0 %v443
    %857 = vmatpush1.msra.mxu0 %v442
    %858 = vmatprep.subr.mxu0 %v447
    %859 = vmatpush1.msra.mxu0 %v446
    %860 = vmatprep.subr.mxu0 %v451
    %861 = vmatpush1.msra.mxu0 %v450
    %862 = vmatprep.subr.mxu0 %v455
    %863 = vmatpush1.msra.mxu0 %v454
    %864 = vmatprep.subr.mxu0 %v459
    %865 = vmatpush1.msra.mxu0 %v458
    %866 = vmatprep.subr.mxu0 %v463
    %867 = vmatpush1.msra.mxu0 %v462
    %868 = vmatprep.subr.mxu0 %v467
    %869 = vmatpush1.msra.mxu0 %v466
    %870 = vmatprep.subr.mxu0 %v471
    %871 = vmatpush1.msra.mxu0 %v470
    %872 = vmatprep.subr.mxu0 %v475
    %873 = vmatpush1.msra.mxu0 %v474
    %874 = vmatprep.subr.mxu0 %v479
    %875 = vmatpush1.msra.mxu0 %v478
    %876 = vmatprep.subr.mxu0 %v483
    %877 = vmatpush1.msra.mxu0 %v482
    %878 = vmatprep.subr.mxu0 %v487
    %879 = vmatpush1.msra.mxu0 %v486
    %880 = vmatprep.subr.mxu0 %v491
    %881 = vmatpush1.msra.mxu0 %v490
    %882 = vmatprep.subr.mxu0 %v495
    %883 = vmatpush1.msra.mxu0 %v494
    %884 = vmatprep.subr.mxu0 0.0
    %885 = vmatpush1.msra.mxu0 0.0
    %886 = vmatprep.subr.mxu0 0.0
    %887 = vmatpush1.msra.mxu0 0.0
    %888 = vmatprep.subr.mxu0 0.0
    %889 = vmatpush1.msra.mxu0 0.0
    %890 = vmatprep.subr.mxu0 0.0
    %891 = vmatpush1.msra.mxu0 0.0
    %892 = vmatprep.subr.mxu0 0.0
    %893 = vmatpush1.msra.mxu0 0.0
    %894 = vmatprep.subr.mxu0 0.0
    %895 = vmatpush1.msra.mxu0 0.0
    %896 = vmatprep.subr.mxu0 0.0
    %897 = vmatpush1.msra.mxu0 0.0
    %898 = vmatprep.subr.mxu0 0.0
    %899 = vmatpush1.msra.mxu0 0.0
    %900 = vmatprep.subr.mxu0 0.0
    %901 = vmatpush1.msra.mxu0 0.0
    %902 = vmatprep.subr.mxu0 0.0
    %903 = vmatpush1.msra.mxu0 0.0
    %904 = vmatprep.subr.mxu0 0.0
    %905 = vmatpush1.msra.mxu0 0.0
    %906 = vmatprep.subr.mxu0 0.0
    %907 = vmatpush1.msra.mxu0 0.0
    %908 = vmatprep.subr.mxu0 0.0
    %909 = vmatpush1.msra.mxu0 0.0
    %910 = vmatprep.subr.mxu0 0.0
    %911 = vmatpush1.msra.mxu0 0.0
    %912 = vmatprep.subr.mxu0 0.0
    %913 = vmatpush1.msra.mxu0 0.0
    %914 = vmatprep.subr.mxu0 0.0
    %915 = vmatpush1.msra.mxu0 0.0
    %916 = vmatprep.mubr.f32.mxu0 0.0
    %917 = vmatmul.mubr.f32.gmra.mrb[0].mxu0 %v846
    %v918 = vpop.f32.mrb[0].mxu0
    %v919 = vadd.f32 0.0, %v918
    %v920 = vpop.f32.mrb[0].mxu0
    %v921 = vadd.f32 0.0, %v920
    %922 = vdwg.mxu0
    %923 = vmatprep.subr.mxu0 %v437
    %924 = vmatpush1.msra.mxu0 %v436
    %925 = vmatprep.subr.mxu0 %v441
    %926 = vmatpush1.msra.mxu0 %v440
    %927 = vmatprep.subr.mxu0 %v445
    %928 = vmatpush1.msra.mxu0 %v444
    %929 = vmatprep.subr.mxu0 %v449
    %930 = vmatpush1.msra.mxu0 %v448
    %931 = vmatprep.subr.mxu0 %v453
    %932 = vmatpush1.msra.mxu0 %v452
    %933 = vmatprep.subr.mxu0 %v457
    %934 = vmatpush1.msra.mxu0 %v456
    %935 = vmatprep.subr.mxu0 %v461
    %936 = vmatpush1.msra.mxu0 %v460
    %937 = vmatprep.subr.mxu0 %v465
    %938 = vmatpush1.msra.mxu0 %v464
    %939 = vmatprep.subr.mxu0 %v469
    %940 = vmatpush1.msra.mxu0 %v468
    %941 = vmatprep.subr.mxu0 %v473
    %942 = vmatpush1.msra.mxu0 %v472
    %943 = vmatprep.subr.mxu0 %v477
    %944 = vmatpush1.msra.mxu0 %v476
    %945 = vmatprep.subr.mxu0 %v481
    %946 = vmatpush1.msra.mxu0 %v480
    %947 = vmatprep.subr.mxu0 %v485
    %948 = vmatpush1.msra.mxu0 %v484
    %949 = vmatprep.subr.mxu0 %v489
    %950 = vmatpush1.msra.mxu0 %v488
    %951 = vmatprep.subr.mxu0 %v493
    %952 = vmatpush1.msra.mxu0 %v492
    %953 = vmatprep.subr.mxu0 %v497
    %954 = vmatpush1.msra.mxu0 %v496
    %955 = vmatprep.subr.mxu0 0.0
    %956 = vmatpush1.msra.mxu0 0.0
    %957 = vmatprep.subr.mxu0 0.0
    %958 = vmatpush1.msra.mxu0 0.0
    %959 = vmatprep.subr.mxu0 0.0
    %960 = vmatpush1.msra.mxu0 0.0
    %961 = vmatprep.subr.mxu0 0.0
    %962 = vmatpush1.msra.mxu0 0.0
    %963 = vmatprep.subr.mxu0 0.0
    %964 = vmatpush1.msra.mxu0 0.0
    %965 = vmatprep.subr.mxu0 0.0
    %966 = vmatpush1.msra.mxu0 0.0
    %967 = vmatprep.subr.mxu0 0.0
    %968 = vmatpush1.msra.mxu0 0.0
    %969 = vmatprep.subr.mxu0 0.0
    %970 = vmatpush1.msra.mxu0 0.0
    %971 = vmatprep.subr.mxu0 0.0
    %972 = vmatpush1.msra.mxu0 0.0
    %973 = vmatprep.subr.mxu0 0.0
    %974 = vmatpush1.msra.mxu0 0.0
    %975 = vmatprep.subr.mxu0 0.0
    %976 = vmatpush1.msra.mxu0 0.0
    %977 = vmatprep.subr.mxu0 0.0
    %978 = vmatpush1.msra.mxu0 0.0
    %979 = vmatprep.subr.mxu0 0.0
    %980 = vmatpush1.msra.mxu0 0.0
    %981 = vmatprep.subr.mxu0 0.0
    %982 = vmatpush1.msra.mxu0 0.0
    %983 = vmatprep.subr.mxu0 0.0
    %984 = vmatpush1.msra.mxu0 0.0
    %985 = vmatprep.subr.mxu0 0.0
    %986 = vmatpush1.msra.mxu0 0.0
    %987 = vmatprep.mubr.f32.mxu0 0.0
    %988 = vmatmul.mubr.f32.gmra.mrb[0].mxu0 %v846
    %v989 = vpop.f32.mrb[0].mxu0
    %v990 = vadd.f32 0.0, %v989
    %v991 = vpop.f32.mrb[0].mxu0
    %v992 = vadd.f32 0.0, %v991
    %993 = vdwg.mxu0
    %v994 = vadd.f32 %v848, %v919
    %v995 = vadd.f32 %v849, %v921
    %v996 = vadd.f32 %v850, %v990
    %v997 = vadd.f32 %v851, %v992
    %v998 = vxor.u32 %v994, 2147483648
    %v999 = vmul.f32 %v998, 1.442695
    %v1000 = vpow.pop %v999
    %v1001 = vadd.f32 %v1000, 1.0
    %v1002 = vrcp.pop %v1001
    %v1003 = vmul.f32 1.0, %v1002
    %v1004 = vxor.u32 %v995, 2147483648
    %v1005 = vmul.f32 %v1004, 1.442695
    %v1006 = vpow.pop %v1005
    %v1007 = vadd.f32 %v1006, 1.0
    %v1008 = vrcp.pop %v1007
    %v1009 = vmul.f32 1.0, %v1008
    %v1010 = vtanh.pop %v996
    %v1011 = vxor.u32 %v997, 2147483648
    %v1012 = vmul.f32 %v1011, 1.442695
    %v1013 = vpow.pop %v1012
    %v1014 = vadd.f32 %v1013, 1.0
    %v1015 = vrcp.pop %v1014
    %v1016 = vmul.f32 1.0, %v1015
    %v1017 = vmul.f32 %v1009, %v844
    %v1018 = vmul.f32 %v1003, %v1010
    %v1019 = vadd.f32 %v1017, %v1018
    %v1020 = vtanh.pop %v1019
    %v1021 = vmul.f32 %v1016, %v1020
    %s1022 = scalar_lea.vmem [#allocation2], 96
    %v1023 = vld [vmem:[%s1022] sm:$0xff]
    %v1024 = vld [vmem:[%s1022 + $0x8] sm:$0xff]
    %v1025 = vld [vmem:[%s1022 + $0x10] sm:$0xff]
    %v1026 = vld [vmem:[%s1022 + $0x18] sm:$0xff]
    %1027 = vmatprep.subr.mxu0 %v435
    %1028 = vmatpush1.msra.mxu0 %v434
    %1029 = vmatprep.subr.mxu0 %v439
    %1030 = vmatpush1.msra.mxu0 %v438
    %1031 = vmatprep.subr.mxu0 %v443
    %1032 = vmatpush1.msra.mxu0 %v442
    %1033 = vmatprep.subr.mxu0 %v447
    %1034 = vmatpush1.msra.mxu0 %v446
    %1035 = vmatprep.subr.mxu0 %v451
    %1036 = vmatpush1.msra.mxu0 %v450
    %1037 = vmatprep.subr.mxu0 %v455
    %1038 = vmatpush1.msra.mxu0 %v454
    %1039 = vmatprep.subr.mxu0 %v459
    %1040 = vmatpush1.msra.mxu0 %v458
    %1041 = vmatprep.subr.mxu0 %v463
    %1042 = vmatpush1.msra.mxu0 %v462
    %1043 = vmatprep.subr.mxu0 %v467
    %1044 = vmatpush1.msra.mxu0 %v466
    %1045 = vmatprep.subr.mxu0 %v471
    %1046 = vmatpush1.msra.mxu0 %v470
    %1047 = vmatprep.subr.mxu0 %v475
    %1048 = vmatpush1.msra.mxu0 %v474
    %1049 = vmatprep.subr.mxu0 %v479
    %1050 = vmatpush1.msra.mxu0 %v478
    %1051 = vmatprep.subr.mxu0 %v483
    %1052 = vmatpush1.msra.mxu0 %v482
    %1053 = vmatprep.subr.mxu0 %v487
    %1054 = vmatpush1.msra.mxu0 %v486
    %1055 = vmatprep.subr.mxu0 %v491
    %1056 = vmatpush1.msra.mxu0 %v490
    %1057 = vmatprep.subr.mxu0 %v495
    %1058 = vmatpush1.msra.mxu0 %v494
    %1059 = vmatprep.subr.mxu0 0.0
    %1060 = vmatpush1.msra.mxu0 0.0
    %1061 = vmatprep.subr.mxu0 0.0
    %1062 = vmatpush1.msra.mxu0 0.0
    %1063 = vmatprep.subr.mxu0 0.0
    %1064 = vmatpush1.msra.mxu0 0.0
    %1065 = vmatprep.subr.mxu0 0.0
    %1066 = vmatpush1.msra.mxu0 0.0
    %1067 = vmatprep.subr.mxu0 0.0
    %1068 = vmatpush1.msra.mxu0 0.0
    %1069 = vmatprep.subr.mxu0 0.0
    %1070 = vmatpush1.msra.mxu0 0.0
    %1071 = vmatprep.subr.mxu0 0.0
    %1072 = vmatpush1.msra.mxu0 0.0
    %1073 = vmatprep.subr.mxu0 0.0
    %1074 = vmatpush1.msra.mxu0 0.0
    %1075 = vmatprep.subr.mxu0 0.0
    %1076 = vmatpush1.msra.mxu0 0.0
    %1077 = vmatprep.subr.mxu0 0.0
    %1078 = vmatpush1.msra.mxu0 0.0
    %1079 = vmatprep.subr.mxu0 0.0
    %1080 = vmatpush1.msra.mxu0 0.0
    %1081 = vmatprep.subr.mxu0 0.0
    %1082 = vmatpush1.msra.mxu0 0.0
    %1083 = vmatprep.subr.mxu0 0.0
    %1084 = vmatpush1.msra.mxu0 0.0
    %1085 = vmatprep.subr.mxu0 0.0
    %1086 = vmatpush1.msra.mxu0 0.0
    %1087 = vmatprep.subr.mxu0 0.0
    %1088 = vmatpush1.msra.mxu0 0.0
    %1089 = vmatprep.subr.mxu0 0.0
    %1090 = vmatpush1.msra.mxu0 0.0
    %1091 = vmatprep.mubr.f32.mxu0 0.0
    %1092 = vmatmul.mubr.f32.gmra.mrb[0].mxu0 %v1021
    %v1093 = vpop.f32.mrb[0].mxu0
    %v1094 = vadd.f32 0.0, %v1093
    %v1095 = vpop.f32.mrb[0].mxu0
    %v1096 = vadd.f32 0.0, %v1095
    %1097 = vdwg.mxu0
    %1098 = vmatprep.subr.mxu0 %v437
    %1099 = vmatpush1.msra.mxu0 %v436
    %1100 = vmatprep.subr.mxu0 %v441
    %1101 = vmatpush1.msra.mxu0 %v440
    %1102 = vmatprep.subr.mxu0 %v445
    %1103 = vmatpush1.msra.mxu0 %v444
    %1104 = vmatprep.subr.mxu0 %v449
    %1105 = vmatpush1.msra.mxu0 %v448
    %1106 = vmatprep.subr.mxu0 %v453
    %1107 = vmatpush1.msra.mxu0 %v452
    %1108 = vmatprep.subr.mxu0 %v457
    %1109 = vmatpush1.msra.mxu0 %v456
    %1110 = vmatprep.subr.mxu0 %v461
    %1111 = vmatpush1.msra.mxu0 %v460
    %1112 = vmatprep.subr.mxu0 %v465
    %1113 = vmatpush1.msra.mxu0 %v464
    %1114 = vmatprep.subr.mxu0 %v469
    %1115 = vmatpush1.msra.mxu0 %v468
    %1116 = vmatprep.subr.mxu0 %v473
    %1117 = vmatpush1.msra.mxu0 %v472
    %1118 = vmatprep.subr.mxu0 %v477
    %1119 = vmatpush1.msra.mxu0 %v476
    %1120 = vmatprep.subr.mxu0 %v481
    %1121 = vmatpush1.msra.mxu0 %v480
    %1122 = vmatprep.subr.mxu0 %v485
    %1123 = vmatpush1.msra.mxu0 %v484
    %1124 = vmatprep.subr.mxu0 %v489
    %1125 = vmatpush1.msra.mxu0 %v488
    %1126 = vmatprep.subr.mxu0 %v493
    %1127 = vmatpush1.msra.mxu0 %v492
    %1128 = vmatprep.subr.mxu0 %v497
    %1129 = vmatpush1.msra.mxu0 %v496
    %1130 = vmatprep.subr.mxu0 0.0
    %1131 = vmatpush1.msra.mxu0 0.0
    %1132 = vmatprep.subr.mxu0 0.0
    %1133 = vmatpush1.msra.mxu0 0.0
    %1134 = vmatprep.subr.mxu0 0.0
    %1135 = vmatpush1.msra.mxu0 0.0
    %1136 = vmatprep.subr.mxu0 0.0
    %1137 = vmatpush1.msra.mxu0 0.0
    %1138 = vmatprep.subr.mxu0 0.0
    %1139 = vmatpush1.msra.mxu0 0.0
    %1140 = vmatprep.subr.mxu0 0.0
    %1141 = vmatpush1.msra.mxu0 0.0
    %1142 = vmatprep.subr.mxu0 0.0
    %1143 = vmatpush1.msra.mxu0 0.0
    %1144 = vmatprep.subr.mxu0 0.0
    %1145 = vmatpush1.msra.mxu0 0.0
    %1146 = vmatprep.subr.mxu0 0.0
    %1147 = vmatpush1.msra.mxu0 0.0
    %1148 = vmatprep.subr.mxu0 0.0
    %1149 = vmatpush1.msra.mxu0 0.0
    %1150 = vmatprep.subr.mxu0 0.0
    %1151 = vmatpush1.msra.mxu0 0.0
    %1152 = vmatprep.subr.mxu0 0.0
    %1153 = vmatpush1.msra.mxu0 0.0
    %1154 = vmatprep.subr.mxu0 0.0
    %1155 = vmatpush1.msra.mxu0 0.0
    %1156 = vmatprep.subr.mxu0 0.0
    %1157 = vmatpush1.msra.mxu0 0.0
    %1158 = vmatprep.subr.mxu0 0.0
    %1159 = vmatpush1.msra.mxu0 0.0
    %1160 = vmatprep.subr.mxu0 0.0
    %1161 = vmatpush1.msra.mxu0 0.0
    %1162 = vmatprep.mubr.f32.mxu0 0.0
    %1163 = vmatmul.mubr.f32.gmra.mrb[0].mxu0 %v1021
    %v1164 = vpop.f32.mrb[0].mxu0
    %v1165 = vadd.f32 0.0, %v1164
    %v1166 = vpop.f32.mrb[0].mxu0
    %v1167 = vadd.f32 0.0, %v1166
    %1168 = vdwg.mxu0
    %v1169 = vadd.f32 %v1023, %v1094
    %v1170 = vadd.f32 %v1024, %v1096
    %v1171 = vadd.f32 %v1025, %v1165
    %v1172 = vadd.f32 %v1026, %v1167
    %v1173 = vxor.u32 %v1169, 2147483648
    %v1174 = vmul.f32 %v1173, 1.442695
    %v1175 = vpow.pop %v1174
    %v1176 = vadd.f32 %v1175, 1.0
    %v1177 = vrcp.pop %v1176
    %v1178 = vmul.f32 1.0, %v1177
    %v1179 = vxor.u32 %v1170, 2147483648
    %v1180 = vmul.f32 %v1179, 1.442695
    %v1181 = vpow.pop %v1180
    %v1182 = vadd.f32 %v1181, 1.0
    %v1183 = vrcp.pop %v1182
    %v1184 = vmul.f32 1.0, %v1183
    %v1185 = vtanh.pop %v1171
    %v1186 = vxor.u32 %v1172, 2147483648
    %v1187 = vmul.f32 %v1186, 1.442695
    %v1188 = vpow.pop %v1187
    %v1189 = vadd.f32 %v1188, 1.0
    %v1190 = vrcp.pop %v1189
    %v1191 = vmul.f32 1.0, %v1190
    %v1192 = vmul.f32 %v1184, %v1019
    %v1193 = vmul.f32 %v1178, %v1185
    %v1194 = vadd.f32 %v1192, %v1193
    %v1195 = vtanh.pop %v1194
    %v1196 = vmul.f32 %v1191, %v1195
    %s1197 = scalar_lea.vmem [#allocation2], 128
    %v1198 = vld [vmem:[%s1197] sm:$0xff]
    %v1199 = vld [vmem:[%s1197 + $0x8] sm:$0xff]
    %v1200 = vld [vmem:[%s1197 + $0x10] sm:$0xff]
    %v1201 = vld [vmem:[%s1197 + $0x18] sm:$0xff]
    %1202 = vmatprep.subr.mxu0 %v435
    %1203 = vmatpush1.msra.mxu0 %v434
    %1204 = vmatprep.subr.mxu0 %v439
    %1205 = vmatpush1.msra.mxu0 %v438
    %1206 = vmatprep.subr.mxu0 %v443
    %1207 = vmatpush1.msra.mxu0 %v442
    %1208 = vmatprep.subr.mxu0 %v447
    %1209 = vmatpush1.msra.mxu0 %v446
    %1210 = vmatprep.subr.mxu0 %v451
    %1211 = vmatpush1.msra.mxu0 %v450
    %1212 = vmatprep.subr.mxu0 %v455
    %1213 = vmatpush1.msra.mxu0 %v454
    %1214 = vmatprep.subr.mxu0 %v459
    %1215 = vmatpush1.msra.mxu0 %v458
    %1216 = vmatprep.subr.mxu0 %v463
    %1217 = vmatpush1.msra.mxu0 %v462
    %1218 = vmatprep.subr.mxu0 %v467
    %1219 = vmatpush1.msra.mxu0 %v466
    %1220 = vmatprep.subr.mxu0 %v471
    %1221 = vmatpush1.msra.mxu0 %v470
    %1222 = vmatprep.subr.mxu0 %v475
    %1223 = vmatpush1.msra.mxu0 %v474
    %1224 = vmatprep.subr.mxu0 %v479
    %1225 = vmatpush1.msra.mxu0 %v478
    %1226 = vmatprep.subr.mxu0 %v483
    %1227 = vmatpush1.msra.mxu0 %v482
    %1228 = vmatprep.subr.mxu0 %v487
    %1229 = vmatpush1.msra.mxu0 %v486
    %1230 = vmatprep.subr.mxu0 %v491
    %1231 = vmatpush1.msra.mxu0 %v490
    %1232 = vmatprep.subr.mxu0 %v495
    %1233 = vmatpush1.msra.mxu0 %v494
    %1234 = vmatprep.subr.mxu0 0.0
    %1235 = vmatpush1.msra.mxu0 0.0
    %1236 = vmatprep.subr.mxu0 0.0
    %1237 = vmatpush1.msra.mxu0 0.0
    %1238 = vmatprep.subr.mxu0 0.0
    %1239 = vmatpush1.msra.mxu0 0.0
    %1240 = vmatprep.subr.mxu0 0.0
    %1241 = vmatpush1.msra.mxu0 0.0
    %1242 = vmatprep.subr.mxu0 0.0
    %1243 = vmatpush1.msra.mxu0 0.0
    %1244 = vmatprep.subr.mxu0 0.0
    %1245 = vmatpush1.msra.mxu0 0.0
    %1246 = vmatprep.subr.mxu0 0.0
    %1247 = vmatpush1.msra.mxu0 0.0
    %1248 = vmatprep.subr.mxu0 0.0
    %1249 = vmatpush1.msra.mxu0 0.0
    %1250 = vmatprep.subr.mxu0 0.0
    %1251 = vmatpush1.msra.mxu0 0.0
    %1252 = vmatprep.subr.mxu0 0.0
    %1253 = vmatpush1.msra.mxu0 0.0
    %1254 = vmatprep.subr.mxu0 0.0
    %1255 = vmatpush1.msra.mxu0 0.0
    %1256 = vmatprep.subr.mxu0 0.0
    %1257 = vmatpush1.msra.mxu0 0.0
    %1258 = vmatprep.subr.mxu0 0.0
    %1259 = vmatpush1.msra.mxu0 0.0
    %1260 = vmatprep.subr.mxu0 0.0
    %1261 = vmatpush1.msra.mxu0 0.0
    %1262 = vmatprep.subr.mxu0 0.0
    %1263 = vmatpush1.msra.mxu0 0.0
    %1264 = vmatprep.subr.mxu0 0.0
    %1265 = vmatpush1.msra.mxu0 0.0
    %1266 = vmatprep.mubr.f32.mxu0 0.0
    %1267 = vmatmul.mubr.f32.gmra.mrb[0].mxu0 %v1196
    %v1268 = vpop.f32.mrb[0].mxu0
    %v1269 = vadd.f32 0.0, %v1268
    %v1270 = vpop.f32.mrb[0].mxu0
    %v1271 = vadd.f32 0.0, %v1270
    %1272 = vdwg.mxu0
    %1273 = vmatprep.subr.mxu0 %v437
    %1274 = vmatpush1.msra.mxu0 %v436
    %1275 = vmatprep.subr.mxu0 %v441
    %1276 = vmatpush1.msra.mxu0 %v440
    %1277 = vmatprep.subr.mxu0 %v445
    %1278 = vmatpush1.msra.mxu0 %v444
    %1279 = vmatprep.subr.mxu0 %v449
    %1280 = vmatpush1.msra.mxu0 %v448
    %1281 = vmatprep.subr.mxu0 %v453
    %1282 = vmatpush1.msra.mxu0 %v452
    %1283 = vmatprep.subr.mxu0 %v457
    %1284 = vmatpush1.msra.mxu0 %v456
    %1285 = vmatprep.subr.mxu0 %v461
    %1286 = vmatpush1.msra.mxu0 %v460
    %1287 = vmatprep.subr.mxu0 %v465
    %1288 = vmatpush1.msra.mxu0 %v464
    %1289 = vmatprep.subr.mxu0 %v469
    %1290 = vmatpush1.msra.mxu0 %v468
    %1291 = vmatprep.subr.mxu0 %v473
    %1292 = vmatpush1.msra.mxu0 %v472
    %1293 = vmatprep.subr.mxu0 %v477
    %1294 = vmatpush1.msra.mxu0 %v476
    %1295 = vmatprep.subr.mxu0 %v481
    %1296 = vmatpush1.msra.mxu0 %v480
    %1297 = vmatprep.subr.mxu0 %v485
    %1298 = vmatpush1.msra.mxu0 %v484
    %1299 = vmatprep.subr.mxu0 %v489
    %1300 = vmatpush1.msra.mxu0 %v488
    %1301 = vmatprep.subr.mxu0 %v493
    %1302 = vmatpush1.msra.mxu0 %v492
    %1303 = vmatprep.subr.mxu0 %v497
    %1304 = vmatpush1.msra.mxu0 %v496
    %1305 = vmatprep.subr.mxu0 0.0
    %1306 = vmatpush1.msra.mxu0 0.0
    %1307 = vmatprep.subr.mxu0 0.0
    %1308 = vmatpush1.msra.mxu0 0.0
    %1309 = vmatprep.subr.mxu0 0.0
    %1310 = vmatpush1.msra.mxu0 0.0
    %1311 = vmatprep.subr.mxu0 0.0
    %1312 = vmatpush1.msra.mxu0 0.0
    %1313 = vmatprep.subr.mxu0 0.0
    %1314 = vmatpush1.msra.mxu0 0.0
    %1315 = vmatprep.subr.mxu0 0.0
    %1316 = vmatpush1.msra.mxu0 0.0
    %1317 = vmatprep.subr.mxu0 0.0
    %1318 = vmatpush1.msra.mxu0 0.0
    %1319 = vmatprep.subr.mxu0 0.0
    %1320 = vmatpush1.msra.mxu0 0.0
    %1321 = vmatprep.subr.mxu0 0.0
    %1322 = vmatpush1.msra.mxu0 0.0
    %1323 = vmatprep.subr.mxu0 0.0
    %1324 = vmatpush1.msra.mxu0 0.0
    %1325 = vmatprep.subr.mxu0 0.0
    %1326 = vmatpush1.msra.mxu0 0.0
    %1327 = vmatprep.subr.mxu0 0.0
    %1328 = vmatpush1.msra.mxu0 0.0
    %1329 = vmatprep.subr.mxu0 0.0
    %1330 = vmatpush1.msra.mxu0 0.0
    %1331 = vmatprep.subr.mxu0 0.0
    %1332 = vmatpush1.msra.mxu0 0.0
    %1333 = vmatprep.subr.mxu0 0.0
    %1334 = vmatpush1.msra.mxu0 0.0
    %1335 = vmatprep.subr.mxu0 0.0
    %1336 = vmatpush1.msra.mxu0 0.0
    %1337 = vmatprep.mubr.f32.mxu0 0.0
    %1338 = vmatmul.mubr.f32.gmra.mrb[0].mxu0 %v1196
    %v1339 = vpop.f32.mrb[0].mxu0
    %v1340 = vadd.f32 0.0, %v1339
    %v1341 = vpop.f32.mrb[0].mxu0
    %v1342 = vadd.f32 0.0, %v1341
    %1343 = vdwg.mxu0
    %v1344 = vadd.f32 %v1198, %v1269
    %v1345 = vadd.f32 %v1199, %v1271
    %v1346 = vadd.f32 %v1200, %v1340
    %v1347 = vadd.f32 %v1201, %v1342
    %v1348 = vxor.u32 %v1344, 2147483648
    %v1349 = vmul.f32 %v1348, 1.442695
    %v1350 = vpow.pop %v1349
    %v1351 = vadd.f32 %v1350, 1.0
    %v1352 = vrcp.pop %v1351
    %v1353 = vmul.f32 1.0, %v1352
    %v1354 = vxor.u32 %v1345, 2147483648
    %v1355 = vmul.f32 %v1354, 1.442695
    %v1356 = vpow.pop %v1355
    %v1357 = vadd.f32 %v1356, 1.0
    %v1358 = vrcp.pop %v1357
    %v1359 = vmul.f32 1.0, %v1358
    %v1360 = vtanh.pop %v1346
    %v1361 = vxor.u32 %v1347, 2147483648
    %v1362 = vmul.f32 %v1361, 1.442695
    %v1363 = vpow.pop %v1362
    %v1364 = vadd.f32 %v1363, 1.0
    %v1365 = vrcp.pop %v1364
    %v1366 = vmul.f32 1.0, %v1365
    %v1367 = vmul.f32 %v1359, %v1194
    %v1368 = vmul.f32 %v1353, %v1360
    %v1369 = vadd.f32 %v1367, %v1368
    %v1370 = vtanh.pop %v1369
    %v1371 = vmul.f32 %v1366, %v1370
    %s1372 = scalar_lea.vmem [#allocation2], 160
    %v1373 = vld [vmem:[%s1372] sm:$0xff]
    %v1374 = vld [vmem:[%s1372 + $0x8] sm:$0xff]
    %v1375 = vld [vmem:[%s1372 + $0x10] sm:$0xff]
    %v1376 = vld [vmem:[%s1372 + $0x18] sm:$0xff]
    %1377 = vmatprep.subr.mxu0 %v435
    %1378 = vmatpush1.msra.mxu0 %v434
    %1379 = vmatprep.subr.mxu0 %v439
    %1380 = vmatpush1.msra.mxu0 %v438
    %1381 = vmatprep.subr.mxu0 %v443
    %1382 = vmatpush1.msra.mxu0 %v442
    %1383 = vmatprep.subr.mxu0 %v447
    %1384 = vmatpush1.msra.mxu0 %v446
    %1385 = vmatprep.subr.mxu0 %v451
    %1386 = vmatpush1.msra.mxu0 %v450
    %1387 = vmatprep.subr.mxu0 %v455
    %1388 = vmatpush1.msra.mxu0 %v454
    %1389 = vmatprep.subr.mxu0 %v459
    %1390 = vmatpush1.msra.mxu0 %v458
    %1391 = vmatprep.subr.mxu0 %v463
    %1392 = vmatpush1.msra.mxu0 %v462
    %1393 = vmatprep.subr.mxu0 %v467
    %1394 = vmatpush1.msra.mxu0 %v466
    %1395 = vmatprep.subr.mxu0 %v471
    %1396 = vmatpush1.msra.mxu0 %v470
    %1397 = vmatprep.subr.mxu0 %v475
    %1398 = vmatpush1.msra.mxu0 %v474
    %1399 = vmatprep.subr.mxu0 %v479
    %1400 = vmatpush1.msra.mxu0 %v478
    %1401 = vmatprep.subr.mxu0 %v483
    %1402 = vmatpush1.msra.mxu0 %v482
    %1403 = vmatprep.subr.mxu0 %v487
    %1404 = vmatpush1.msra.mxu0 %v486
    %1405 = vmatprep.subr.mxu0 %v491
    %1406 = vmatpush1.msra.mxu0 %v490
    %1407 = vmatprep.subr.mxu0 %v495
    %1408 = vmatpush1.msra.mxu0 %v494
    %1409 = vmatprep.subr.mxu0 0.0
    %1410 = vmatpush1.msra.mxu0 0.0
    %1411 = vmatprep.subr.mxu0 0.0
    %1412 = vmatpush1.msra.mxu0 0.0
    %1413 = vmatprep.subr.mxu0 0.0
    %1414 = vmatpush1.msra.mxu0 0.0
    %1415 = vmatprep.subr.mxu0 0.0
    %1416 = vmatpush1.msra.mxu0 0.0
    %1417 = vmatprep.subr.mxu0 0.0
    %1418 = vmatpush1.msra.mxu0 0.0
    %1419 = vmatprep.subr.mxu0 0.0
    %1420 = vmatpush1.msra.mxu0 0.0
    %1421 = vmatprep.subr.mxu0 0.0
    %1422 = vmatpush1.msra.mxu0 0.0
    %1423 = vmatprep.subr.mxu0 0.0
    %1424 = vmatpush1.msra.mxu0 0.0
    %1425 = vmatprep.subr.mxu0 0.0
    %1426 = vmatpush1.msra.mxu0 0.0
    %1427 = vmatprep.subr.mxu0 0.0
    %1428 = vmatpush1.msra.mxu0 0.0
    %1429 = vmatprep.subr.mxu0 0.0
    %1430 = vmatpush1.msra.mxu0 0.0
    %1431 = vmatprep.subr.mxu0 0.0
    %1432 = vmatpush1.msra.mxu0 0.0
    %1433 = vmatprep.subr.mxu0 0.0
    %1434 = vmatpush1.msra.mxu0 0.0
    %1435 = vmatprep.subr.mxu0 0.0
    %1436 = vmatpush1.msra.mxu0 0.0
    %1437 = vmatprep.subr.mxu0 0.0
    %1438 = vmatpush1.msra.mxu0 0.0
    %1439 = vmatprep.subr.mxu0 0.0
    %1440 = vmatpush1.msra.mxu0 0.0
    %1441 = vmatprep.mubr.f32.mxu0 0.0
    %1442 = vmatmul.mubr.f32.gmra.mrb[0].mxu0 %v1371
    %v1443 = vpop.f32.mrb[0].mxu0
    %v1444 = vadd.f32 0.0, %v1443
    %v1445 = vpop.f32.mrb[0].mxu0
    %v1446 = vadd.f32 0.0, %v1445
    %1447 = vdwg.mxu0
    %1448 = vmatprep.subr.mxu0 %v437
    %1449 = vmatpush1.msra.mxu0 %v436
    %1450 = vmatprep.subr.mxu0 %v441
    %1451 = vmatpush1.msra.mxu0 %v440
    %1452 = vmatprep.subr.mxu0 %v445
    %1453 = vmatpush1.msra.mxu0 %v444
    %1454 = vmatprep.subr.mxu0 %v449
    %1455 = vmatpush1.msra.mxu0 %v448
    %1456 = vmatprep.subr.mxu0 %v453
    %1457 = vmatpush1.msra.mxu0 %v452
    %1458 = vmatprep.subr.mxu0 %v457
    %1459 = vmatpush1.msra.mxu0 %v456
    %1460 = vmatprep.subr.mxu0 %v461
    %1461 = vmatpush1.msra.mxu0 %v460
    %1462 = vmatprep.subr.mxu0 %v465
    %1463 = vmatpush1.msra.mxu0 %v464
    %1464 = vmatprep.subr.mxu0 %v469
    %1465 = vmatpush1.msra.mxu0 %v468
    %1466 = vmatprep.subr.mxu0 %v473
    %1467 = vmatpush1.msra.mxu0 %v472
    %1468 = vmatprep.subr.mxu0 %v477
    %1469 = vmatpush1.msra.mxu0 %v476
    %1470 = vmatprep.subr.mxu0 %v481
    %1471 = vmatpush1.msra.mxu0 %v480
    %1472 = vmatprep.subr.mxu0 %v485
    %1473 = vmatpush1.msra.mxu0 %v484
    %1474 = vmatprep.subr.mxu0 %v489
    %1475 = vmatpush1.msra.mxu0 %v488
    %1476 = vmatprep.subr.mxu0 %v493
    %1477 = vmatpush1.msra.mxu0 %v492
    %1478 = vmatprep.subr.mxu0 %v497
    %1479 = vmatpush1.msra.mxu0 %v496
    %1480 = vmatprep.subr.mxu0 0.0
    %1481 = vmatpush1.msra.mxu0 0.0
    %1482 = vmatprep.subr.mxu0 0.0
    %1483 = vmatpush1.msra.mxu0 0.0
    %1484 = vmatprep.subr.mxu0 0.0
    %1485 = vmatpush1.msra.mxu0 0.0
    %1486 = vmatprep.subr.mxu0 0.0
    %1487 = vmatpush1.msra.mxu0 0.0
    %1488 = vmatprep.subr.mxu0 0.0
    %1489 = vmatpush1.msra.mxu0 0.0
    %1490 = vmatprep.subr.mxu0 0.0
    %1491 = vmatpush1.msra.mxu0 0.0
    %1492 = vmatprep.subr.mxu0 0.0
    %1493 = vmatpush1.msra.mxu0 0.0
    %1494 = vmatprep.subr.mxu0 0.0
    %1495 = vmatpush1.msra.mxu0 0.0
    %1496 = vmatprep.subr.mxu0 0.0
    %1497 = vmatpush1.msra.mxu0 0.0
    %1498 = vmatprep.subr.mxu0 0.0
    %1499 = vmatpush1.msra.mxu0 0.0
    %1500 = vmatprep.subr.mxu0 0.0
    %1501 = vmatpush1.msra.mxu0 0.0
    %1502 = vmatprep.subr.mxu0 0.0
    %1503 = vmatpush1.msra.mxu0 0.0
    %1504 = vmatprep.subr.mxu0 0.0
    %1505 = vmatpush1.msra.mxu0 0.0
    %1506 = vmatprep.subr.mxu0 0.0
    %1507 = vmatpush1.msra.mxu0 0.0
    %1508 = vmatprep.subr.mxu0 0.0
    %1509 = vmatpush1.msra.mxu0 0.0
    %1510 = vmatprep.subr.mxu0 0.0
    %1511 = vmatpush1.msra.mxu0 0.0
    %1512 = vmatprep.mubr.f32.mxu0 0.0
    %1513 = vmatmul.mubr.f32.gmra.mrb[0].mxu0 %v1371
    %v1514 = vpop.f32.mrb[0].mxu0
    %v1515 = vadd.f32 0.0, %v1514
    %v1516 = vpop.f32.mrb[0].mxu0
    %v1517 = vadd.f32 0.0, %v1516
    %1518 = vdwg.mxu0
    %v1519 = vadd.f32 %v1373, %v1444
    %v1520 = vadd.f32 %v1374, %v1446
    %v1521 = vadd.f32 %v1375, %v1515
    %v1522 = vadd.f32 %v1376, %v1517
    %v1523 = vxor.u32 %v1519, 2147483648
    %v1524 = vmul.f32 %v1523, 1.442695
    %v1525 = vpow.pop %v1524
    %v1526 = vadd.f32 %v1525, 1.0
    %v1527 = vrcp.pop %v1526
    %v1528 = vmul.f32 1.0, %v1527
    %v1529 = vxor.u32 %v1520, 2147483648
    %v1530 = vmul.f32 %v1529, 1.442695
    %v1531 = vpow.pop %v1530
    %v1532 = vadd.f32 %v1531, 1.0
    %v1533 = vrcp.pop %v1532
    %v1534 = vmul.f32 1.0, %v1533
    %v1535 = vtanh.pop %v1521
    %v1536 = vxor.u32 %v1522, 2147483648
    %v1537 = vmul.f32 %v1536, 1.442695
    %v1538 = vpow.pop %v1537
    %v1539 = vadd.f32 %v1538, 1.0
    %v1540 = vrcp.pop %v1539
    %v1541 = vmul.f32 1.0, %v1540
    %v1542 = vmul.f32 %v1534, %v1369
    %v1543 = vmul.f32 %v1528, %v1535
    %v1544 = vadd.f32 %v1542, %v1543
    %v1545 = vtanh.pop %v1544
    %v1546 = vmul.f32 %v1541, %v1545
    %s1547 = scalar_lea.vmem [#allocation2], 192
    %v1548 = vld [vmem:[%s1547] sm:$0xff]
    %v1549 = vld [vmem:[%s1547 + $0x8] sm:$0xff]
    %v1550 = vld [vmem:[%s1547 + $0x10] sm:$0xff]
    %v1551 = vld [vmem:[%s1547 + $0x18] sm:$0xff]
    %1552 = vmatprep.subr.mxu0 %v435
    %1553 = vmatpush1.msra.mxu0 %v434
    %1554 = vmatprep.subr.mxu0 %v439
    %1555 = vmatpush1.msra.mxu0 %v438
    %1556 = vmatprep.subr.mxu0 %v443
    %1557 = vmatpush1.msra.mxu0 %v442
    %1558 = vmatprep.subr.mxu0 %v447
    %1559 = vmatpush1.msra.mxu0 %v446
    %1560 = vmatprep.subr.mxu0 %v451
    %1561 = vmatpush1.msra.mxu0 %v450
    %1562 = vmatprep.subr.mxu0 %v455
    %1563 = vmatpush1.msra.mxu0 %v454
    %1564 = vmatprep.subr.mxu0 %v459
    %1565 = vmatpush1.msra.mxu0 %v458
    %1566 = vmatprep.subr.mxu0 %v463
    %1567 = vmatpush1.msra.mxu0 %v462
    %1568 = vmatprep.subr.mxu0 %v467
    %1569 = vmatpush1.msra.mxu0 %v466
    %1570 = vmatprep.subr.mxu0 %v471
    %1571 = vmatpush1.msra.mxu0 %v470
    %1572 = vmatprep.subr.mxu0 %v475
    %1573 = vmatpush1.msra.mxu0 %v474
    %1574 = vmatprep.subr.mxu0 %v479
    %1575 = vmatpush1.msra.mxu0 %v478
    %1576 = vmatprep.subr.mxu0 %v483
    %1577 = vmatpush1.msra.mxu0 %v482
    %1578 = vmatprep.subr.mxu0 %v487
    %1579 = vmatpush1.msra.mxu0 %v486
    %1580 = vmatprep.subr.mxu0 %v491
    %1581 = vmatpush1.msra.mxu0 %v490
    %1582 = vmatprep.subr.mxu0 %v495
    %1583 = vmatpush1.msra.mxu0 %v494
    %1584 = vmatprep.subr.mxu0 0.0
    %1585 = vmatpush1.msra.mxu0 0.0
    %1586 = vmatprep.subr.mxu0 0.0
    %1587 = vmatpush1.msra.mxu0 0.0
    %1588 = vmatprep.subr.mxu0 0.0
    %1589 = vmatpush1.msra.mxu0 0.0
    %1590 = vmatprep.subr.mxu0 0.0
    %1591 = vmatpush1.msra.mxu0 0.0
    %1592 = vmatprep.subr.mxu0 0.0
    %1593 = vmatpush1.msra.mxu0 0.0
    %1594 = vmatprep.subr.mxu0 0.0
    %1595 = vmatpush1.msra.mxu0 0.0
    %1596 = vmatprep.subr.mxu0 0.0
    %1597 = vmatpush1.msra.mxu0 0.0
    %1598 = vmatprep.subr.mxu0 0.0
    %1599 = vmatpush1.msra.mxu0 0.0
    %1600 = vmatprep.subr.mxu0 0.0
    %1601 = vmatpush1.msra.mxu0 0.0
    %1602 = vmatprep.subr.mxu0 0.0
    %1603 = vmatpush1.msra.mxu0 0.0
    %1604 = vmatprep.subr.mxu0 0.0
    %1605 = vmatpush1.msra.mxu0 0.0
    %1606 = vmatprep.subr.mxu0 0.0
    %1607 = vmatpush1.msra.mxu0 0.0
    %1608 = vmatprep.subr.mxu0 0.0
    %1609 = vmatpush1.msra.mxu0 0.0
    %1610 = vmatprep.subr.mxu0 0.0
    %1611 = vmatpush1.msra.mxu0 0.0
    %1612 = vmatprep.subr.mxu0 0.0
    %1613 = vmatpush1.msra.mxu0 0.0
    %1614 = vmatprep.subr.mxu0 0.0
    %1615 = vmatpush1.msra.mxu0 0.0
    %1616 = vmatprep.mubr.f32.mxu0 0.0
    %1617 = vmatmul.mubr.f32.gmra.mrb[0].mxu0 %v1546
    %v1618 = vpop.f32.mrb[0].mxu0
    %v1619 = vadd.f32 0.0, %v1618
    %v1620 = vpop.f32.mrb[0].mxu0
    %v1621 = vadd.f32 0.0, %v1620
    %1622 = vdwg.mxu0
    %1623 = vmatprep.subr.mxu0 %v437
    %1624 = vmatpush1.msra.mxu0 %v436
    %1625 = vmatprep.subr.mxu0 %v441
    %1626 = vmatpush1.msra.mxu0 %v440
    %1627 = vmatprep.subr.mxu0 %v445
    %1628 = vmatpush1.msra.mxu0 %v444
    %1629 = vmatprep.subr.mxu0 %v449
    %1630 = vmatpush1.msra.mxu0 %v448
    %1631 = vmatprep.subr.mxu0 %v453
    %1632 = vmatpush1.msra.mxu0 %v452
    %1633 = vmatprep.subr.mxu0 %v457
    %1634 = vmatpush1.msra.mxu0 %v456
    %1635 = vmatprep.subr.mxu0 %v461
    %1636 = vmatpush1.msra.mxu0 %v460
    %1637 = vmatprep.subr.mxu0 %v465
    %1638 = vmatpush1.msra.mxu0 %v464
    %1639 = vmatprep.subr.mxu0 %v469
    %1640 = vmatpush1.msra.mxu0 %v468
    %1641 = vmatprep.subr.mxu0 %v473
    %1642 = vmatpush1.msra.mxu0 %v472
    %1643 = vmatprep.subr.mxu0 %v477
    %1644 = vmatpush1.msra.mxu0 %v476
    %1645 = vmatprep.subr.mxu0 %v481
    %1646 = vmatpush1.msra.mxu0 %v480
    %1647 = vmatprep.subr.mxu0 %v485
    %1648 = vmatpush1.msra.mxu0 %v484
    %1649 = vmatprep.subr.mxu0 %v489
    %1650 = vmatpush1.msra.mxu0 %v488
    %1651 = vmatprep.subr.mxu0 %v493
    %1652 = vmatpush1.msra.mxu0 %v492
    %1653 = vmatprep.subr.mxu0 %v497
    %1654 = vmatpush1.msra.mxu0 %v496
    %1655 = vmatprep.subr.mxu0 0.0
    %1656 = vmatpush1.msra.mxu0 0.0
    %1657 = vmatprep.subr.mxu0 0.0
    %1658 = vmatpush1.msra.mxu0 0.0
    %1659 = vmatprep.subr.mxu0 0.0
    %1660 = vmatpush1.msra.mxu0 0.0
    %1661 = vmatprep.subr.mxu0 0.0
    %1662 = vmatpush1.msra.mxu0 0.0
    %1663 = vmatprep.subr.mxu0 0.0
    %1664 = vmatpush1.msra.mxu0 0.0
    %1665 = vmatprep.subr.mxu0 0.0
    %1666 = vmatpush1.msra.mxu0 0.0
    %1667 = vmatprep.subr.mxu0 0.0
    %1668 = vmatpush1.msra.mxu0 0.0
    %1669 = vmatprep.subr.mxu0 0.0
    %1670 = vmatpush1.msra.mxu0 0.0
    %1671 = vmatprep.subr.mxu0 0.0
    %1672 = vmatpush1.msra.mxu0 0.0
    %1673 = vmatprep.subr.mxu0 0.0
    %1674 = vmatpush1.msra.mxu0 0.0
    %1675 = vmatprep.subr.mxu0 0.0
    %1676 = vmatpush1.msra.mxu0 0.0
    %1677 = vmatprep.subr.mxu0 0.0
    %1678 = vmatpush1.msra.mxu0 0.0
    %1679 = vmatprep.subr.mxu0 0.0
    %1680 = vmatpush1.msra.mxu0 0.0
    %1681 = vmatprep.subr.mxu0 0.0
    %1682 = vmatpush1.msra.mxu0 0.0
    %1683 = vmatprep.subr.mxu0 0.0
    %1684 = vmatpush1.msra.mxu0 0.0
    %1685 = vmatprep.subr.mxu0 0.0
    %1686 = vmatpush1.msra.mxu0 0.0
    %1687 = vmatprep.mubr.f32.mxu0 0.0
    %1688 = vmatmul.mubr.f32.gmra.mrb[0].mxu0 %v1546
    %v1689 = vpop.f32.mrb[0].mxu0
    %v1690 = vadd.f32 0.0, %v1689
    %v1691 = vpop.f32.mrb[0].mxu0
    %v1692 = vadd.f32 0.0, %v1691
    %1693 = vdwg.mxu0
    %v1694 = vadd.f32 %v1548, %v1619
    %v1695 = vadd.f32 %v1549, %v1621
    %v1696 = vadd.f32 %v1550, %v1690
    %v1697 = vadd.f32 %v1551, %v1692
    %v1698 = vxor.u32 %v1694, 2147483648
    %v1699 = vmul.f32 %v1698, 1.442695
    %v1700 = vpow.pop %v1699
    %v1701 = vadd.f32 %v1700, 1.0
    %v1702 = vrcp.pop %v1701
    %v1703 = vmul.f32 1.0, %v1702
    %v1704 = vxor.u32 %v1695, 2147483648
    %v1705 = vmul.f32 %v1704, 1.442695
    %v1706 = vpow.pop %v1705
    %v1707 = vadd.f32 %v1706, 1.0
    %v1708 = vrcp.pop %v1707
    %v1709 = vmul.f32 1.0, %v1708
    %v1710 = vtanh.pop %v1696
    %v1711 = vxor.u32 %v1697, 2147483648
    %v1712 = vmul.f32 %v1711, 1.442695
    %v1713 = vpow.pop %v1712
    %v1714 = vadd.f32 %v1713, 1.0
    %v1715 = vrcp.pop %v1714
    %v1716 = vmul.f32 1.0, %v1715
    %v1717 = vmul.f32 %v1709, %v1544
    %v1718 = vmul.f32 %v1703, %v1710
    %v1719 = vadd.f32 %v1717, %v1718
    %v1720 = vtanh.pop %v1719
    %v1721 = vmul.f32 %v1716, %v1720
    %s1722 = scalar_lea.vmem [#allocation2], 224
    %v1723 = vld [vmem:[%s1722] sm:$0xff]
    %v1724 = vld [vmem:[%s1722 + $0x8] sm:$0xff]
    %v1725 = vld [vmem:[%s1722 + $0x10] sm:$0xff]
    %v1726 = vld [vmem:[%s1722 + $0x18] sm:$0xff]
    %1727 = vmatprep.subr.mxu0 %v435
    %1728 = vmatpush1.msra.mxu0 %v434
    %1729 = vmatprep.subr.mxu0 %v439
    %1730 = vmatpush1.msra.mxu0 %v438
    %1731 = vmatprep.subr.mxu0 %v443
    %1732 = vmatpush1.msra.mxu0 %v442
    %1733 = vmatprep.subr.mxu0 %v447
    %1734 = vmatpush1.msra.mxu0 %v446
    %1735 = vmatprep.subr.mxu0 %v451
    %1736 = vmatpush1.msra.mxu0 %v450
    %1737 = vmatprep.subr.mxu0 %v455
    %1738 = vmatpush1.msra.mxu0 %v454
    %1739 = vmatprep.subr.mxu0 %v459
    %1740 = vmatpush1.msra.mxu0 %v458
    %1741 = vmatprep.subr.mxu0 %v463
    %1742 = vmatpush1.msra.mxu0 %v462
    %1743 = vmatprep.subr.mxu0 %v467
    %1744 = vmatpush1.msra.mxu0 %v466
    %1745 = vmatprep.subr.mxu0 %v471
    %1746 = vmatpush1.msra.mxu0 %v470
    %1747 = vmatprep.subr.mxu0 %v475
    %1748 = vmatpush1.msra.mxu0 %v474
    %1749 = vmatprep.subr.mxu0 %v479
    %1750 = vmatpush1.msra.mxu0 %v478
    %1751 = vmatprep.subr.mxu0 %v483
    %1752 = vmatpush1.msra.mxu0 %v482
    %1753 = vmatprep.subr.mxu0 %v487
    %1754 = vmatpush1.msra.mxu0 %v486
    %1755 = vmatprep.subr.mxu0 %v491
    %1756 = vmatpush1.msra.mxu0 %v490
    %1757 = vmatprep.subr.mxu0 %v495
    %1758 = vmatpush1.msra.mxu0 %v494
    %1759 = vmatprep.subr.mxu0 0.0
    %1760 = vmatpush1.msra.mxu0 0.0
    %1761 = vmatprep.subr.mxu0 0.0
    %1762 = vmatpush1.msra.mxu0 0.0
    %1763 = vmatprep.subr.mxu0 0.0
    %1764 = vmatpush1.msra.mxu0 0.0
    %1765 = vmatprep.subr.mxu0 0.0
    %1766 = vmatpush1.msra.mxu0 0.0
    %1767 = vmatprep.subr.mxu0 0.0
    %1768 = vmatpush1.msra.mxu0 0.0
    %1769 = vmatprep.subr.mxu0 0.0
    %1770 = vmatpush1.msra.mxu0 0.0
    %1771 = vmatprep.subr.mxu0 0.0
    %1772 = vmatpush1.msra.mxu0 0.0
    %1773 = vmatprep.subr.mxu0 0.0
    %1774 = vmatpush1.msra.mxu0 0.0
    %1775 = vmatprep.subr.mxu0 0.0
    %1776 = vmatpush1.msra.mxu0 0.0
    %1777 = vmatprep.subr.mxu0 0.0
    %1778 = vmatpush1.msra.mxu0 0.0
    %1779 = vmatprep.subr.mxu0 0.0
    %1780 = vmatpush1.msra.mxu0 0.0
    %1781 = vmatprep.subr.mxu0 0.0
    %1782 = vmatpush1.msra.mxu0 0.0
    %1783 = vmatprep.subr.mxu0 0.0
    %1784 = vmatpush1.msra.mxu0 0.0
    %1785 = vmatprep.subr.mxu0 0.0
    %1786 = vmatpush1.msra.mxu0 0.0
    %1787 = vmatprep.subr.mxu0 0.0
    %1788 = vmatpush1.msra.mxu0 0.0
    %1789 = vmatprep.subr.mxu0 0.0
    %1790 = vmatpush1.msra.mxu0 0.0
    %1791 = vmatprep.mubr.f32.mxu0 0.0
    %1792 = vmatmul.mubr.f32.gmra.mrb[0].mxu0 %v1721
    %v1793 = vpop.f32.mrb[0].mxu0
    %v1794 = vadd.f32 0.0, %v1793
    %v1795 = vpop.f32.mrb[0].mxu0
    %v1796 = vadd.f32 0.0, %v1795
    %1797 = vdwg.mxu0
    %1798 = vmatprep.subr.mxu0 %v437
    %1799 = vmatpush1.msra.mxu0 %v436
    %1800 = vmatprep.subr.mxu0 %v441
    %1801 = vmatpush1.msra.mxu0 %v440
    %1802 = vmatprep.subr.mxu0 %v445
    %1803 = vmatpush1.msra.mxu0 %v444
    %1804 = vmatprep.subr.mxu0 %v449
    %1805 = vmatpush1.msra.mxu0 %v448
    %1806 = vmatprep.subr.mxu0 %v453
    %1807 = vmatpush1.msra.mxu0 %v452
    %1808 = vmatprep.subr.mxu0 %v457
    %1809 = vmatpush1.msra.mxu0 %v456
    %1810 = vmatprep.subr.mxu0 %v461
    %1811 = vmatpush1.msra.mxu0 %v460
    %1812 = vmatprep.subr.mxu0 %v465
    %1813 = vmatpush1.msra.mxu0 %v464
    %1814 = vmatprep.subr.mxu0 %v469
    %1815 = vmatpush1.msra.mxu0 %v468
    %1816 = vmatprep.subr.mxu0 %v473
    %1817 = vmatpush1.msra.mxu0 %v472
    %1818 = vmatprep.subr.mxu0 %v477
    %1819 = vmatpush1.msra.mxu0 %v476
    %1820 = vmatprep.subr.mxu0 %v481
    %1821 = vmatpush1.msra.mxu0 %v480
    %1822 = vmatprep.subr.mxu0 %v485
    %1823 = vmatpush1.msra.mxu0 %v484
    %1824 = vmatprep.subr.mxu0 %v489
    %1825 = vmatpush1.msra.mxu0 %v488
    %1826 = vmatprep.subr.mxu0 %v493
    %1827 = vmatpush1.msra.mxu0 %v492
    %1828 = vmatprep.subr.mxu0 %v497
    %1829 = vmatpush1.msra.mxu0 %v496
    %1830 = vmatprep.subr.mxu0 0.0
    %1831 = vmatpush1.msra.mxu0 0.0
    %1832 = vmatprep.subr.mxu0 0.0
    %1833 = vmatpush1.msra.mxu0 0.0
    %1834 = vmatprep.subr.mxu0 0.0
    %1835 = vmatpush1.msra.mxu0 0.0
    %1836 = vmatprep.subr.mxu0 0.0
    %1837 = vmatpush1.msra.mxu0 0.0
    %1838 = vmatprep.subr.mxu0 0.0
    %1839 = vmatpush1.msra.mxu0 0.0
    %1840 = vmatprep.subr.mxu0 0.0
    %1841 = vmatpush1.msra.mxu0 0.0
    %1842 = vmatprep.subr.mxu0 0.0
    %1843 = vmatpush1.msra.mxu0 0.0
    %1844 = vmatprep.subr.mxu0 0.0
    %1845 = vmatpush1.msra.mxu0 0.0
    %1846 = vmatprep.subr.mxu0 0.0
    %1847 = vmatpush1.msra.mxu0 0.0
    %1848 = vmatprep.subr.mxu0 0.0
    %1849 = vmatpush1.msra.mxu0 0.0
    %1850 = vmatprep.subr.mxu0 0.0
    %1851 = vmatpush1.msra.mxu0 0.0
    %1852 = vmatprep.subr.mxu0 0.0
    %1853 = vmatpush1.msra.mxu0 0.0
    %1854 = vmatprep.subr.mxu0 0.0
    %1855 = vmatpush1.msra.mxu0 0.0
    %1856 = vmatprep.subr.mxu0 0.0
    %1857 = vmatpush1.msra.mxu0 0.0
    %1858 = vmatprep.subr.mxu0 0.0
    %1859 = vmatpush1.msra.mxu0 0.0
    %1860 = vmatprep.subr.mxu0 0.0
    %1861 = vmatpush1.msra.mxu0 0.0
    %1862 = vmatprep.mubr.f32.mxu0 0.0
    %1863 = vmatmul.mubr.f32.gmra.mrb[0].mxu0 %v1721
    %v1864 = vpop.f32.mrb[0].mxu0
    %v1865 = vadd.f32 0.0, %v1864
    %v1866 = vpop.f32.mrb[0].mxu0
    %v1867 = vadd.f32 0.0, %v1866
    %1868 = vdwg.mxu0
    %v1869 = vadd.f32 %v1723, %v1794
    %v1870 = vadd.f32 %v1724, %v1796
    %v1871 = vadd.f32 %v1725, %v1865
    %v1872 = vadd.f32 %v1726, %v1867
    %v1873 = vxor.u32 %v1869, 2147483648
    %v1874 = vmul.f32 %v1873, 1.442695
    %v1875 = vpow.pop %v1874
    %v1876 = vadd.f32 %v1875, 1.0
    %v1877 = vrcp.pop %v1876
    %v1878 = vmul.f32 1.0, %v1877
    %v1879 = vxor.u32 %v1870, 2147483648
    %v1880 = vmul.f32 %v1879, 1.442695
    %v1881 = vpow.pop %v1880
    %v1882 = vadd.f32 %v1881, 1.0
    %v1883 = vrcp.pop %v1882
    %v1884 = vmul.f32 1.0, %v1883
    %v1885 = vtanh.pop %v1871
    %v1886 = vxor.u32 %v1872, 2147483648
    %v1887 = vmul.f32 %v1886, 1.442695
    %v1888 = vpow.pop %v1887
    %v1889 = vadd.f32 %v1888, 1.0
    %v1890 = vrcp.pop %v1889
    %v1891 = vmul.f32 1.0, %v1890
    %v1892 = vmul.f32 %v1884, %v1719
    %v1893 = vmul.f32 %v1878, %v1885
    %v1894 = vadd.f32 %v1892, %v1893
    %v1895 = vtanh.pop %v1894
    %v1896 = vmul.f32 %v1891, %v1895
    %s1897 = scalar_lea.vmem [#allocation2], 256
    %v1898 = vld [vmem:[%s1897] sm:$0xff]
    %v1899 = vld [vmem:[%s1897 + $0x8] sm:$0xff]
    %v1900 = vld [vmem:[%s1897 + $0x10] sm:$0xff]
    %v1901 = vld [vmem:[%s1897 + $0x18] sm:$0xff]
    %1902 = vmatprep.subr.mxu0 %v435
    %1903 = vmatpush1.msra.mxu0 %v434
    %1904 = vmatprep.subr.mxu0 %v439
    %1905 = vmatpush1.msra.mxu0 %v438
    %1906 = vmatprep.subr.mxu0 %v443
    %1907 = vmatpush1.msra.mxu0 %v442
    %1908 = vmatprep.subr.mxu0 %v447
    %1909 = vmatpush1.msra.mxu0 %v446
    %1910 = vmatprep.subr.mxu0 %v451
    %1911 = vmatpush1.msra.mxu0 %v450
    %1912 = vmatprep.subr.mxu0 %v455
    %1913 = vmatpush1.msra.mxu0 %v454
    %1914 = vmatprep.subr.mxu0 %v459
    %1915 = vmatpush1.msra.mxu0 %v458
    %1916 = vmatprep.subr.mxu0 %v463
    %1917 = vmatpush1.msra.mxu0 %v462
    %1918 = vmatprep.subr.mxu0 %v467
    %1919 = vmatpush1.msra.mxu0 %v466
    %1920 = vmatprep.subr.mxu0 %v471
    %1921 = vmatpush1.msra.mxu0 %v470
    %1922 = vmatprep.subr.mxu0 %v475
    %1923 = vmatpush1.msra.mxu0 %v474
    %1924 = vmatprep.subr.mxu0 %v479
    %1925 = vmatpush1.msra.mxu0 %v478
    %1926 = vmatprep.subr.mxu0 %v483
    %1927 = vmatpush1.msra.mxu0 %v482
    %1928 = vmatprep.subr.mxu0 %v487
    %1929 = vmatpush1.msra.mxu0 %v486
    %1930 = vmatprep.subr.mxu0 %v491
    %1931 = vmatpush1.msra.mxu0 %v490
    %1932 = vmatprep.subr.mxu0 %v495
    %1933 = vmatpush1.msra.mxu0 %v494
    %1934 = vmatprep.subr.mxu0 0.0
    %1935 = vmatpush1.msra.mxu0 0.0
    %1936 = vmatprep.subr.mxu0 0.0
    %1937 = vmatpush1.msra.mxu0 0.0
    %1938 = vmatprep.subr.mxu0 0.0
    %1939 = vmatpush1.msra.mxu0 0.0
    %1940 = vmatprep.subr.mxu0 0.0
    %1941 = vmatpush1.msra.mxu0 0.0
    %1942 = vmatprep.subr.mxu0 0.0
    %1943 = vmatpush1.msra.mxu0 0.0
    %1944 = vmatprep.subr.mxu0 0.0
    %1945 = vmatpush1.msra.mxu0 0.0
    %1946 = vmatprep.subr.mxu0 0.0
    %1947 = vmatpush1.msra.mxu0 0.0
    %1948 = vmatprep.subr.mxu0 0.0
    %1949 = vmatpush1.msra.mxu0 0.0
    %1950 = vmatprep.subr.mxu0 0.0
    %1951 = vmatpush1.msra.mxu0 0.0
    %1952 = vmatprep.subr.mxu0 0.0
    %1953 = vmatpush1.msra.mxu0 0.0
    %1954 = vmatprep.subr.mxu0 0.0
    %1955 = vmatpush1.msra.mxu0 0.0
    %1956 = vmatprep.subr.mxu0 0.0
    %1957 = vmatpush1.msra.mxu0 0.0
    %1958 = vmatprep.subr.mxu0 0.0
    %1959 = vmatpush1.msra.mxu0 0.0
    %1960 = vmatprep.subr.mxu0 0.0
    %1961 = vmatpush1.msra.mxu0 0.0
    %1962 = vmatprep.subr.mxu0 0.0
    %1963 = vmatpush1.msra.mxu0 0.0
    %1964 = vmatprep.subr.mxu0 0.0
    %1965 = vmatpush1.msra.mxu0 0.0
    %1966 = vmatprep.mubr.f32.mxu0 0.0
    %1967 = vmatmul.mubr.f32.gmra.mrb[0].mxu0 %v1896
    %v1968 = vpop.f32.mrb[0].mxu0
    %v1969 = vadd.f32 0.0, %v1968
    %v1970 = vpop.f32.mrb[0].mxu0
    %v1971 = vadd.f32 0.0, %v1970
    %1972 = vdwg.mxu0
    %1973 = vmatprep.subr.mxu0 %v437
    %1974 = vmatpush1.msra.mxu0 %v436
    %1975 = vmatprep.subr.mxu0 %v441
    %1976 = vmatpush1.msra.mxu0 %v440
    %1977 = vmatprep.subr.mxu0 %v445
    %1978 = vmatpush1.msra.mxu0 %v444
    %1979 = vmatprep.subr.mxu0 %v449
    %1980 = vmatpush1.msra.mxu0 %v448
    %1981 = vmatprep.subr.mxu0 %v453
    %1982 = vmatpush1.msra.mxu0 %v452
    %1983 = vmatprep.subr.mxu0 %v457
    %1984 = vmatpush1.msra.mxu0 %v456
    %1985 = vmatprep.subr.mxu0 %v461
    %1986 = vmatpush1.msra.mxu0 %v460
    %1987 = vmatprep.subr.mxu0 %v465
    %1988 = vmatpush1.msra.mxu0 %v464
    %1989 = vmatprep.subr.mxu0 %v469
    %1990 = vmatpush1.msra.mxu0 %v468
    %1991 = vmatprep.subr.mxu0 %v473
    %1992 = vmatpush1.msra.mxu0 %v472
    %1993 = vmatprep.subr.mxu0 %v477
    %1994 = vmatpush1.msra.mxu0 %v476
    %1995 = vmatprep.subr.mxu0 %v481
    %1996 = vmatpush1.msra.mxu0 %v480
    %1997 = vmatprep.subr.mxu0 %v485
    %1998 = vmatpush1.msra.mxu0 %v484
    %1999 = vmatprep.subr.mxu0 %v489
    %2000 = vmatpush1.msra.mxu0 %v488
    %2001 = vmatprep.subr.mxu0 %v493
    %2002 = vmatpush1.msra.mxu0 %v492
    %2003 = vmatprep.subr.mxu0 %v497
    %2004 = vmatpush1.msra.mxu0 %v496
    %2005 = vmatprep.subr.mxu0 0.0
    %2006 = vmatpush1.msra.mxu0 0.0
    %2007 = vmatprep.subr.mxu0 0.0
    %2008 = vmatpush1.msra.mxu0 0.0
    %2009 = vmatprep.subr.mxu0 0.0
    %2010 = vmatpush1.msra.mxu0 0.0
    %2011 = vmatprep.subr.mxu0 0.0
    %2012 = vmatpush1.msra.mxu0 0.0
    %2013 = vmatprep.subr.mxu0 0.0
    %2014 = vmatpush1.msra.mxu0 0.0
    %2015 = vmatprep.subr.mxu0 0.0
    %2016 = vmatpush1.msra.mxu0 0.0
    %2017 = vmatprep.subr.mxu0 0.0
    %2018 = vmatpush1.msra.mxu0 0.0
    %2019 = vmatprep.subr.mxu0 0.0
    %2020 = vmatpush1.msra.mxu0 0.0
    %2021 = vmatprep.subr.mxu0 0.0
    %2022 = vmatpush1.msra.mxu0 0.0
    %2023 = vmatprep.subr.mxu0 0.0
    %2024 = vmatpush1.msra.mxu0 0.0
    %2025 = vmatprep.subr.mxu0 0.0
    %2026 = vmatpush1.msra.mxu0 0.0
    %2027 = vmatprep.subr.mxu0 0.0
    %2028 = vmatpush1.msra.mxu0 0.0
    %2029 = vmatprep.subr.mxu0 0.0
    %2030 = vmatpush1.msra.mxu0 0.0
    %2031 = vmatprep.subr.mxu0 0.0
    %2032 = vmatpush1.msra.mxu0 0.0
    %2033 = vmatprep.subr.mxu0 0.0
    %2034 = vmatpush1.msra.mxu0 0.0
    %2035 = vmatprep.subr.mxu0 0.0
    %2036 = vmatpush1.msra.mxu0 0.0
    %2037 = vmatprep.mubr.f32.mxu0 0.0
    %2038 = vmatmul.mubr.f32.gmra.mrb[0].mxu0 %v1896
    %v2039 = vpop.f32.mrb[0].mxu0
    %v2040 = vadd.f32 0.0, %v2039
    %v2041 = vpop.f32.mrb[0].mxu0
    %v2042 = vadd.f32 0.0, %v2041
    %2043 = vdwg.mxu0
    %v2044 = vadd.f32 %v1898, %v1969
    %v2045 = vadd.f32 %v1899, %v1971
    %v2046 = vadd.f32 %v1900, %v2040
    %v2047 = vadd.f32 %v1901, %v2042
    %v2048 = vxor.u32 %v2044, 2147483648
    %v2049 = vmul.f32 %v2048, 1.442695
    %v2050 = vpow.pop %v2049
    %v2051 = vadd.f32 %v2050, 1.0
    %v2052 = vrcp.pop %v2051
    %v2053 = vmul.f32 1.0, %v2052
    %v2054 = vxor.u32 %v2045, 2147483648
    %v2055 = vmul.f32 %v2054, 1.442695
    %v2056 = vpow.pop %v2055
    %v2057 = vadd.f32 %v2056, 1.0
    %v2058 = vrcp.pop %v2057
    %v2059 = vmul.f32 1.0, %v2058
    %v2060 = vtanh.pop %v2046
    %v2061 = vxor.u32 %v2047, 2147483648
    %v2062 = vmul.f32 %v2061, 1.442695
    %v2063 = vpow.pop %v2062
    %v2064 = vadd.f32 %v2063, 1.0
    %v2065 = vrcp.pop %v2064
    %v2066 = vmul.f32 1.0, %v2065
    %v2067 = vmul.f32 %v2059, %v1894
    %v2068 = vmul.f32 %v2053, %v2060
    %v2069 = vadd.f32 %v2067, %v2068
    %v2070 = vtanh.pop %v2069
    %v2071 = vmul.f32 %v2066, %v2070
    %2072 = vst [vmem:[#allocation3] sm:$0xff] %v2071
    %s2073 = scalar_lea.vmem [#allocation2], 288
    %v2074 = vld [vmem:[%s2073] sm:$0xff]
    %v2075 = vld [vmem:[%s2073 + $0x8] sm:$0xff]
    %v2076 = vld [vmem:[%s2073 + $0x10] sm:$0xff]
    %v2077 = vld [vmem:[%s2073 + $0x18] sm:$0xff]
    %2078 = vmatprep.subr.mxu0 %v435
    %2079 = vmatpush1.msra.mxu0 %v434
    %2080 = vmatprep.subr.mxu0 %v439
    %2081 = vmatpush1.msra.mxu0 %v438
    %2082 = vmatprep.subr.mxu0 %v443
    %2083 = vmatpush1.msra.mxu0 %v442
    %2084 = vmatprep.subr.mxu0 %v447
    %2085 = vmatpush1.msra.mxu0 %v446
    %2086 = vmatprep.subr.mxu0 %v451
    %2087 = vmatpush1.msra.mxu0 %v450
    %2088 = vmatprep.subr.mxu0 %v455
    %2089 = vmatpush1.msra.mxu0 %v454
    %2090 = vmatprep.subr.mxu0 %v459
    %2091 = vmatpush1.msra.mxu0 %v458
    %2092 = vmatprep.subr.mxu0 %v463
    %2093 = vmatpush1.msra.mxu0 %v462
    %2094 = vmatprep.subr.mxu0 %v467
    %2095 = vmatpush1.msra.mxu0 %v466
    %2096 = vmatprep.subr.mxu0 %v471
    %2097 = vmatpush1.msra.mxu0 %v470
    %2098 = vmatprep.subr.mxu0 %v475
    %2099 = vmatpush1.msra.mxu0 %v474
    %2100 = vmatprep.subr.mxu0 %v479
    %2101 = vmatpush1.msra.mxu0 %v478
    %2102 = vmatprep.subr.mxu0 %v483
    %2103 = vmatpush1.msra.mxu0 %v482
    %2104 = vmatprep.subr.mxu0 %v487
    %2105 = vmatpush1.msra.mxu0 %v486
    %2106 = vmatprep.subr.mxu0 %v491
    %2107 = vmatpush1.msra.mxu0 %v490
    %2108 = vmatprep.subr.mxu0 %v495
    %2109 = vmatpush1.msra.mxu0 %v494
    %2110 = vmatprep.subr.mxu0 0.0
    %2111 = vmatpush1.msra.mxu0 0.0
    %2112 = vmatprep.subr.mxu0 0.0
    %2113 = vmatpush1.msra.mxu0 0.0
    %2114 = vmatprep.subr.mxu0 0.0
    %2115 = vmatpush1.msra.mxu0 0.0
    %2116 = vmatprep.subr.mxu0 0.0
    %2117 = vmatpush1.msra.mxu0 0.0
    %2118 = vmatprep.subr.mxu0 0.0
    %2119 = vmatpush1.msra.mxu0 0.0
    %2120 = vmatprep.subr.mxu0 0.0
    %2121 = vmatpush1.msra.mxu0 0.0
    %2122 = vmatprep.subr.mxu0 0.0
    %2123 = vmatpush1.msra.mxu0 0.0
    %2124 = vmatprep.subr.mxu0 0.0
    %2125 = vmatpush1.msra.mxu0 0.0
    %2126 = vmatprep.subr.mxu0 0.0
    %2127 = vmatpush1.msra.mxu0 0.0
    %2128 = vmatprep.subr.mxu0 0.0
    %2129 = vmatpush1.msra.mxu0 0.0
    %2130 = vmatprep.subr.mxu0 0.0
    %2131 = vmatpush1.msra.mxu0 0.0
    %2132 = vmatprep.subr.mxu0 0.0
    %2133 = vmatpush1.msra.mxu0 0.0
    %2134 = vmatprep.subr.mxu0 0.0
    %2135 = vmatpush1.msra.mxu0 0.0
    %2136 = vmatprep.subr.mxu0 0.0
    %2137 = vmatpush1.msra.mxu0 0.0
    %2138 = vmatprep.subr.mxu0 0.0
    %2139 = vmatpush1.msra.mxu0 0.0
    %2140 = vmatprep.subr.mxu0 0.0
    %2141 = vmatpush1.msra.mxu0 0.0
    %2142 = vmatprep.mubr.f32.mxu0 0.0
    %2143 = vmatmul.mubr.f32.gmra.mrb[0].mxu0 %v2071
    %v2144 = vpop.f32.mrb[0].mxu0
    %v2145 = vadd.f32 0.0, %v2144
    %v2146 = vpop.f32.mrb[0].mxu0
    %v2147 = vadd.f32 0.0, %v2146
    %2148 = vdwg.mxu0
    %2149 = vmatprep.subr.mxu0 %v437
    %2150 = vmatpush1.msra.mxu0 %v436
    %2151 = vmatprep.subr.mxu0 %v441
    %2152 = vmatpush1.msra.mxu0 %v440
    %2153 = vmatprep.subr.mxu0 %v445
    %2154 = vmatpush1.msra.mxu0 %v444
    %2155 = vmatprep.subr.mxu0 %v449
    %2156 = vmatpush1.msra.mxu0 %v448
    %2157 = vmatprep.subr.mxu0 %v453
    %2158 = vmatpush1.msra.mxu0 %v452
    %2159 = vmatprep.subr.mxu0 %v457
    %2160 = vmatpush1.msra.mxu0 %v456
    %2161 = vmatprep.subr.mxu0 %v461
    %2162 = vmatpush1.msra.mxu0 %v460
    %2163 = vmatprep.subr.mxu0 %v465
    %2164 = vmatpush1.msra.mxu0 %v464
    %2165 = vmatprep.subr.mxu0 %v469
    %2166 = vmatpush1.msra.mxu0 %v468
    %2167 = vmatprep.subr.mxu0 %v473
    %2168 = vmatpush1.msra.mxu0 %v472
    %2169 = vmatprep.subr.mxu0 %v477
    %2170 = vmatpush1.msra.mxu0 %v476
    %2171 = vmatprep.subr.mxu0 %v481
    %2172 = vmatpush1.msra.mxu0 %v480
    %2173 = vmatprep.subr.mxu0 %v485
    %2174 = vmatpush1.msra.mxu0 %v484
    %2175 = vmatprep.subr.mxu0 %v489
    %2176 = vmatpush1.msra.mxu0 %v488
    %2177 = vmatprep.subr.mxu0 %v493
    %2178 = vmatpush1.msra.mxu0 %v492
    %2179 = vmatprep.subr.mxu0 %v497
    %2180 = vmatpush1.msra.mxu0 %v496
    %2181 = vmatprep.subr.mxu0 0.0
    %2182 = vmatpush1.msra.mxu0 0.0
    %2183 = vmatprep.subr.mxu0 0.0
    %2184 = vmatpush1.msra.mxu0 0.0
    %2185 = vmatprep.subr.mxu0 0.0
    %2186 = vmatpush1.msra.mxu0 0.0
    %2187 = vmatprep.subr.mxu0 0.0
    %2188 = vmatpush1.msra.mxu0 0.0
    %2189 = vmatprep.subr.mxu0 0.0
    %2190 = vmatpush1.msra.mxu0 0.0
    %2191 = vmatprep.subr.mxu0 0.0
    %2192 = vmatpush1.msra.mxu0 0.0
    %2193 = vmatprep.subr.mxu0 0.0
    %2194 = vmatpush1.msra.mxu0 0.0
    %2195 = vmatprep.subr.mxu0 0.0
    %2196 = vmatpush1.msra.mxu0 0.0
    %2197 = vmatprep.subr.mxu0 0.0
    %2198 = vmatpush1.msra.mxu0 0.0
    %2199 = vmatprep.subr.mxu0 0.0
    %2200 = vmatpush1.msra.mxu0 0.0
    %2201 = vmatprep.subr.mxu0 0.0
    %2202 = vmatpush1.msra.mxu0 0.0
    %2203 = vmatprep.subr.mxu0 0.0
    %2204 = vmatpush1.msra.mxu0 0.0
    %2205 = vmatprep.subr.mxu0 0.0
    %2206 = vmatpush1.msra.mxu0 0.0
    %2207 = vmatprep.subr.mxu0 0.0
    %2208 = vmatpush1.msra.mxu0 0.0
    %2209 = vmatprep.subr.mxu0 0.0
    %2210 = vmatpush1.msra.mxu0 0.0
    %2211 = vmatprep.subr.mxu0 0.0
    %2212 = vmatpush1.msra.mxu0 0.0
    %2213 = vmatprep.mubr.f32.mxu0 0.0
    %2214 = vmatmul.mubr.f32.gmra.mrb[0].mxu0 %v2071
    %v2215 = vpop.f32.mrb[0].mxu0
    %v2216 = vadd.f32 0.0, %v2215
    %v2217 = vpop.f32.mrb[0].mxu0
    %v2218 = vadd.f32 0.0, %v2217
    %2219 = vdwg.mxu0
    %v2220 = vadd.f32 %v2074, %v2145
    %v2221 = vadd.f32 %v2075, %v2147
    %v2222 = vadd.f32 %v2076, %v2216
    %v2223 = vadd.f32 %v2077, %v2218
    %v2224 = vxor.u32 %v2220, 2147483648
    %v2225 = vmul.f32 %v2224, 1.442695
    %v2226 = vpow.pop %v2225
    %v2227 = vadd.f32 %v2226, 1.0
    %v2228 = vrcp.pop %v2227
    %v2229 = vmul.f32 1.0, %v2228
    %v2230 = vxor.u32 %v2221, 2147483648
    %v2231 = vmul.f32 %v2230, 1.442695
    %v2232 = vpow.pop %v2231
    %v2233 = vadd.f32 %v2232, 1.0
    %v2234 = vrcp.pop %v2233
    %v2235 = vmul.f32 1.0, %v2234
    %v2236 = vtanh.pop %v2222
    %v2237 = vxor.u32 %v2223, 2147483648
    %v2238 = vmul.f32 %v2237, 1.442695
    %v2239 = vpow.pop %v2238
    %v2240 = vadd.f32 %v2239, 1.0
    %v2241 = vrcp.pop %v2240
    %v2242 = vmul.f32 1.0, %v2241
    %v2243 = vmul.f32 %v2235, %v2069
    %v2244 = vmul.f32 %v2229, %v2236
    %v2245 = vadd.f32 %v2243, %v2244
    %v2246 = vtanh.pop %v2245
    %v2247 = vmul.f32 %v2242, %v2246
    %s2248 = scalar_lea.vmem [#allocation3], 8
    %2249 = vst [vmem:[%s2248] sm:$0xff] %v2247
    %s2250 = scalar_lea.vmem [#allocation2], 320
    %v2251 = vld [vmem:[%s2250] sm:$0xff]
    %v2252 = vld [vmem:[%s2250 + $0x8] sm:$0xff]
    %v2253 = vld [vmem:[%s2250 + $0x10] sm:$0xff]
    %v2254 = vld [vmem:[%s2250 + $0x18] sm:$0xff]
    %2255 = vmatprep.subr.mxu0 %v435
    %2256 = vmatpush1.msra.mxu0 %v434
    %2257 = vmatprep.subr.mxu0 %v439
    %2258 = vmatpush1.msra.mxu0 %v438
    %2259 = vmatprep.subr.mxu0 %v443
    %2260 = vmatpush1.msra.mxu0 %v442
    %2261 = vmatprep.subr.mxu0 %v447
    %2262 = vmatpush1.msra.mxu0 %v446
    %2263 = vmatprep.subr.mxu0 %v451
    %2264 = vmatpush1.msra.mxu0 %v450
    %2265 = vmatprep.subr.mxu0 %v455
    %2266 = vmatpush1.msra.mxu0 %v454
    %2267 = vmatprep.subr.mxu0 %v459
    %2268 = vmatpush1.msra.mxu0 %v458
    %2269 = vmatprep.subr.mxu0 %v463
    %2270 = vmatpush1.msra.mxu0 %v462
    %2271 = vmatprep.subr.mxu0 %v467
    %2272 = vmatpush1.msra.mxu0 %v466
    %2273 = vmatprep.subr.mxu0 %v471
    %2274 = vmatpush1.msra.mxu0 %v470
    %2275 = vmatprep.subr.mxu0 %v475
    %2276 = vmatpush1.msra.mxu0 %v474
    %2277 = vmatprep.subr.mxu0 %v479
    %2278 = vmatpush1.msra.mxu0 %v478
    %2279 = vmatprep.subr.mxu0 %v483
    %2280 = vmatpush1.msra.mxu0 %v482
    %2281 = vmatprep.subr.mxu0 %v487
    %2282 = vmatpush1.msra.mxu0 %v486
    %2283 = vmatprep.subr.mxu0 %v491
    %2284 = vmatpush1.msra.mxu0 %v490
    %2285 = vmatprep.subr.mxu0 %v495
    %2286 = vmatpush1.msra.mxu0 %v494
    %2287 = vmatprep.subr.mxu0 0.0
    %2288 = vmatpush1.msra.mxu0 0.0
    %2289 = vmatprep.subr.mxu0 0.0
    %2290 = vmatpush1.msra.mxu0 0.0
    %2291 = vmatprep.subr.mxu0 0.0
    %2292 = vmatpush1.msra.mxu0 0.0
    %2293 = vmatprep.subr.mxu0 0.0
    %2294 = vmatpush1.msra.mxu0 0.0
    %2295 = vmatprep.subr.mxu0 0.0
    %2296 = vmatpush1.msra.mxu0 0.0
    %2297 = vmatprep.subr.mxu0 0.0
    %2298 = vmatpush1.msra.mxu0 0.0
    %2299 = vmatprep.subr.mxu0 0.0
    %2300 = vmatpush1.msra.mxu0 0.0
    %2301 = vmatprep.subr.mxu0 0.0
    %2302 = vmatpush1.msra.mxu0 0.0
    %2303 = vmatprep.subr.mxu0 0.0
    %2304 = vmatpush1.msra.mxu0 0.0
    %2305 = vmatprep.subr.mxu0 0.0
    %2306 = vmatpush1.msra.mxu0 0.0
    %2307 = vmatprep.subr.mxu0 0.0
    %2308 = vmatpush1.msra.mxu0 0.0
    %2309 = vmatprep.subr.mxu0 0.0
    %2310 = vmatpush1.msra.mxu0 0.0
    %2311 = vmatprep.subr.mxu0 0.0
    %2312 = vmatpush1.msra.mxu0 0.0
    %2313 = vmatprep.subr.mxu0 0.0
    %2314 = vmatpush1.msra.mxu0 0.0
    %2315 = vmatprep.subr.mxu0 0.0
    %2316 = vmatpush1.msra.mxu0 0.0
    %2317 = vmatprep.subr.mxu0 0.0
    %2318 = vmatpush1.msra.mxu0 0.0
    %2319 = vmatprep.mubr.f32.mxu0 0.0
    %2320 = vmatmul.mubr.f32.gmra.mrb[0].mxu0 %v2247
    %v2321 = vpop.f32.mrb[0].mxu0
    %v2322 = vadd.f32 0.0, %v2321
    %v2323 = vpop.f32.mrb[0].mxu0
    %v2324 = vadd.f32 0.0, %v2323
    %2325 = vdwg.mxu0
    %2326 = vmatprep.subr.mxu0 %v437
    %2327 = vmatpush1.msra.mxu0 %v436
    %2328 = vmatprep.subr.mxu0 %v441
    %2329 = vmatpush1.msra.mxu0 %v440
    %2330 = vmatprep.subr.mxu0 %v445
    %2331 = vmatpush1.msra.mxu0 %v444
    %2332 = vmatprep.subr.mxu0 %v449
    %2333 = vmatpush1.msra.mxu0 %v448
    %2334 = vmatprep.subr.mxu0 %v453
    %2335 = vmatpush1.msra.mxu0 %v452
    %2336 = vmatprep.subr.mxu0 %v457
    %2337 = vmatpush1.msra.mxu0 %v456
    %2338 = vmatprep.subr.mxu0 %v461
    %2339 = vmatpush1.msra.mxu0 %v460
    %2340 = vmatprep.subr.mxu0 %v465
    %2341 = vmatpush1.msra.mxu0 %v464
    %2342 = vmatprep.subr.mxu0 %v469
    %2343 = vmatpush1.msra.mxu0 %v468
    %2344 = vmatprep.subr.mxu0 %v473
    %2345 = vmatpush1.msra.mxu0 %v472
    %2346 = vmatprep.subr.mxu0 %v477
    %2347 = vmatpush1.msra.mxu0 %v476
    %2348 = vmatprep.subr.mxu0 %v481
    %2349 = vmatpush1.msra.mxu0 %v480
    %2350 = vmatprep.subr.mxu0 %v485
    %2351 = vmatpush1.msra.mxu0 %v484
    %2352 = vmatprep.subr.mxu0 %v489
    %2353 = vmatpush1.msra.mxu0 %v488
    %2354 = vmatprep.subr.mxu0 %v493
    %2355 = vmatpush1.msra.mxu0 %v492
    %2356 = vmatprep.subr.mxu0 %v497
    %2357 = vmatpush1.msra.mxu0 %v496
    %2358 = vmatprep.subr.mxu0 0.0
    %2359 = vmatpush1.msra.mxu0 0.0
    %2360 = vmatprep.subr.mxu0 0.0
    %2361 = vmatpush1.msra.mxu0 0.0
    %2362 = vmatprep.subr.mxu0 0.0
    %2363 = vmatpush1.msra.mxu0 0.0
    %2364 = vmatprep.subr.mxu0 0.0
    %2365 = vmatpush1.msra.mxu0 0.0
    %2366 = vmatprep.subr.mxu0 0.0
    %2367 = vmatpush1.msra.mxu0 0.0
    %2368 = vmatprep.subr.mxu0 0.0
    %2369 = vmatpush1.msra.mxu0 0.0
    %2370 = vmatprep.subr.mxu0 0.0
    %2371 = vmatpush1.msra.mxu0 0.0
    %2372 = vmatprep.subr.mxu0 0.0
    %2373 = vmatpush1.msra.mxu0 0.0
    %2374 = vmatprep.subr.mxu0 0.0
    %2375 = vmatpush1.msra.mxu0 0.0
    %2376 = vmatprep.subr.mxu0 0.0
    %2377 = vmatpush1.msra.mxu0 0.0
    %2378 = vmatprep.subr.mxu0 0.0
    %2379 = vmatpush1.msra.mxu0 0.0
    %2380 = vmatprep.subr.mxu0 0.0
    %2381 = vmatpush1.msra.mxu0 0.0
    %2382 = vmatprep.subr.mxu0 0.0
    %2383 = vmatpush1.msra.mxu0 0.0
    %2384 = vmatprep.subr.mxu0 0.0
    %2385 = vmatpush1.msra.mxu0 0.0
    %2386 = vmatprep.subr.mxu0 0.0
    %2387 = vmatpush1.msra.mxu0 0.0
    %2388 = vmatprep.subr.mxu0 0.0
    %2389 = vmatpush1.msra.mxu0 0.0
    %2390 = vmatprep.mubr.f32.mxu0 0.0
    %2391 = vmatmul.mubr.f32.gmra.mrb[0].mxu0 %v2247
    %v2392 = vpop.f32.mrb[0].mxu0
    %v2393 = vadd.f32 0.0, %v2392
    %v2394 = vpop.f32.mrb[0].mxu0
    %v2395 = vadd.f32 0.0, %v2394
    %2396 = vdwg.mxu0
    %v2397 = vadd.f32 %v2251, %v2322
    %v2398 = vadd.f32 %v2252, %v2324
    %v2399 = vadd.f32 %v2253, %v2393
    %v2400 = vadd.f32 %v2254, %v2395
    %v2401 = vxor.u32 %v2397, 2147483648
    %v2402 = vmul.f32 %v2401, 1.442695
    %v2403 = vpow.pop %v2402
    %v2404 = vadd.f32 %v2403, 1.0
    %v2405 = vrcp.pop %v2404
    %v2406 = vmul.f32 1.0, %v2405
    %v2407 = vxor.u32 %v2398, 2147483648
    %v2408 = vmul.f32 %v2407, 1.442695
    %v2409 = vpow.pop %v2408
    %v2410 = vadd.f32 %v2409, 1.0
    %v2411 = vrcp.pop %v2410
    %v2412 = vmul.f32 1.0, %v2411
    %v2413 = vtanh.pop %v2399
    %v2414 = vxor.u32 %v2400, 2147483648
    %v2415 = vmul.f32 %v2414, 1.442695
    %v2416 = vpow.pop %v2415
    %v2417 = vadd.f32 %v2416, 1.0
    %v2418 = vrcp.pop %v2417
    %v2419 = vmul.f32 1.0, %v2418
    %v2420 = vmul.f32 %v2412, %v2245
    %v2421 = vmul.f32 %v2406, %v2413
    %v2422 = vadd.f32 %v2420, %v2421
    %v2423 = vtanh.pop %v2422
    %v2424 = vmul.f32 %v2419, %v2423
    %s2425 = scalar_lea.vmem [#allocation3], 16
    %2426 = vst [vmem:[%s2425] sm:$0xff] %v2424
    %v2427 = vld [vmem:[#allocation3] sm:$0xff]
    %v2428 = vld [vmem:[#allocation3 + $0x8] sm:$0xff]
    %v2429 = vld [vmem:[#allocation3 + $0x10] sm:$0xff]
    %v2430 = vld [vmem:[%s4] sm:$0xff]
    %v2431 = vld [vmem:[%s4 + $0x8] sm:$0xff]
    %v2432 = vld [vmem:[%s4 + $0x10] sm:$0xff]
    %v2433 = vld [vmem:[%s4 + $0x18] sm:$0xff]
    %v2434 = vld [vmem:[%s4 + $0x20] sm:$0xff]
    %v2435 = vld [vmem:[%s4 + $0x28] sm:$0xff]
    %v2436 = vld [vmem:[%s4 + $0x30] sm:$0xff]
    %v2437 = vld [vmem:[%s4 + $0x38] sm:$0xff]
    %v2438 = vld [vmem:[%s4 + $0x40] sm:$0xff]
    %v2439 = vld [vmem:[%s4 + $0x48] sm:$0xff]
    %v2440 = vld [vmem:[%s4 + $0x50] sm:$0xff]
    %v2441 = vld [vmem:[%s4 + $0x58] sm:$0xff]
    %v2442 = vld [vmem:[%s4 + $0x60] sm:$0xff]
    %v2443 = vld [vmem:[%s4 + $0x68] sm:$0xff]
    %v2444 = vld [vmem:[%s4 + $0x70] sm:$0xff]
    %v2445 = vld [vmem:[%s4 + $0x78] sm:$0xff]
    %v2446 = vld [vmem:[%s5] sm:$0x1]
    %v2448 = vlaneseq
    %v2449 = vshrl.u32 %v2448, 7
    %v2450 = vsub.s32 0, %v2449
    %v2451 = vrot.slane %v2446, %v2450
    %2453 = vmatprep.subr.mxu0 0.0
    %2454 = vmatpush1.msra.mxu0 %v2430
    %2455 = vmatprep.subr.mxu0 0.0
    %2456 = vmatpush1.msra.mxu0 %v2431
    %2457 = vmatprep.subr.mxu0 0.0
    %2458 = vmatpush1.msra.mxu0 %v2432
    %2459 = vmatprep.subr.mxu0 0.0
    %2460 = vmatpush1.msra.mxu0 %v2433
    %2461 = vmatprep.subr.mxu0 0.0
    %2462 = vmatpush1.msra.mxu0 %v2434
    %2463 = vmatprep.subr.mxu0 0.0
    %2464 = vmatpush1.msra.mxu0 %v2435
    %2465 = vmatprep.subr.mxu0 0.0
    %2466 = vmatpush1.msra.mxu0 %v2436
    %2467 = vmatprep.subr.mxu0 0.0
    %2468 = vmatpush1.msra.mxu0 %v2437
    %2469 = vmatprep.subr.mxu0 0.0
    %2470 = vmatpush1.msra.mxu0 %v2438
    %2471 = vmatprep.subr.mxu0 0.0
    %2472 = vmatpush1.msra.mxu0 %v2439
    %2473 = vmatprep.subr.mxu0 0.0
    %2474 = vmatpush1.msra.mxu0 %v2440
    %2475 = vmatprep.subr.mxu0 0.0
    %2476 = vmatpush1.msra.mxu0 %v2441
    %2477 = vmatprep.subr.mxu0 0.0
    %2478 = vmatpush1.msra.mxu0 %v2442
    %2479 = vmatprep.subr.mxu0 0.0
    %2480 = vmatpush1.msra.mxu0 %v2443
    %2481 = vmatprep.subr.mxu0 0.0
    %2482 = vmatpush1.msra.mxu0 %v2444
    %2483 = vmatprep.subr.mxu0 0.0
    %2484 = vmatpush1.msra.mxu0 %v2445
    %2485 = vmatprep.subr.mxu0 0.0
    %2486 = vmatpush1.msra.mxu0 0.0
    %2487 = vmatprep.subr.mxu0 0.0
    %2488 = vmatpush1.msra.mxu0 0.0
    %2489 = vmatprep.subr.mxu0 0.0
    %2490 = vmatpush1.msra.mxu0 0.0
    %2491 = vmatprep.subr.mxu0 0.0
    %2492 = vmatpush1.msra.mxu0 0.0
    %2493 = vmatprep.subr.mxu0 0.0
    %2494 = vmatpush1.msra.mxu0 0.0
    %2495 = vmatprep.subr.mxu0 0.0
    %2496 = vmatpush1.msra.mxu0 0.0
    %2497 = vmatprep.subr.mxu0 0.0
    %2498 = vmatpush1.msra.mxu0 0.0
    %2499 = vmatprep.subr.mxu0 0.0
    %2500 = vmatpush1.msra.mxu0 0.0
    %2501 = vmatprep.subr.mxu0 0.0
    %2502 = vmatpush1.msra.mxu0 0.0
    %2503 = vmatprep.subr.mxu0 0.0
    %2504 = vmatpush1.msra.mxu0 0.0
    %2505 = vmatprep.subr.mxu0 0.0
    %2506 = vmatpush1.msra.mxu0 0.0
    %2507 = vmatprep.subr.mxu0 0.0
    %2508 = vmatpush1.msra.mxu0 0.0
    %2509 = vmatprep.subr.mxu0 0.0
    %2510 = vmatpush1.msra.mxu0 0.0
    %2511 = vmatprep.subr.mxu0 0.0
    %2512 = vmatpush1.msra.mxu0 0.0
    %2513 = vmatprep.subr.mxu0 0.0
    %2514 = vmatpush1.msra.mxu0 0.0
    %2515 = vmatprep.subr.mxu0 0.0
    %2516 = vmatpush1.msra.mxu0 0.0
    %2517 = vmatprep.mubr.f32.mxu0 0.0
    %2518 = vmatmul.mubr.f32.gmra.mrb[0].mxu0 %v2427
    %v2519 = vpop.f32.mrb[0].mxu0
    %v2520 = vadd.f32 %v2451, %v2519
    %v2521 = vpop.f32.mrb[0].mxu0
    %2522 = vmatprep.mubr.f32.mxu0 0.0
    %2523 = vmatmul.mubr.f32.gmra.mrb[0].mxu0 %v2428
    %v2524 = vpop.f32.mrb[0].mxu0
    %v2525 = vadd.f32 %v2451, %v2524
    %v2526 = vpop.f32.mrb[0].mxu0
    %2527 = vmatprep.mubr.f32.mxu0 0.0
    %2528 = vmatmul.mubr.f32.gmra.mrb[0].mxu0 %v2429
    %v2529 = vpop.f32.mrb[0].mxu0
    %v2530 = vadd.f32 %v2451, %v2529
    %v2531 = vpop.f32.mrb[0].mxu0
    %2532 = vdwg.mxu0
    %vm2533 = vcmask 31744
    %2534 = vst.msk [vmem:[%s6] sm:$0xff] %vm2533, %v2520
    %2535 = vst.msk [vmem:[%s6 + $0x8] sm:$0xff] %vm2533, %v2525
    %2536 = vst.msk [vmem:[%s6 + $0x10] sm:$0xff] %vm2533, %v2530
    // Predicated region
    $region30: #{lstm_model_forward.1} parent=1 // pred_check
      _
    $region31: #{lstm_model_forward.1} parent=1 // pred_check_branch
      %2538 = sbr.rel (0) target = $region33
    $region32: #{lstm_model_forward.1} parent=1 // pred_region
      _
    $region33: #{lstm_model_forward.1} parent=1 // pred_fallthru
      _
    // Predicated region
    $region34: #{lstm_model_forward.1} parent=1 // pred_check
      _
    $region35: #{lstm_model_forward.1} parent=1 // pred_check_branch
      %2540 = sbr.rel (0) target = $region37
    $region36: #{lstm_model_forward.1} parent=1 // pred_region
      _
    $region37: #{lstm_model_forward.1} parent=1 // pred_fallthru
      _
    %2541 = vsyncpa [#allocation5], 1

</llo_original>
